<compile_context>
chip_gen: v7x
topology: tpu7x:2x2x1
jax: 0.10.0
libtpu: 0.0.40
codegen_flags: <defaults>
</compile_context>

<pallas_src>
import functools

import jax
import jax.numpy as jnp
from jax.experimental import pallas as pl
from jax.experimental.pallas import tpu as pltpu

LANES = 128
MAX_TILE_ROWS = 4096          # (4096, 128) f32 = 2 MiB per input block
FAST_PATH_ELEMS = 256 * 1024  # below this, fused XLA beats a kernel launch


def _num_tensorcores() -> int:
    """2 on v7x (two TensorCores per chip), 1 on earlier generations."""
    try:
        kind = jax.devices()[0].device_kind.lower()
    except Exception:
        return 1
    return 2 if "7" in kind else 1


def _sumsq_kernel(x_ref, y_ref, o_ref, acc_ref, *, steps_per_core, nblocks,
                  gate_overhang):
    c = pl.program_id(0)
    j = pl.program_id(1)

    @pl.when(j == 0)
    def _init():
        acc_ref[...] = jnp.zeros_like(acc_ref)

    def _accumulate():
        d = x_ref[...].astype(jnp.float32) - y_ref[...].astype(jnp.float32)
        # VALU-only vreg-tree reduce onto a single (8, 128) vreg accumulator.
        acc_ref[...] += jnp.sum((d * d).reshape(-1, 8, LANES), axis=0)

    if gate_overhang:
        # Only a clamped duplicate (overhang) step is skipped; this is a
        # scalar predicate, so the hot loop carries no per-element mask.
        pl.when(c * steps_per_core + j < nblocks)(_accumulate)
    else:
        _accumulate()

    @pl.when(j == steps_per_core - 1)
    def _finalize():
        # One cross-sublane reduce per partial; lanes reduced in the wrapper.
        o_ref[...] = jnp.sum(acc_ref[...], axis=0, keepdims=True)[None]


def rmse_loss(logits, y_true):
    assert logits.shape == y_true.shape
    n = int(logits.size)
    assert n > 0

    # Small-input fast path: launch + grid overhead dominates below this size.
    if n < FAST_PATH_ELEMS:
        d = logits.astype(jnp.float32) - y_true.astype(jnp.float32)
        return jnp.sqrt(jnp.mean(d * d))

    x = logits.reshape(-1)
    y = y_true.reshape(-1)

    rows = n // LANES                                   # full 128-lane rows
    tile_rows = min(MAX_TILE_ROWS, (rows // 8) * 8)     # multiple of 8 sublanes
    if tile_rows == 0:
        d = x.astype(jnp.float32) - y.astype(jnp.float32)
        return jnp.sqrt(jnp.mean(d * d))

    nblocks = rows // tile_rows
    main_rows = nblocks * tile_rows
    main_elems = main_rows * LANES

    # Block-aligned prefix is streamed by the kernel straight from the
    # original buffers (zero-copy reshape when n is already aligned).
    x_main = (x if main_elems == n else x[:main_elems]).reshape(main_rows, LANES)
    y_main = (y if main_elems == n else y[:main_elems]).reshape(main_rows, LANES)

    num_partials = min(_num_tensorcores(), nblocks)     # 2 only on v7x
    steps = pl.cdiv(nblocks, num_partials)
    gate_overhang = num_partials * steps != nblocks

    def in_map(c, j):
        # Clamp so an overhang step never DMAs past the array end; its
        # contribution is skipped by the scalar gate inside the kernel.
        return (jnp.minimum(c * steps + j, nblocks - 1), 0)

    kernel = functools.partial(
        _sumsq_kernel, steps_per_core=steps, nblocks=nblocks,
        gate_overhang=gate_overhang)

    # TODO(synk): optionally sweep pipeline_mode=pl.Buffered(3) on the input
    # specs for a ~1-3% win on v6e/v7x (kept at the default depth here to stay
    # inside v5e's 16 MiB scoped-VMEM default without flag bumps).
    partials = pl.pallas_call(
        kernel,
        out_shape=jax.ShapeDtypeStruct((num_partials, 1, LANES), jnp.float32),
        grid_spec=pltpu.PrefetchScalarGridSpec(
            num_scalar_prefetch=0,
            grid=(num_partials, steps),
            in_specs=[
                pl.BlockSpec((tile_rows, LANES), in_map),
                pl.BlockSpec((tile_rows, LANES), in_map),
            ],
            out_specs=pl.BlockSpec((1, 1, LANES), lambda c, j: (c, 0, 0)),
            scratch_shapes=[pltpu.VMEM((8, LANES), jnp.float32)],
        ),
        compiler_params=pltpu.CompilerParams(
            dimension_semantics=("parallel", "arbitrary"),
        ),
    )(x_main, y_main)

    total = jnp.sum(partials)

    # Tail (< one block of rows, plus the <128-element lane remainder) via
    # plain fused XLA -- tiny compared to the streamed prefix.
    if main_elems != n:
        dt = x[main_elems:].astype(jnp.float32) - y[main_elems:].astype(jnp.float32)
        total = total + jnp.sum(dt * dt)

    # Mean over the TRUE element count, then sqrt (== torch.sqrt(F.mse_loss)).
    return jnp.sqrt(total / n)


if __name__ == "__main__":
    key = jax.random.PRNGKey(0)
    k1, k2, k3, k4 = jax.random.split(key, 4)

    # Regression-style predictions / targets (growth-stage labels), batch = 64.
    # Small input -> exercises the fast path.
    logits = jax.random.normal(k1, (64,), dtype=jnp.float32) * 2.0 + 3.0
    y_true = jax.random.normal(k2, (64,), dtype=jnp.float32) * 2.0 + 3.0
    loss = rmse_loss(logits, y_true)
    jax.block_until_ready(loss)
    ref = jnp.sqrt(jnp.mean((logits - y_true) ** 2))
    assert jnp.allclose(loss, ref, rtol=1e-5, atol=1e-5), (loss, ref)

    # Larger, lane-misaligned case -> exercises the Pallas kernel path:
    # multiple row blocks, wrapper-side tail, and (on v7x) the 2-partial split.
    a = jax.random.normal(k3, (4100, 257), dtype=jnp.float32)
    b = jax.random.normal(k4, (4100, 257), dtype=jnp.float32)
    loss2 = rmse_loss(a, b)
    jax.block_until_ready(loss2)
    ref2 = jnp.sqrt(jnp.mean((a - b) ** 2))
    assert jnp.allclose(loss2, ref2, rtol=1e-4, atol=1e-5), (loss2, ref2)

    print("KERNEL_OK")
</pallas_src>

<mosaic_0001>
module attributes {stable_mosaic.version = 11 : i64} {
  func.func @_sumsq_kernel(%arg0: i32, %arg1: i32, %arg2: memref<4096x128xf32, #tpu.memory_space<vmem>>, %arg3: memref<4096x128xf32, #tpu.memory_space<vmem>>, %arg4: memref<1x1x128xf32, #tpu.memory_space<vmem>>, %arg5: memref<8x128xf32, #tpu.memory_space<vmem>>) attributes {dimension_semantics = [#tpu.dimension_semantics<parallel>, #tpu.dimension_semantics<arbitrary>], iteration_bounds = array<i64: 1, 2>, scalar_prefetch = 0 : i64, scratch_operands = 1 : i64, tpu.core_type = #tpu.core_type<tc>, window_params = [{transform_indices = @transform_0, window_bounds = array<i64: 4096, 128>}, {transform_indices = @transform_1, window_bounds = array<i64: 4096, 128>}, {transform_indices = @transform_2, window_bounds = array<i64: 1, 1, 128>}]} {
    %c0_i32 = arith.constant 0 : i32
    %0 = arith.cmpi eq, %arg1, %c0_i32 : i32
    %1 = arith.extui %0 : i1 to i32
    %c0_i32_0 = arith.constant 0 : i32
    %2 = arith.cmpi ne, %1, %c0_i32_0 : i32
    scf.if %2 {
      %cst_9 = arith.constant 0.000000e+00 : f32
      %15 = vector.broadcast %cst_9 : f32 to vector<8x128xf32>
      %c0_10 = arith.constant 0 : index
      %c0_11 = arith.constant 0 : index
      %16 = vector.load %arg5[%c0_10, %c0_11] : memref<8x128xf32, #tpu.memory_space<vmem>>, vector<8x128xf32>
      tpu.vector_store %arg5[%c0_10, %c0_11], %15 {strides = array<i32>} : memref<8x128xf32, #tpu.memory_space<vmem>>, vector<8x128xf32>,
    } else {
    }
    %c0 = arith.constant 0 : index
    %c0_1 = arith.constant 0 : index
    %3 = vector.load %arg2[%c0, %c0_1] : memref<4096x128xf32, #tpu.memory_space<vmem>>, vector<4096x128xf32>
    %c0_2 = arith.constant 0 : index
    %c0_3 = arith.constant 0 : index
    %4 = vector.load %arg3[%c0_2, %c0_3] : memref<4096x128xf32, #tpu.memory_space<vmem>>, vector<4096x128xf32>
    %5 = arith.subf %3, %4 : vector<4096x128xf32>
    %c0_4 = arith.constant 0 : index
    %c0_5 = arith.constant 0 : index
    %6 = vector.load %arg5[%c0_4, %c0_5] : memref<8x128xf32, #tpu.memory_space<vmem>>, vector<8x128xf32>
    %7 = arith.mulf %5, %5 : vector<4096x128xf32>
    %8 = vector.shape_cast %7 : vector<4096x128xf32> to vector<512x8x128xf32>
    %cst = arith.constant dense<0.000000e+00> : vector<8x128xf32>
    %9 = vector.multi_reduction <add>, %8, %cst [0] : vector<512x8x128xf32> to vector<8x128xf32>
    %10 = arith.addf %6, %9 : vector<8x128xf32>
    %c0_6 = arith.constant 0 : index
    %c0_7 = arith.constant 0 : index
    %11 = vector.load %arg5[%c0_6, %c0_7] : memref<8x128xf32, #tpu.memory_space<vmem>>, vector<8x128xf32>
    tpu.vector_store %arg5[%c0_6, %c0_7], %10 {strides = array<i32>} : memref<8x128xf32, #tpu.memory_space<vmem>>, vector<8x128xf32>,
    %c1_i32 = arith.constant 1 : i32
    %12 = arith.cmpi eq, %arg1, %c1_i32 : i32
    %13 = arith.extui %12 : i1 to i32
    %c0_i32_8 = arith.constant 0 : i32
    %14 = arith.cmpi ne, %13, %c0_i32_8 : i32
    scf.if %14 {
      %c0_9 = arith.constant 0 : index
      %c0_10 = arith.constant 0 : index
      %15 = vector.load %arg5[%c0_9, %c0_10] : memref<8x128xf32, #tpu.memory_space<vmem>>, vector<8x128xf32>
      %cst_11 = arith.constant dense<0.000000e+00> : vector<128xf32>
      %16 = vector.multi_reduction <add>, %15, %cst_11 [0] : vector<8x128xf32> to vector<128xf32>
      %17 = vector.shape_cast %16 : vector<128xf32> to vector<1x128xf32>
      %18 = vector.shape_cast %17 : vector<1x128xf32> to vector<1x1x128xf32>
      %c0_12 = arith.constant 0 : index
      %c0_13 = arith.constant 0 : index
      %c0_14 = arith.constant 0 : index
      %19 = vector.load %arg4[%c0_12, %c0_13, %c0_14] : memref<1x1x128xf32, #tpu.memory_space<vmem>>, vector<1x1x128xf32>
      tpu.vector_store %arg4[%c0_12, %c0_13, %c0_14], %18 {strides = array<i32>} : memref<1x1x128xf32, #tpu.memory_space<vmem>>, vector<1x1x128xf32>,
    } else {
    }
    return
  }
  func.func @transform_0(%arg0: i32, %arg1: i32) -> (i32, i32) {
    %c2_i32 = arith.constant 2 : i32
    %0 = arith.muli %arg0, %c2_i32 : i32
    %1 = arith.addi %0, %arg1 : i32
    %c1_i32 = arith.constant 1 : i32
    %2 = arith.minsi %1, %c1_i32 : i32
    %c0_i32 = arith.constant 0 : i32
    %c0_i32_0 = arith.constant 0 : i32
    return %2, %c0_i32 : i32, i32
  }
  func.func @transform_1(%arg0: i32, %arg1: i32) -> (i32, i32) {
    %c2_i32 = arith.constant 2 : i32
    %0 = arith.muli %arg0, %c2_i32 : i32
    %1 = arith.addi %0, %arg1 : i32
    %c1_i32 = arith.constant 1 : i32
    %2 = arith.minsi %1, %c1_i32 : i32
    %c0_i32 = arith.constant 0 : i32
    %c0_i32_0 = arith.constant 0 : i32
    return %2, %c0_i32 : i32, i32
  }
  func.func @transform_2(%arg0: i32, %arg1: i32) -> (i32, i32, i32) {
    %c0_i32 = arith.constant 0 : i32
    %c0_i32_0 = arith.constant 0 : i32
    %c0_i32_1 = arith.constant 0 : i32
    return %arg0, %c0_i32, %c0_i32_0 : i32, i32, i32
  }
}

</mosaic_0001>

<llo_original>
// kernel: tpu_custom_call.1
$region0: #{tpu_custom_call.1}
  #allocation0 [shape = 'u32[]', space=smem, size = 0x4, offset = 0x4, fixed_abs, tag = 'smem constant byte address 0x4 - core index']
  #allocation1 [shape = 'u32[144,128]{1,0:T(1,128)}', space=vmem, size = 0x12000, scoped, tag = 'internal scratch']
  #allocation2 [shape = 'f32[8,128]{1,0:T(8,128)}', space=vmem, size = 0x1000, scoped, tag = 'scratch operand']
  %s0 = inlined_call_operand.hbm [shape: f32[8192,128], index: 0, kind: input, shape index: {}]
  %s1 = inlined_call_operand.hbm [shape: f32[8192,128], index: 1, kind: input, shape index: {}]
  %s2 = inlined_call_operand.hbm [shape: f32[1,1,128], index: 2, kind: output, shape index: {}]
  %s3 = sld [smem:[#allocation0]]
  $region57: #{tpu_custom_call.1} parent=0
    _
  %s5 = ssub.s32 1, %s3
  %s6 = scalar_select 0, %s5, %s3
  $region1: #{tpu_custom_call.1} parent=0
    #allocation3 [shape = 'u8[4194304]{0}', space=vmem, size = 0x400000, scoped, tag = 'input window, operand 0']
    #allocation4 [shape = 's32[2]{0}', space=sflag, size = 0x8, scoped, tag = 'scoped memory for tpu_custom_call.1']
    #allocation5 [shape = 's32[2]{0}', space=sflag, size = 0x8, scoped, tag = 'scoped memory for tpu_custom_call.1']
    #allocation6 [shape = 'u8[4194304]{0}', space=vmem, size = 0x400000, scoped, tag = 'input window, operand 1']
    #allocation7 [shape = 's32[2]{0}', space=sflag, size = 0x8, scoped, tag = 'scoped memory for tpu_custom_call.1']
    #allocation8 [shape = 'u8[512]{0}', space=vmem, size = 0x400, scoped, tag = 'output window, operand 0, single buffered']
    %7 = vsyncpa [#allocation4], 0
    %s8 = scalar_lea.sflag [#allocation4], 1
    %9 = vsyncpa %s8, 0
    %10 = vsyncpa [#allocation7], 0
    %s11 = scalar_lea.sflag [#allocation7], 1
    %12 = vsyncpa %s11, 0
    %13 = vsyncpa [#allocation5], 0
    loop: start=0, step=1, limit=4
    $region2: #{tpu_custom_call.1} parent=1 // loop_pre_header
      _
    $region3: #{tpu_custom_call.1} parent=1 // loop_header
      %s15 = sphi 0, %s19
      %p16 = scmp.ge.s32.totalorder %s15, 4
      %s22 = sphi 0, %s34
      %s23 = sphi 0, %s30
      %s24 = sphi 0, %s22
      %s25 = sphi 0, %s23
      %s26 = sphi 0, %s24
      %s27 = sphi 0, %s25
      %s45 = sphi 0, %s47
      %s48 = sphi 0, %s45
      %s49 = sphi 0, %s48
      %s65 = sphi 0, %s49
      %s79 = sphi 0, %s81
      %s82 = sphi 0, %s79
      %s83 = sphi 0, %s82
      %s99 = sphi 0, %s83
      %s105 = sphi 0, %s107
      %s108 = sphi 0, %s105
      %s109 = sphi 0, %s108
      %s125 = sphi 0, %s109
    $region4: #{tpu_custom_call.1} parent=1 // loop_header_branch
      %18 = sbr.rel (%p16) target = $region8
    $region5: #{tpu_custom_call.1} parent=1 // loop_body
      %s20 = ssub.s32 %s15, 1
      %s21 = ssub.s32 %s15, 2
      %s28 = sadd.s32 1, %s23
      %p29 = scmp.ge.s32.totalorder %s28, 2
      %s30 = scalar_select %p29, 0, %s28
      %s31 = sadd.s32 1, %s22
      %s32 = scalar_select %p29, %s31, %s22
      %p33 = scmp.ge.s32.totalorder %s32, 1
      %s34 = scalar_select %p33, 0, %s32
      %s35 = smul.u32 %s22, 2
      %s36 = sadd.s32 %s35, %s23
      %p37 = scmp.lt.s32.totalorder %s36, 1
      %s38 = scalar_select %p37, %s36, 1
      %s39 = smul.u32 %s34, 2
      %s40 = sadd.s32 %s39, %s30
      %p41 = scmp.lt.s32.totalorder %s40, 1
      %s42 = scalar_select %p41, %s40, 1
      %s43 = ssub.s32 %s38, %s42
      %p44 = scmp.eq.s32.totalorder %s43, 0
      %s46 = sadd.s32 %s45, 1
      %s47 = scalar_select %p44, %s45, %s46
      %p50 = pneg %p44
      %p51 = scmp.eq.s32.totalorder %s15, 1
      %p52 = por %p50, %p51
      %p53 = scmp.ne.s32.totalorder %s45, %s48
      %p54 = scmp.eq.s32.totalorder %s15, 0
      %p55 = por %p53, %p54
      %p56 = scmp.ne.s32.totalorder %s45, %s48
      %p57 = scmp.eq.s32.totalorder %s20, 1
      %p58 = por %p56, %p57
      %p59 = scmp.ne.s32.totalorder %s48, %s49
      %p60 = scmp.eq.s32.totalorder %s20, 0
      %p61 = por %p59, %p60
      %p62 = scmp.ne.s32.totalorder %s48, %s49
      %p63 = scmp.eq.s32.totalorder %s21, 1
      %p64 = por %p62, %p63
      %p66 = scmp.ne.s32.totalorder %s49, %s65
      %p67 = scmp.eq.s32.totalorder %s21, 0
      %p68 = por %p66, %p67
      %s69 = smul.u32 %s22, 2
      %s70 = sadd.s32 %s69, %s23
      %p71 = scmp.lt.s32.totalorder %s70, 1
      %s72 = scalar_select %p71, %s70, 1
      %s73 = smul.u32 %s34, 2
      %s74 = sadd.s32 %s73, %s30
      %p75 = scmp.lt.s32.totalorder %s74, 1
      %s76 = scalar_select %p75, %s74, 1
      %s77 = ssub.s32 %s72, %s76
      %p78 = scmp.eq.s32.totalorder %s77, 0
      %s80 = sadd.s32 %s79, 1
      %s81 = scalar_select %p78, %s79, %s80
      %p84 = pneg %p78
      %p85 = scmp.eq.s32.totalorder %s15, 1
      %p86 = por %p84, %p85
      %p87 = scmp.ne.s32.totalorder %s79, %s82
      %p88 = scmp.eq.s32.totalorder %s15, 0
      %p89 = por %p87, %p88
      %p90 = scmp.ne.s32.totalorder %s79, %s82
      %p91 = scmp.eq.s32.totalorder %s20, 1
      %p92 = por %p90, %p91
      %p93 = scmp.ne.s32.totalorder %s82, %s83
      %p94 = scmp.eq.s32.totalorder %s20, 0
      %p95 = por %p93, %p94
      %p96 = scmp.ne.s32.totalorder %s82, %s83
      %p97 = scmp.eq.s32.totalorder %s21, 1
      %p98 = por %p96, %p97
      %p100 = scmp.ne.s32.totalorder %s83, %s99
      %p101 = scmp.eq.s32.totalorder %s21, 0
      %p102 = por %p100, %p101
      %s103 = ssub.s32 %s22, %s34
      %p104 = scmp.eq.s32.totalorder %s103, 0
      %s106 = sadd.s32 %s105, 1
      %s107 = scalar_select %p104, %s105, %s106
      %p110 = pneg %p104
      %p111 = scmp.eq.s32.totalorder %s15, 1
      %p112 = por %p110, %p111
      %p113 = scmp.ne.s32.totalorder %s105, %s108
      %p114 = scmp.eq.s32.totalorder %s15, 0
      %p115 = por %p113, %p114
      %p116 = scmp.ne.s32.totalorder %s105, %s108
      %p117 = scmp.eq.s32.totalorder %s20, 1
      %p118 = por %p116, %p117
      %p119 = scmp.ne.s32.totalorder %s108, %s109
      %p120 = scmp.eq.s32.totalorder %s20, 0
      %p121 = por %p119, %p120
      %p122 = scmp.ne.s32.totalorder %s108, %s109
      %p123 = scmp.eq.s32.totalorder %s21, 1
      %p124 = por %p122, %p123
      %p126 = scmp.ne.s32.totalorder %s109, %s125
      %p127 = scmp.eq.s32.totalorder %s21, 0
      %p128 = por %p126, %p127
      %p129 = scmp.le.s32.totalorder 1, %s15
      %p130 = scmp.lt.s32.totalorder %s15, 3
      %p131 = pnand %p129, %p130
      %p132 = pneg %p131
      // Predicated region
      $region9: #{tpu_custom_call.1} parent=5 // pred_check
        _
      $region10: #{tpu_custom_call.1} parent=5 // pred_check_branch
        %134 = sbr.rel (%p131) target = $region12
      $region11: #{tpu_custom_call.1} parent=5 // pred_region
        %s135 = ssub.s32 %s15, 1
      $region12: #{tpu_custom_call.1} parent=5 // pred_fallthru
        _
      %p136 = scmp.lt.s32.totalorder %s15, 2
      // Predicated region
      $region13: #{tpu_custom_call.1} parent=5 // pred_check
        %p137 = pneg %p136
      $region14: #{tpu_custom_call.1} parent=5 // pred_check_branch
        %139 = sbr.rel (%p137) target = $region16
      $region15: #{tpu_custom_call.1} parent=5 // pred_region
        // Predicated region
        $region17: #{tpu_custom_call.1} parent=15 // pred_check
          %p140 = pneg %p55
        $region18: #{tpu_custom_call.1} parent=15 // pred_check_branch
          %142 = sbr.rel (%p140) target = $region20
        $region19: #{tpu_custom_call.1} parent=15 // pred_region
          %s143 = sand.u32 %s45, 1
          %s144 = scalar_lea.sflag [#allocation4], %s143
          %s145 = sand.u32 %s45, 1
          %s146 = smul.addr %s145, 4096
          %s147 = scalar_lea.vmem [#allocation3], %s146
          %s148 = smul.u32 %s22, 2
          %s149 = sadd.s32 %s148, %s23
          %p150 = scmp.lt.s32.totalorder %s149, 1
          %s151 = scalar_select %p150, %s149, 1
          %s152 = smul.u32 512, %s151
          %s154 = ssub.s32 65536, 65536
          %155 = vsyncadd %s144, %s154
          %s156 = smul.addr %s152, 128
          %s157 = scalar_lea.hbm %s0, %s156
          %s158 = sshll.u32 %s147, 4
          %s159 = int_to_ptr.vmem [resolvable:$true] %s158
          %164 = dma.hbm_to_vmem [thread:$0]  %s157, 65536, %s159, %s144, 128, 128, 8
        $region20: #{tpu_custom_call.1} parent=15 // pred_fallthru
          _
        // Predicated region
        $region21: #{tpu_custom_call.1} parent=15 // pred_check
          %p165 = pneg %p89
        $region22: #{tpu_custom_call.1} parent=15 // pred_check_branch
          %167 = sbr.rel (%p165) target = $region24
        $region23: #{tpu_custom_call.1} parent=15 // pred_region
          %s168 = sand.u32 %s79, 1
          %s169 = scalar_lea.sflag [#allocation7], %s168
          %s170 = sand.u32 %s79, 1
          %s171 = smul.addr %s170, 4096
          %s172 = scalar_lea.vmem [#allocation6], %s171
          %s173 = smul.u32 %s22, 2
          %s174 = sadd.s32 %s173, %s23
          %p175 = scmp.lt.s32.totalorder %s174, 1
          %s176 = scalar_select %p175, %s174, 1
          %s177 = smul.u32 512, %s176
          %s179 = ssub.s32 65536, 65536
          %180 = vsyncadd %s169, %s179
          %s181 = smul.addr %s177, 128
          %s182 = scalar_lea.hbm %s1, %s181
          %s183 = sshll.u32 %s172, 4
          %s184 = int_to_ptr.vmem [resolvable:$true] %s183
          %189 = dma.hbm_to_vmem [thread:$0]  %s182, 65536, %s184, %s169, 128, 128, 8
        $region24: #{tpu_custom_call.1} parent=15 // pred_fallthru
          _
      $region16: #{tpu_custom_call.1} parent=5 // pred_fallthru
        _
      %p190 = scmp.le.s32.totalorder 1, %s15
      %p191 = scmp.lt.s32.totalorder %s15, 3
      %p192 = pnand %p190, %p191
      %p193 = pneg %p192
      // Predicated region
      $region25: #{tpu_custom_call.1} parent=5 // pred_check
        _
      $region26: #{tpu_custom_call.1} parent=5 // pred_check_branch
        %195 = sbr.rel (%p192) target = $region28
      $region27: #{tpu_custom_call.1} parent=5 // pred_region
        %s196 = ssub.s32 %s15, 1
        %s197 = sand.u32 %s48, 1
        %s198 = scalar_lea.sflag [#allocation4], %s197
        %s199 = sand.u32 %s48, 1
        %s200 = smul.addr %s199, 4096
        %s201 = scalar_lea.vmem [#allocation3], %s200
        // Predicated region
        $region29: #{tpu_custom_call.1} parent=27 // pred_check
          %p202 = pneg %p61
        $region30: #{tpu_custom_call.1} parent=27 // pred_check_branch
          %204 = sbr.rel (%p202) target = $region32
        $region31: #{tpu_custom_call.1} parent=27 // pred_region
          %205 = dma.done %s198, 65536
        $region32: #{tpu_custom_call.1} parent=27 // pred_fallthru
          _
        %s206 = sand.u32 %s82, 1
        %s207 = scalar_lea.sflag [#allocation7], %s206
        %s208 = sand.u32 %s82, 1
        %s209 = smul.addr %s208, 4096
        %s210 = scalar_lea.vmem [#allocation6], %s209
        // Predicated region
        $region33: #{tpu_custom_call.1} parent=27 // pred_check
          %p211 = pneg %p95
        $region34: #{tpu_custom_call.1} parent=27 // pred_check_branch
          %213 = sbr.rel (%p211) target = $region36
        $region35: #{tpu_custom_call.1} parent=27 // pred_region
          %214 = dma.done %s207, 65536
        $region36: #{tpu_custom_call.1} parent=27 // pred_fallthru
          _
        %s215 = sand.u32 %s48, 1
        %s216 = scalar_lea.sflag [#allocation4], %s215
        %s217 = sand.u32 %s48, 1
        %s218 = smul.addr %s217, 4096
        %s219 = scalar_lea.vmem [#allocation3], %s218
        %p220 = pneg %p61
        %p221 = pneg %p58
        %s222 = sand.u32 %s82, 1
        %s223 = scalar_lea.sflag [#allocation7], %s222
        %s224 = sand.u32 %s82, 1
        %s225 = smul.addr %s224, 4096
        %s226 = scalar_lea.vmem [#allocation6], %s225
        %p227 = pneg %p95
        %p228 = pneg %p92
        %p229 = pneg %p121
        %p230 = pneg %p118
        %s231 = smul.u32 %s24, 2
        %s232 = sadd.s32 %s231, %s25
        %p233 = scmp.lt.s32.totalorder %s232, 1
        %s234 = scalar_select %p233, %s232, 1
        %s235 = smul.u32 512, %s234
        %s236 = smul.u32 %s24, 2
        %s237 = sadd.s32 %s236, %s25
        %p238 = scmp.lt.s32.totalorder %s237, 1
        %s239 = scalar_select %p238, %s237, 1
        %s240 = smul.u32 512, %s239
        %p241 = scmp.eq.s32.totalorder %s25, 0
        // Predicated region
        $region37: #{tpu_custom_call.1} parent=27 // pred_check
          %p242 = pneg %p241
        $region38: #{tpu_custom_call.1} parent=27 // pred_check_branch
          %244 = sbr.rel (%p242) target = $region40
        $region39: #{tpu_custom_call.1} parent=27 // pred_region
          %245 = vst [vmem:[#allocation2] sm:$0xff] 0.0
        $region40: #{tpu_custom_call.1} parent=27 // pred_fallthru
          _
        %v246 = vld [vmem:[%s201] sm:$0xff]
        %v247 = vld [vmem:[%s201 + $0x8] sm:$0xff]
        %v248 = vld [vmem:[%s201 + $0x10] sm:$0xff]
        %v249 = vld [vmem:[%s201 + $0x18] sm:$0xff]
        %v250 = vld [vmem:[%s201 + $0x20] sm:$0xff]
        %v251 = vld [vmem:[%s201 + $0x28] sm:$0xff]
        %v252 = vld [vmem:[%s201 + $0x30] sm:$0xff]
        %v253 = vld [vmem:[%s201 + $0x38] sm:$0xff]
        %v254 = vld [vmem:[%s201 + $0x40] sm:$0xff]
        %v255 = vld [vmem:[%s201 + $0x48] sm:$0xff]
        %v256 = vld [vmem:[%s201 + $0x50] sm:$0xff]
        %v257 = vld [vmem:[%s201 + $0x58] sm:$0xff]
        %v258 = vld [vmem:[%s201 + $0x60] sm:$0xff]
        %v259 = vld [vmem:[%s201 + $0x68] sm:$0xff]
        %v260 = vld [vmem:[%s201 + $0x70] sm:$0xff]
        %v261 = vld [vmem:[%s201 + $0x78] sm:$0xff]
        %v262 = vld [vmem:[%s201 + $0x80] sm:$0xff]
        %v263 = vld [vmem:[%s201 + $0x88] sm:$0xff]
        %v264 = vld [vmem:[%s201 + $0x90] sm:$0xff]
        %v265 = vld [vmem:[%s201 + $0x98] sm:$0xff]
        %v266 = vld [vmem:[%s201 + $0xa0] sm:$0xff]
        %v267 = vld [vmem:[%s201 + $0xa8] sm:$0xff]
        %v268 = vld [vmem:[%s201 + $0xb0] sm:$0xff]
        %v269 = vld [vmem:[%s201 + $0xb8] sm:$0xff]
        %v270 = vld [vmem:[%s201 + $0xc0] sm:$0xff]
        %v271 = vld [vmem:[%s201 + $0xc8] sm:$0xff]
        %v272 = vld [vmem:[%s201 + $0xd0] sm:$0xff]
        %v273 = vld [vmem:[%s201 + $0xd8] sm:$0xff]
        %v274 = vld [vmem:[%s201 + $0xe0] sm:$0xff]
        %v275 = vld [vmem:[%s201 + $0xe8] sm:$0xff]
        %v276 = vld [vmem:[%s201 + $0xf0] sm:$0xff]
        %v277 = vld [vmem:[%s201 + $0xf8] sm:$0xff]
        %v278 = vld [vmem:[%s201 + $0x100] sm:$0xff]
        %v279 = vld [vmem:[%s201 + $0x108] sm:$0xff]
        %v280 = vld [vmem:[%s201 + $0x110] sm:$0xff]
        %v281 = vld [vmem:[%s201 + $0x118] sm:$0xff]
        %v282 = vld [vmem:[%s201 + $0x120] sm:$0xff]
        %v283 = vld [vmem:[%s201 + $0x128] sm:$0xff]
        %v284 = vld [vmem:[%s201 + $0x130] sm:$0xff]
        %v285 = vld [vmem:[%s201 + $0x138] sm:$0xff]
        %v286 = vld [vmem:[%s201 + $0x140] sm:$0xff]
        %v287 = vld [vmem:[%s201 + $0x148] sm:$0xff]
        %v288 = vld [vmem:[%s201 + $0x150] sm:$0xff]
        %v289 = vld [vmem:[%s201 + $0x158] sm:$0xff]
        %v290 = vld [vmem:[%s201 + $0x160] sm:$0xff]
        %v291 = vld [vmem:[%s201 + $0x168] sm:$0xff]
        %v292 = vld [vmem:[%s201 + $0x170] sm:$0xff]
        %v293 = vld [vmem:[%s201 + $0x178] sm:$0xff]
        %v294 = vld [vmem:[%s201 + $0x180] sm:$0xff]
        %v295 = vld [vmem:[%s201 + $0x188] sm:$0xff]
        %v296 = vld [vmem:[%s201 + $0x190] sm:$0xff]
        %v297 = vld [vmem:[%s201 + $0x198] sm:$0xff]
        %v298 = vld [vmem:[%s201 + $0x1a0] sm:$0xff]
        %v299 = vld [vmem:[%s201 + $0x1a8] sm:$0xff]
        %v300 = vld [vmem:[%s201 + $0x1b0] sm:$0xff]
        %v301 = vld [vmem:[%s201 + $0x1b8] sm:$0xff]
        %v302 = vld [vmem:[%s201 + $0x1c0] sm:$0xff]
        %v303 = vld [vmem:[%s201 + $0x1c8] sm:$0xff]
        %v304 = vld [vmem:[%s201 + $0x1d0] sm:$0xff]
        %v305 = vld [vmem:[%s201 + $0x1d8] sm:$0xff]
        %v306 = vld [vmem:[%s201 + $0x1e0] sm:$0xff]
        %v307 = vld [vmem:[%s201 + $0x1e8] sm:$0xff]
        %v308 = vld [vmem:[%s201 + $0x1f0] sm:$0xff]
        %v309 = vld [vmem:[%s201 + $0x1f8] sm:$0xff]
        %v310 = vld [vmem:[%s201 + $0x200] sm:$0xff]
        %v311 = vld [vmem:[%s201 + $0x208] sm:$0xff]
        %v312 = vld [vmem:[%s201 + $0x210] sm:$0xff]
        %v313 = vld [vmem:[%s201 + $0x218] sm:$0xff]
        %v314 = vld [vmem:[%s201 + $0x220] sm:$0xff]
        %v315 = vld [vmem:[%s201 + $0x228] sm:$0xff]
        %v316 = vld [vmem:[%s201 + $0x230] sm:$0xff]
        %v317 = vld [vmem:[%s201 + $0x238] sm:$0xff]
        %v318 = vld [vmem:[%s201 + $0x240] sm:$0xff]
        %v319 = vld [vmem:[%s201 + $0x248] sm:$0xff]
        %v320 = vld [vmem:[%s201 + $0x250] sm:$0xff]
        %v321 = vld [vmem:[%s201 + $0x258] sm:$0xff]
        %v322 = vld [vmem:[%s201 + $0x260] sm:$0xff]
        %v323 = vld [vmem:[%s201 + $0x268] sm:$0xff]
        %v324 = vld [vmem:[%s201 + $0x270] sm:$0xff]
        %v325 = vld [vmem:[%s201 + $0x278] sm:$0xff]
        %v326 = vld [vmem:[%s201 + $0x280] sm:$0xff]
        %v327 = vld [vmem:[%s201 + $0x288] sm:$0xff]
        %v328 = vld [vmem:[%s201 + $0x290] sm:$0xff]
        %v329 = vld [vmem:[%s201 + $0x298] sm:$0xff]
        %v330 = vld [vmem:[%s201 + $0x2a0] sm:$0xff]
        %v331 = vld [vmem:[%s201 + $0x2a8] sm:$0xff]
        %v332 = vld [vmem:[%s201 + $0x2b0] sm:$0xff]
        %v333 = vld [vmem:[%s201 + $0x2b8] sm:$0xff]
        %v334 = vld [vmem:[%s201 + $0x2c0] sm:$0xff]
        %v335 = vld [vmem:[%s201 + $0x2c8] sm:$0xff]
        %v336 = vld [vmem:[%s201 + $0x2d0] sm:$0xff]
        %v337 = vld [vmem:[%s201 + $0x2d8] sm:$0xff]
        %v338 = vld [vmem:[%s201 + $0x2e0] sm:$0xff]
        %v339 = vld [vmem:[%s201 + $0x2e8] sm:$0xff]
        %v340 = vld [vmem:[%s201 + $0x2f0] sm:$0xff]
        %v341 = vld [vmem:[%s201 + $0x2f8] sm:$0xff]
        %v342 = vld [vmem:[%s201 + $0x300] sm:$0xff]
        %v343 = vld [vmem:[%s201 + $0x308] sm:$0xff]
        %v344 = vld [vmem:[%s201 + $0x310] sm:$0xff]
        %v345 = vld [vmem:[%s201 + $0x318] sm:$0xff]
        %v346 = vld [vmem:[%s201 + $0x320] sm:$0xff]
        %v347 = vld [vmem:[%s201 + $0x328] sm:$0xff]
        %v348 = vld [vmem:[%s201 + $0x330] sm:$0xff]
        %v349 = vld [vmem:[%s201 + $0x338] sm:$0xff]
        %v350 = vld [vmem:[%s201 + $0x340] sm:$0xff]
        %v351 = vld [vmem:[%s201 + $0x348] sm:$0xff]
        %v352 = vld [vmem:[%s201 + $0x350] sm:$0xff]
        %v353 = vld [vmem:[%s201 + $0x358] sm:$0xff]
        %v354 = vld [vmem:[%s201 + $0x360] sm:$0xff]
        %v355 = vld [vmem:[%s201 + $0x368] sm:$0xff]
        %v356 = vld [vmem:[%s201 + $0x370] sm:$0xff]
        %v357 = vld [vmem:[%s201 + $0x378] sm:$0xff]
        %v358 = vld [vmem:[%s201 + $0x380] sm:$0xff]
        %v359 = vld [vmem:[%s201 + $0x388] sm:$0xff]
        %v360 = vld [vmem:[%s201 + $0x390] sm:$0xff]
        %v361 = vld [vmem:[%s201 + $0x398] sm:$0xff]
        %v362 = vld [vmem:[%s201 + $0x3a0] sm:$0xff]
        %v363 = vld [vmem:[%s201 + $0x3a8] sm:$0xff]
        %v364 = vld [vmem:[%s201 + $0x3b0] sm:$0xff]
        %v365 = vld [vmem:[%s201 + $0x3b8] sm:$0xff]
        %v366 = vld [vmem:[%s201 + $0x3c0] sm:$0xff]
        %v367 = vld [vmem:[%s201 + $0x3c8] sm:$0xff]
        %v368 = vld [vmem:[%s201 + $0x3d0] sm:$0xff]
        %v369 = vld [vmem:[%s201 + $0x3d8] sm:$0xff]
        %v370 = vld [vmem:[%s201 + $0x3e0] sm:$0xff]
        %v371 = vld [vmem:[%s201 + $0x3e8] sm:$0xff]
        %v372 = vld [vmem:[%s201 + $0x3f0] sm:$0xff]
        %v373 = vld [vmem:[%s201 + $0x3f8] sm:$0xff]
        %v374 = vld [vmem:[%s201 + $0x400] sm:$0xff]
        %v375 = vld [vmem:[%s201 + $0x408] sm:$0xff]
        %v376 = vld [vmem:[%s201 + $0x410] sm:$0xff]
        %v377 = vld [vmem:[%s201 + $0x418] sm:$0xff]
        %v378 = vld [vmem:[%s201 + $0x420] sm:$0xff]
        %v379 = vld [vmem:[%s201 + $0x428] sm:$0xff]
        %v380 = vld [vmem:[%s201 + $0x430] sm:$0xff]
        %v381 = vld [vmem:[%s201 + $0x438] sm:$0xff]
        %v382 = vld [vmem:[%s201 + $0x440] sm:$0xff]
        %v383 = vld [vmem:[%s201 + $0x448] sm:$0xff]
        %v384 = vld [vmem:[%s201 + $0x450] sm:$0xff]
        %v385 = vld [vmem:[%s201 + $0x458] sm:$0xff]
        %v386 = vld [vmem:[%s201 + $0x460] sm:$0xff]
        %v387 = vld [vmem:[%s201 + $0x468] sm:$0xff]
        %v388 = vld [vmem:[%s201 + $0x470] sm:$0xff]
        %v389 = vld [vmem:[%s201 + $0x478] sm:$0xff]
        %v390 = vld [vmem:[%s201 + $0x480] sm:$0xff]
        %v391 = vld [vmem:[%s201 + $0x488] sm:$0xff]
        %v392 = vld [vmem:[%s201 + $0x490] sm:$0xff]
        %v393 = vld [vmem:[%s201 + $0x498] sm:$0xff]
        %v394 = vld [vmem:[%s201 + $0x4a0] sm:$0xff]
        %v395 = vld [vmem:[%s201 + $0x4a8] sm:$0xff]
        %v396 = vld [vmem:[%s201 + $0x4b0] sm:$0xff]
        %v397 = vld [vmem:[%s201 + $0x4b8] sm:$0xff]
        %v398 = vld [vmem:[%s201 + $0x4c0] sm:$0xff]
        %v399 = vld [vmem:[%s201 + $0x4c8] sm:$0xff]
        %v400 = vld [vmem:[%s201 + $0x4d0] sm:$0xff]
        %v401 = vld [vmem:[%s201 + $0x4d8] sm:$0xff]
        %v402 = vld [vmem:[%s201 + $0x4e0] sm:$0xff]
        %v403 = vld [vmem:[%s201 + $0x4e8] sm:$0xff]
        %v404 = vld [vmem:[%s201 + $0x4f0] sm:$0xff]
        %v405 = vld [vmem:[%s201 + $0x4f8] sm:$0xff]
        %v406 = vld [vmem:[%s201 + $0x500] sm:$0xff]
        %v407 = vld [vmem:[%s201 + $0x508] sm:$0xff]
        %v408 = vld [vmem:[%s201 + $0x510] sm:$0xff]
        %v409 = vld [vmem:[%s201 + $0x518] sm:$0xff]
        %v410 = vld [vmem:[%s201 + $0x520] sm:$0xff]
        %v411 = vld [vmem:[%s201 + $0x528] sm:$0xff]
        %v412 = vld [vmem:[%s201 + $0x530] sm:$0xff]
        %v413 = vld [vmem:[%s201 + $0x538] sm:$0xff]
        %v414 = vld [vmem:[%s201 + $0x540] sm:$0xff]
        %v415 = vld [vmem:[%s201 + $0x548] sm:$0xff]
        %v416 = vld [vmem:[%s201 + $0x550] sm:$0xff]
        %v417 = vld [vmem:[%s201 + $0x558] sm:$0xff]
        %v418 = vld [vmem:[%s201 + $0x560] sm:$0xff]
        %v419 = vld [vmem:[%s201 + $0x568] sm:$0xff]
        %v420 = vld [vmem:[%s201 + $0x570] sm:$0xff]
        %v421 = vld [vmem:[%s201 + $0x578] sm:$0xff]
        %v422 = vld [vmem:[%s201 + $0x580] sm:$0xff]
        %v423 = vld [vmem:[%s201 + $0x588] sm:$0xff]
        %v424 = vld [vmem:[%s201 + $0x590] sm:$0xff]
        %v425 = vld [vmem:[%s201 + $0x598] sm:$0xff]
        %v426 = vld [vmem:[%s201 + $0x5a0] sm:$0xff]
        %v427 = vld [vmem:[%s201 + $0x5a8] sm:$0xff]
        %v428 = vld [vmem:[%s201 + $0x5b0] sm:$0xff]
        %v429 = vld [vmem:[%s201 + $0x5b8] sm:$0xff]
        %v430 = vld [vmem:[%s201 + $0x5c0] sm:$0xff]
        %v431 = vld [vmem:[%s201 + $0x5c8] sm:$0xff]
        %v432 = vld [vmem:[%s201 + $0x5d0] sm:$0xff]
        %v433 = vld [vmem:[%s201 + $0x5d8] sm:$0xff]
        %v434 = vld [vmem:[%s201 + $0x5e0] sm:$0xff]
        %v435 = vld [vmem:[%s201 + $0x5e8] sm:$0xff]
        %v436 = vld [vmem:[%s201 + $0x5f0] sm:$0xff]
        %v437 = vld [vmem:[%s201 + $0x5f8] sm:$0xff]
        %v438 = vld [vmem:[%s201 + $0x600] sm:$0xff]
        %v439 = vld [vmem:[%s201 + $0x608] sm:$0xff]
        %v440 = vld [vmem:[%s201 + $0x610] sm:$0xff]
        %v441 = vld [vmem:[%s201 + $0x618] sm:$0xff]
        %v442 = vld [vmem:[%s201 + $0x620] sm:$0xff]
        %v443 = vld [vmem:[%s201 + $0x628] sm:$0xff]
        %v444 = vld [vmem:[%s201 + $0x630] sm:$0xff]
        %v445 = vld [vmem:[%s201 + $0x638] sm:$0xff]
        %v446 = vld [vmem:[%s201 + $0x640] sm:$0xff]
        %v447 = vld [vmem:[%s201 + $0x648] sm:$0xff]
        %v448 = vld [vmem:[%s201 + $0x650] sm:$0xff]
        %v449 = vld [vmem:[%s201 + $0x658] sm:$0xff]
        %v450 = vld [vmem:[%s201 + $0x660] sm:$0xff]
        %v451 = vld [vmem:[%s201 + $0x668] sm:$0xff]
        %v452 = vld [vmem:[%s201 + $0x670] sm:$0xff]
        %v453 = vld [vmem:[%s201 + $0x678] sm:$0xff]
        %v454 = vld [vmem:[%s201 + $0x680] sm:$0xff]
        %v455 = vld [vmem:[%s201 + $0x688] sm:$0xff]
        %v456 = vld [vmem:[%s201 + $0x690] sm:$0xff]
        %v457 = vld [vmem:[%s201 + $0x698] sm:$0xff]
        %v458 = vld [vmem:[%s201 + $0x6a0] sm:$0xff]
        %v459 = vld [vmem:[%s201 + $0x6a8] sm:$0xff]
        %v460 = vld [vmem:[%s201 + $0x6b0] sm:$0xff]
        %v461 = vld [vmem:[%s201 + $0x6b8] sm:$0xff]
        %v462 = vld [vmem:[%s201 + $0x6c0] sm:$0xff]
        %v463 = vld [vmem:[%s201 + $0x6c8] sm:$0xff]
        %v464 = vld [vmem:[%s201 + $0x6d0] sm:$0xff]
        %v465 = vld [vmem:[%s201 + $0x6d8] sm:$0xff]
        %v466 = vld [vmem:[%s201 + $0x6e0] sm:$0xff]
        %v467 = vld [vmem:[%s201 + $0x6e8] sm:$0xff]
        %v468 = vld [vmem:[%s201 + $0x6f0] sm:$0xff]
        %v469 = vld [vmem:[%s201 + $0x6f8] sm:$0xff]
        %v470 = vld [vmem:[%s201 + $0x700] sm:$0xff]
        %v471 = vld [vmem:[%s201 + $0x708] sm:$0xff]
        %v472 = vld [vmem:[%s201 + $0x710] sm:$0xff]
        %v473 = vld [vmem:[%s201 + $0x718] sm:$0xff]
        %v474 = vld [vmem:[%s201 + $0x720] sm:$0xff]
        %v475 = vld [vmem:[%s201 + $0x728] sm:$0xff]
        %v476 = vld [vmem:[%s201 + $0x730] sm:$0xff]
        %v477 = vld [vmem:[%s201 + $0x738] sm:$0xff]
        %v478 = vld [vmem:[%s201 + $0x740] sm:$0xff]
        %v479 = vld [vmem:[%s201 + $0x748] sm:$0xff]
        %v480 = vld [vmem:[%s201 + $0x750] sm:$0xff]
        %v481 = vld [vmem:[%s201 + $0x758] sm:$0xff]
        %v482 = vld [vmem:[%s201 + $0x760] sm:$0xff]
        %v483 = vld [vmem:[%s201 + $0x768] sm:$0xff]
        %v484 = vld [vmem:[%s201 + $0x770] sm:$0xff]
        %v485 = vld [vmem:[%s201 + $0x778] sm:$0xff]
        %v486 = vld [vmem:[%s201 + $0x780] sm:$0xff]
        %v487 = vld [vmem:[%s201 + $0x788] sm:$0xff]
        %v488 = vld [vmem:[%s201 + $0x790] sm:$0xff]
        %v489 = vld [vmem:[%s201 + $0x798] sm:$0xff]
        %v490 = vld [vmem:[%s201 + $0x7a0] sm:$0xff]
        %v491 = vld [vmem:[%s201 + $0x7a8] sm:$0xff]
        %v492 = vld [vmem:[%s201 + $0x7b0] sm:$0xff]
        %v493 = vld [vmem:[%s201 + $0x7b8] sm:$0xff]
        %v494 = vld [vmem:[%s201 + $0x7c0] sm:$0xff]
        %v495 = vld [vmem:[%s201 + $0x7c8] sm:$0xff]
        %v496 = vld [vmem:[%s201 + $0x7d0] sm:$0xff]
        %v497 = vld [vmem:[%s201 + $0x7d8] sm:$0xff]
        %v498 = vld [vmem:[%s201 + $0x7e0] sm:$0xff]
        %v499 = vld [vmem:[%s201 + $0x7e8] sm:$0xff]
        %v500 = vld [vmem:[%s201 + $0x7f0] sm:$0xff]
        %v501 = vld [vmem:[%s201 + $0x7f8] sm:$0xff]
        %v502 = vld [vmem:[%s201 + $0x800] sm:$0xff]
        %v503 = vld [vmem:[%s201 + $0x808] sm:$0xff]
        %v504 = vld [vmem:[%s201 + $0x810] sm:$0xff]
        %v505 = vld [vmem:[%s201 + $0x818] sm:$0xff]
        %v506 = vld [vmem:[%s201 + $0x820] sm:$0xff]
        %v507 = vld [vmem:[%s201 + $0x828] sm:$0xff]
        %v508 = vld [vmem:[%s201 + $0x830] sm:$0xff]
        %v509 = vld [vmem:[%s201 + $0x838] sm:$0xff]
        %v510 = vld [vmem:[%s201 + $0x840] sm:$0xff]
        %v511 = vld [vmem:[%s201 + $0x848] sm:$0xff]
        %v512 = vld [vmem:[%s201 + $0x850] sm:$0xff]
        %v513 = vld [vmem:[%s201 + $0x858] sm:$0xff]
        %v514 = vld [vmem:[%s201 + $0x860] sm:$0xff]
        %v515 = vld [vmem:[%s201 + $0x868] sm:$0xff]
        %v516 = vld [vmem:[%s201 + $0x870] sm:$0xff]
        %v517 = vld [vmem:[%s201 + $0x878] sm:$0xff]
        %v518 = vld [vmem:[%s201 + $0x880] sm:$0xff]
        %v519 = vld [vmem:[%s201 + $0x888] sm:$0xff]
        %v520 = vld [vmem:[%s201 + $0x890] sm:$0xff]
        %v521 = vld [vmem:[%s201 + $0x898] sm:$0xff]
        %v522 = vld [vmem:[%s201 + $0x8a0] sm:$0xff]
        %v523 = vld [vmem:[%s201 + $0x8a8] sm:$0xff]
        %v524 = vld [vmem:[%s201 + $0x8b0] sm:$0xff]
        %v525 = vld [vmem:[%s201 + $0x8b8] sm:$0xff]
        %v526 = vld [vmem:[%s201 + $0x8c0] sm:$0xff]
        %v527 = vld [vmem:[%s201 + $0x8c8] sm:$0xff]
        %v528 = vld [vmem:[%s201 + $0x8d0] sm:$0xff]
        %v529 = vld [vmem:[%s201 + $0x8d8] sm:$0xff]
        %v530 = vld [vmem:[%s201 + $0x8e0] sm:$0xff]
        %v531 = vld [vmem:[%s201 + $0x8e8] sm:$0xff]
        %v532 = vld [vmem:[%s201 + $0x8f0] sm:$0xff]
        %v533 = vld [vmem:[%s201 + $0x8f8] sm:$0xff]
        %v534 = vld [vmem:[%s201 + $0x900] sm:$0xff]
        %v535 = vld [vmem:[%s201 + $0x908] sm:$0xff]
        %v536 = vld [vmem:[%s201 + $0x910] sm:$0xff]
        %v537 = vld [vmem:[%s201 + $0x918] sm:$0xff]
        %v538 = vld [vmem:[%s201 + $0x920] sm:$0xff]
        %v539 = vld [vmem:[%s201 + $0x928] sm:$0xff]
        %v540 = vld [vmem:[%s201 + $0x930] sm:$0xff]
        %v541 = vld [vmem:[%s201 + $0x938] sm:$0xff]
        %v542 = vld [vmem:[%s201 + $0x940] sm:$0xff]
        %v543 = vld [vmem:[%s201 + $0x948] sm:$0xff]
        %v544 = vld [vmem:[%s201 + $0x950] sm:$0xff]
        %v545 = vld [vmem:[%s201 + $0x958] sm:$0xff]
        %v546 = vld [vmem:[%s201 + $0x960] sm:$0xff]
        %v547 = vld [vmem:[%s201 + $0x968] sm:$0xff]
        %v548 = vld [vmem:[%s201 + $0x970] sm:$0xff]
        %v549 = vld [vmem:[%s201 + $0x978] sm:$0xff]
        %v550 = vld [vmem:[%s201 + $0x980] sm:$0xff]
        %v551 = vld [vmem:[%s201 + $0x988] sm:$0xff]
        %v552 = vld [vmem:[%s201 + $0x990] sm:$0xff]
        %v553 = vld [vmem:[%s201 + $0x998] sm:$0xff]
        %v554 = vld [vmem:[%s201 + $0x9a0] sm:$0xff]
        %v555 = vld [vmem:[%s201 + $0x9a8] sm:$0xff]
        %v556 = vld [vmem:[%s201 + $0x9b0] sm:$0xff]
        %v557 = vld [vmem:[%s201 + $0x9b8] sm:$0xff]
        %v558 = vld [vmem:[%s201 + $0x9c0] sm:$0xff]
        %v559 = vld [vmem:[%s201 + $0x9c8] sm:$0xff]
        %v560 = vld [vmem:[%s201 + $0x9d0] sm:$0xff]
        %v561 = vld [vmem:[%s201 + $0x9d8] sm:$0xff]
        %v562 = vld [vmem:[%s201 + $0x9e0] sm:$0xff]
        %v563 = vld [vmem:[%s201 + $0x9e8] sm:$0xff]
        %v564 = vld [vmem:[%s201 + $0x9f0] sm:$0xff]
        %v565 = vld [vmem:[%s201 + $0x9f8] sm:$0xff]
        %v566 = vld [vmem:[%s201 + $0xa00] sm:$0xff]
        %v567 = vld [vmem:[%s201 + $0xa08] sm:$0xff]
        %v568 = vld [vmem:[%s201 + $0xa10] sm:$0xff]
        %v569 = vld [vmem:[%s201 + $0xa18] sm:$0xff]
        %v570 = vld [vmem:[%s201 + $0xa20] sm:$0xff]
        %v571 = vld [vmem:[%s201 + $0xa28] sm:$0xff]
        %v572 = vld [vmem:[%s201 + $0xa30] sm:$0xff]
        %v573 = vld [vmem:[%s201 + $0xa38] sm:$0xff]
        %v574 = vld [vmem:[%s201 + $0xa40] sm:$0xff]
        %v575 = vld [vmem:[%s201 + $0xa48] sm:$0xff]
        %v576 = vld [vmem:[%s201 + $0xa50] sm:$0xff]
        %v577 = vld [vmem:[%s201 + $0xa58] sm:$0xff]
        %v578 = vld [vmem:[%s201 + $0xa60] sm:$0xff]
        %v579 = vld [vmem:[%s201 + $0xa68] sm:$0xff]
        %v580 = vld [vmem:[%s201 + $0xa70] sm:$0xff]
        %v581 = vld [vmem:[%s201 + $0xa78] sm:$0xff]
        %v582 = vld [vmem:[%s201 + $0xa80] sm:$0xff]
        %v583 = vld [vmem:[%s201 + $0xa88] sm:$0xff]
        %v584 = vld [vmem:[%s201 + $0xa90] sm:$0xff]
        %v585 = vld [vmem:[%s201 + $0xa98] sm:$0xff]
        %v586 = vld [vmem:[%s201 + $0xaa0] sm:$0xff]
        %v587 = vld [vmem:[%s201 + $0xaa8] sm:$0xff]
        %v588 = vld [vmem:[%s201 + $0xab0] sm:$0xff]
        %v589 = vld [vmem:[%s201 + $0xab8] sm:$0xff]
        %v590 = vld [vmem:[%s201 + $0xac0] sm:$0xff]
        %v591 = vld [vmem:[%s201 + $0xac8] sm:$0xff]
        %v592 = vld [vmem:[%s201 + $0xad0] sm:$0xff]
        %v593 = vld [vmem:[%s201 + $0xad8] sm:$0xff]
        %v594 = vld [vmem:[%s201 + $0xae0] sm:$0xff]
        %v595 = vld [vmem:[%s201 + $0xae8] sm:$0xff]
        %v596 = vld [vmem:[%s201 + $0xaf0] sm:$0xff]
        %v597 = vld [vmem:[%s201 + $0xaf8] sm:$0xff]
        %v598 = vld [vmem:[%s201 + $0xb00] sm:$0xff]
        %v599 = vld [vmem:[%s201 + $0xb08] sm:$0xff]
        %v600 = vld [vmem:[%s201 + $0xb10] sm:$0xff]
        %v601 = vld [vmem:[%s201 + $0xb18] sm:$0xff]
        %v602 = vld [vmem:[%s201 + $0xb20] sm:$0xff]
        %v603 = vld [vmem:[%s201 + $0xb28] sm:$0xff]
        %v604 = vld [vmem:[%s201 + $0xb30] sm:$0xff]
        %v605 = vld [vmem:[%s201 + $0xb38] sm:$0xff]
        %v606 = vld [vmem:[%s201 + $0xb40] sm:$0xff]
        %v607 = vld [vmem:[%s201 + $0xb48] sm:$0xff]
        %v608 = vld [vmem:[%s201 + $0xb50] sm:$0xff]
        %v609 = vld [vmem:[%s201 + $0xb58] sm:$0xff]
        %v610 = vld [vmem:[%s201 + $0xb60] sm:$0xff]
        %v611 = vld [vmem:[%s201 + $0xb68] sm:$0xff]
        %v612 = vld [vmem:[%s201 + $0xb70] sm:$0xff]
        %v613 = vld [vmem:[%s201 + $0xb78] sm:$0xff]
        %v614 = vld [vmem:[%s201 + $0xb80] sm:$0xff]
        %v615 = vld [vmem:[%s201 + $0xb88] sm:$0xff]
        %v616 = vld [vmem:[%s201 + $0xb90] sm:$0xff]
        %v617 = vld [vmem:[%s201 + $0xb98] sm:$0xff]
        %v618 = vld [vmem:[%s201 + $0xba0] sm:$0xff]
        %v619 = vld [vmem:[%s201 + $0xba8] sm:$0xff]
        %v620 = vld [vmem:[%s201 + $0xbb0] sm:$0xff]
        %v621 = vld [vmem:[%s201 + $0xbb8] sm:$0xff]
        %v622 = vld [vmem:[%s201 + $0xbc0] sm:$0xff]
        %v623 = vld [vmem:[%s201 + $0xbc8] sm:$0xff]
        %v624 = vld [vmem:[%s201 + $0xbd0] sm:$0xff]
        %v625 = vld [vmem:[%s201 + $0xbd8] sm:$0xff]
        %v626 = vld [vmem:[%s201 + $0xbe0] sm:$0xff]
        %v627 = vld [vmem:[%s201 + $0xbe8] sm:$0xff]
        %v628 = vld [vmem:[%s201 + $0xbf0] sm:$0xff]
        %v629 = vld [vmem:[%s201 + $0xbf8] sm:$0xff]
        %v630 = vld [vmem:[%s201 + $0xc00] sm:$0xff]
        %v631 = vld [vmem:[%s201 + $0xc08] sm:$0xff]
        %v632 = vld [vmem:[%s201 + $0xc10] sm:$0xff]
        %v633 = vld [vmem:[%s201 + $0xc18] sm:$0xff]
        %v634 = vld [vmem:[%s201 + $0xc20] sm:$0xff]
        %v635 = vld [vmem:[%s201 + $0xc28] sm:$0xff]
        %v636 = vld [vmem:[%s201 + $0xc30] sm:$0xff]
        %v637 = vld [vmem:[%s201 + $0xc38] sm:$0xff]
        %v638 = vld [vmem:[%s201 + $0xc40] sm:$0xff]
        %v639 = vld [vmem:[%s201 + $0xc48] sm:$0xff]
        %v640 = vld [vmem:[%s201 + $0xc50] sm:$0xff]
        %v641 = vld [vmem:[%s201 + $0xc58] sm:$0xff]
        %v642 = vld [vmem:[%s201 + $0xc60] sm:$0xff]
        %v643 = vld [vmem:[%s201 + $0xc68] sm:$0xff]
        %v644 = vld [vmem:[%s201 + $0xc70] sm:$0xff]
        %v645 = vld [vmem:[%s201 + $0xc78] sm:$0xff]
        %v646 = vld [vmem:[%s201 + $0xc80] sm:$0xff]
        %v647 = vld [vmem:[%s201 + $0xc88] sm:$0xff]
        %v648 = vld [vmem:[%s201 + $0xc90] sm:$0xff]
        %v649 = vld [vmem:[%s201 + $0xc98] sm:$0xff]
        %v650 = vld [vmem:[%s201 + $0xca0] sm:$0xff]
        %v651 = vld [vmem:[%s201 + $0xca8] sm:$0xff]
        %v652 = vld [vmem:[%s201 + $0xcb0] sm:$0xff]
        %v653 = vld [vmem:[%s201 + $0xcb8] sm:$0xff]
        %v654 = vld [vmem:[%s201 + $0xcc0] sm:$0xff]
        %v655 = vld [vmem:[%s201 + $0xcc8] sm:$0xff]
        %v656 = vld [vmem:[%s201 + $0xcd0] sm:$0xff]
        %v657 = vld [vmem:[%s201 + $0xcd8] sm:$0xff]
        %v658 = vld [vmem:[%s201 + $0xce0] sm:$0xff]
        %v659 = vld [vmem:[%s201 + $0xce8] sm:$0xff]
        %v660 = vld [vmem:[%s201 + $0xcf0] sm:$0xff]
        %v661 = vld [vmem:[%s201 + $0xcf8] sm:$0xff]
        %v662 = vld [vmem:[%s201 + $0xd00] sm:$0xff]
        %v663 = vld [vmem:[%s201 + $0xd08] sm:$0xff]
        %v664 = vld [vmem:[%s201 + $0xd10] sm:$0xff]
        %v665 = vld [vmem:[%s201 + $0xd18] sm:$0xff]
        %v666 = vld [vmem:[%s201 + $0xd20] sm:$0xff]
        %v667 = vld [vmem:[%s201 + $0xd28] sm:$0xff]
        %v668 = vld [vmem:[%s201 + $0xd30] sm:$0xff]
        %v669 = vld [vmem:[%s201 + $0xd38] sm:$0xff]
        %v670 = vld [vmem:[%s201 + $0xd40] sm:$0xff]
        %v671 = vld [vmem:[%s201 + $0xd48] sm:$0xff]
        %v672 = vld [vmem:[%s201 + $0xd50] sm:$0xff]
        %v673 = vld [vmem:[%s201 + $0xd58] sm:$0xff]
        %v674 = vld [vmem:[%s201 + $0xd60] sm:$0xff]
        %v675 = vld [vmem:[%s201 + $0xd68] sm:$0xff]
        %v676 = vld [vmem:[%s201 + $0xd70] sm:$0xff]
        %v677 = vld [vmem:[%s201 + $0xd78] sm:$0xff]
        %v678 = vld [vmem:[%s201 + $0xd80] sm:$0xff]
        %v679 = vld [vmem:[%s201 + $0xd88] sm:$0xff]
        %v680 = vld [vmem:[%s201 + $0xd90] sm:$0xff]
        %v681 = vld [vmem:[%s201 + $0xd98] sm:$0xff]
        %v682 = vld [vmem:[%s201 + $0xda0] sm:$0xff]
        %v683 = vld [vmem:[%s201 + $0xda8] sm:$0xff]
        %v684 = vld [vmem:[%s201 + $0xdb0] sm:$0xff]
        %v685 = vld [vmem:[%s201 + $0xdb8] sm:$0xff]
        %v686 = vld [vmem:[%s201 + $0xdc0] sm:$0xff]
        %v687 = vld [vmem:[%s201 + $0xdc8] sm:$0xff]
        %v688 = vld [vmem:[%s201 + $0xdd0] sm:$0xff]
        %v689 = vld [vmem:[%s201 + $0xdd8] sm:$0xff]
        %v690 = vld [vmem:[%s201 + $0xde0] sm:$0xff]
        %v691 = vld [vmem:[%s201 + $0xde8] sm:$0xff]
        %v692 = vld [vmem:[%s201 + $0xdf0] sm:$0xff]
        %v693 = vld [vmem:[%s201 + $0xdf8] sm:$0xff]
        %v694 = vld [vmem:[%s201 + $0xe00] sm:$0xff]
        %v695 = vld [vmem:[%s201 + $0xe08] sm:$0xff]
        %v696 = vld [vmem:[%s201 + $0xe10] sm:$0xff]
        %v697 = vld [vmem:[%s201 + $0xe18] sm:$0xff]
        %v698 = vld [vmem:[%s201 + $0xe20] sm:$0xff]
        %v699 = vld [vmem:[%s201 + $0xe28] sm:$0xff]
        %v700 = vld [vmem:[%s201 + $0xe30] sm:$0xff]
        %v701 = vld [vmem:[%s201 + $0xe38] sm:$0xff]
        %v702 = vld [vmem:[%s201 + $0xe40] sm:$0xff]
        %v703 = vld [vmem:[%s201 + $0xe48] sm:$0xff]
        %v704 = vld [vmem:[%s201 + $0xe50] sm:$0xff]
        %v705 = vld [vmem:[%s201 + $0xe58] sm:$0xff]
        %v706 = vld [vmem:[%s201 + $0xe60] sm:$0xff]
        %v707 = vld [vmem:[%s201 + $0xe68] sm:$0xff]
        %v708 = vld [vmem:[%s201 + $0xe70] sm:$0xff]
        %v709 = vld [vmem:[%s201 + $0xe78] sm:$0xff]
        %v710 = vld [vmem:[%s201 + $0xe80] sm:$0xff]
        %v711 = vld [vmem:[%s201 + $0xe88] sm:$0xff]
        %v712 = vld [vmem:[%s201 + $0xe90] sm:$0xff]
        %v713 = vld [vmem:[%s201 + $0xe98] sm:$0xff]
        %v714 = vld [vmem:[%s201 + $0xea0] sm:$0xff]
        %v715 = vld [vmem:[%s201 + $0xea8] sm:$0xff]
        %v716 = vld [vmem:[%s201 + $0xeb0] sm:$0xff]
        %v717 = vld [vmem:[%s201 + $0xeb8] sm:$0xff]
        %v718 = vld [vmem:[%s201 + $0xec0] sm:$0xff]
        %v719 = vld [vmem:[%s201 + $0xec8] sm:$0xff]
        %v720 = vld [vmem:[%s201 + $0xed0] sm:$0xff]
        %v721 = vld [vmem:[%s201 + $0xed8] sm:$0xff]
        %v722 = vld [vmem:[%s201 + $0xee0] sm:$0xff]
        %v723 = vld [vmem:[%s201 + $0xee8] sm:$0xff]
        %v724 = vld [vmem:[%s201 + $0xef0] sm:$0xff]
        %v725 = vld [vmem:[%s201 + $0xef8] sm:$0xff]
        %v726 = vld [vmem:[%s201 + $0xf00] sm:$0xff]
        %v727 = vld [vmem:[%s201 + $0xf08] sm:$0xff]
        %v728 = vld [vmem:[%s201 + $0xf10] sm:$0xff]
        %v729 = vld [vmem:[%s201 + $0xf18] sm:$0xff]
        %v730 = vld [vmem:[%s201 + $0xf20] sm:$0xff]
        %v731 = vld [vmem:[%s201 + $0xf28] sm:$0xff]
        %v732 = vld [vmem:[%s201 + $0xf30] sm:$0xff]
        %v733 = vld [vmem:[%s201 + $0xf38] sm:$0xff]
        %v734 = vld [vmem:[%s201 + $0xf40] sm:$0xff]
        %v735 = vld [vmem:[%s201 + $0xf48] sm:$0xff]
        %v736 = vld [vmem:[%s201 + $0xf50] sm:$0xff]
        %v737 = vld [vmem:[%s201 + $0xf58] sm:$0xff]
        %v738 = vld [vmem:[%s201 + $0xf60] sm:$0xff]
        %v739 = vld [vmem:[%s201 + $0xf68] sm:$0xff]
        %v740 = vld [vmem:[%s201 + $0xf70] sm:$0xff]
        %v741 = vld [vmem:[%s201 + $0xf78] sm:$0xff]
        %v742 = vld [vmem:[%s201 + $0xf80] sm:$0xff]
        %v743 = vld [vmem:[%s201 + $0xf88] sm:$0xff]
        %v744 = vld [vmem:[%s201 + $0xf90] sm:$0xff]
        %v745 = vld [vmem:[%s201 + $0xf98] sm:$0xff]
        %v746 = vld [vmem:[%s201 + $0xfa0] sm:$0xff]
        %v747 = vld [vmem:[%s201 + $0xfa8] sm:$0xff]
        %v748 = vld [vmem:[%s201 + $0xfb0] sm:$0xff]
        %v749 = vld [vmem:[%s201 + $0xfb8] sm:$0xff]
        %v750 = vld [vmem:[%s201 + $0xfc0] sm:$0xff]
        %v751 = vld [vmem:[%s201 + $0xfc8] sm:$0xff]
        %v752 = vld [vmem:[%s201 + $0xfd0] sm:$0xff]
        %v753 = vld [vmem:[%s201 + $0xfd8] sm:$0xff]
        %v754 = vld [vmem:[%s201 + $0xfe0] sm:$0xff]
        %v755 = vld [vmem:[%s201 + $0xfe8] sm:$0xff]
        %v756 = vld [vmem:[%s201 + $0xff0] sm:$0xff]
        %v757 = vld [vmem:[%s201 + $0xff8] sm:$0xff]
        %v758 = vld [vmem:[%s210] sm:$0xff]
        %v759 = vld [vmem:[%s210 + $0x8] sm:$0xff]
        %v760 = vld [vmem:[%s210 + $0x10] sm:$0xff]
        %v761 = vld [vmem:[%s210 + $0x18] sm:$0xff]
        %v762 = vld [vmem:[%s210 + $0x20] sm:$0xff]
        %v763 = vld [vmem:[%s210 + $0x28] sm:$0xff]
        %v764 = vld [vmem:[%s210 + $0x30] sm:$0xff]
        %v765 = vld [vmem:[%s210 + $0x38] sm:$0xff]
        %v766 = vld [vmem:[%s210 + $0x40] sm:$0xff]
        %v767 = vld [vmem:[%s210 + $0x48] sm:$0xff]
        %v768 = vld [vmem:[%s210 + $0x50] sm:$0xff]
        %v769 = vld [vmem:[%s210 + $0x58] sm:$0xff]
        %v770 = vld [vmem:[%s210 + $0x60] sm:$0xff]
        %v771 = vld [vmem:[%s210 + $0x68] sm:$0xff]
        %v772 = vld [vmem:[%s210 + $0x70] sm:$0xff]
        %v773 = vld [vmem:[%s210 + $0x78] sm:$0xff]
        %v774 = vld [vmem:[%s210 + $0x80] sm:$0xff]
        %v775 = vld [vmem:[%s210 + $0x88] sm:$0xff]
        %v776 = vld [vmem:[%s210 + $0x90] sm:$0xff]
        %v777 = vld [vmem:[%s210 + $0x98] sm:$0xff]
        %v778 = vld [vmem:[%s210 + $0xa0] sm:$0xff]
        %v779 = vld [vmem:[%s210 + $0xa8] sm:$0xff]
        %v780 = vld [vmem:[%s210 + $0xb0] sm:$0xff]
        %v781 = vld [vmem:[%s210 + $0xb8] sm:$0xff]
        %v782 = vld [vmem:[%s210 + $0xc0] sm:$0xff]
        %v783 = vld [vmem:[%s210 + $0xc8] sm:$0xff]
        %v784 = vld [vmem:[%s210 + $0xd0] sm:$0xff]
        %v785 = vld [vmem:[%s210 + $0xd8] sm:$0xff]
        %v786 = vld [vmem:[%s210 + $0xe0] sm:$0xff]
        %v787 = vld [vmem:[%s210 + $0xe8] sm:$0xff]
        %v788 = vld [vmem:[%s210 + $0xf0] sm:$0xff]
        %v789 = vld [vmem:[%s210 + $0xf8] sm:$0xff]
        %v790 = vld [vmem:[%s210 + $0x100] sm:$0xff]
        %v791 = vld [vmem:[%s210 + $0x108] sm:$0xff]
        %v792 = vld [vmem:[%s210 + $0x110] sm:$0xff]
        %v793 = vld [vmem:[%s210 + $0x118] sm:$0xff]
        %v794 = vld [vmem:[%s210 + $0x120] sm:$0xff]
        %v795 = vld [vmem:[%s210 + $0x128] sm:$0xff]
        %v796 = vld [vmem:[%s210 + $0x130] sm:$0xff]
        %v797 = vld [vmem:[%s210 + $0x138] sm:$0xff]
        %v798 = vld [vmem:[%s210 + $0x140] sm:$0xff]
        %v799 = vld [vmem:[%s210 + $0x148] sm:$0xff]
        %v800 = vld [vmem:[%s210 + $0x150] sm:$0xff]
        %v801 = vld [vmem:[%s210 + $0x158] sm:$0xff]
        %v802 = vld [vmem:[%s210 + $0x160] sm:$0xff]
        %v803 = vld [vmem:[%s210 + $0x168] sm:$0xff]
        %v804 = vld [vmem:[%s210 + $0x170] sm:$0xff]
        %v805 = vld [vmem:[%s210 + $0x178] sm:$0xff]
        %v806 = vld [vmem:[%s210 + $0x180] sm:$0xff]
        %v807 = vld [vmem:[%s210 + $0x188] sm:$0xff]
        %v808 = vld [vmem:[%s210 + $0x190] sm:$0xff]
        %v809 = vld [vmem:[%s210 + $0x198] sm:$0xff]
        %v810 = vld [vmem:[%s210 + $0x1a0] sm:$0xff]
        %v811 = vld [vmem:[%s210 + $0x1a8] sm:$0xff]
        %v812 = vld [vmem:[%s210 + $0x1b0] sm:$0xff]
        %v813 = vld [vmem:[%s210 + $0x1b8] sm:$0xff]
        %v814 = vld [vmem:[%s210 + $0x1c0] sm:$0xff]
        %v815 = vld [vmem:[%s210 + $0x1c8] sm:$0xff]
        %v816 = vld [vmem:[%s210 + $0x1d0] sm:$0xff]
        %v817 = vld [vmem:[%s210 + $0x1d8] sm:$0xff]
        %v818 = vld [vmem:[%s210 + $0x1e0] sm:$0xff]
        %v819 = vld [vmem:[%s210 + $0x1e8] sm:$0xff]
        %v820 = vld [vmem:[%s210 + $0x1f0] sm:$0xff]
        %v821 = vld [vmem:[%s210 + $0x1f8] sm:$0xff]
        %v822 = vld [vmem:[%s210 + $0x200] sm:$0xff]
        %v823 = vld [vmem:[%s210 + $0x208] sm:$0xff]
        %v824 = vld [vmem:[%s210 + $0x210] sm:$0xff]
        %v825 = vld [vmem:[%s210 + $0x218] sm:$0xff]
        %v826 = vld [vmem:[%s210 + $0x220] sm:$0xff]
        %v827 = vld [vmem:[%s210 + $0x228] sm:$0xff]
        %v828 = vld [vmem:[%s210 + $0x230] sm:$0xff]
        %v829 = vld [vmem:[%s210 + $0x238] sm:$0xff]
        %v830 = vld [vmem:[%s210 + $0x240] sm:$0xff]
        %v831 = vld [vmem:[%s210 + $0x248] sm:$0xff]
        %v832 = vld [vmem:[%s210 + $0x250] sm:$0xff]
        %v833 = vld [vmem:[%s210 + $0x258] sm:$0xff]
        %v834 = vld [vmem:[%s210 + $0x260] sm:$0xff]
        %v835 = vld [vmem:[%s210 + $0x268] sm:$0xff]
        %v836 = vld [vmem:[%s210 + $0x270] sm:$0xff]
        %v837 = vld [vmem:[%s210 + $0x278] sm:$0xff]
        %v838 = vld [vmem:[%s210 + $0x280] sm:$0xff]
        %v839 = vld [vmem:[%s210 + $0x288] sm:$0xff]
        %v840 = vld [vmem:[%s210 + $0x290] sm:$0xff]
        %v841 = vld [vmem:[%s210 + $0x298] sm:$0xff]
        %v842 = vld [vmem:[%s210 + $0x2a0] sm:$0xff]
        %v843 = vld [vmem:[%s210 + $0x2a8] sm:$0xff]
        %v844 = vld [vmem:[%s210 + $0x2b0] sm:$0xff]
        %v845 = vld [vmem:[%s210 + $0x2b8] sm:$0xff]
        %v846 = vld [vmem:[%s210 + $0x2c0] sm:$0xff]
        %v847 = vld [vmem:[%s210 + $0x2c8] sm:$0xff]
        %v848 = vld [vmem:[%s210 + $0x2d0] sm:$0xff]
        %v849 = vld [vmem:[%s210 + $0x2d8] sm:$0xff]
        %v850 = vld [vmem:[%s210 + $0x2e0] sm:$0xff]
        %v851 = vld [vmem:[%s210 + $0x2e8] sm:$0xff]
        %v852 = vld [vmem:[%s210 + $0x2f0] sm:$0xff]
        %v853 = vld [vmem:[%s210 + $0x2f8] sm:$0xff]
        %v854 = vld [vmem:[%s210 + $0x300] sm:$0xff]
        %v855 = vld [vmem:[%s210 + $0x308] sm:$0xff]
        %v856 = vld [vmem:[%s210 + $0x310] sm:$0xff]
        %v857 = vld [vmem:[%s210 + $0x318] sm:$0xff]
        %v858 = vld [vmem:[%s210 + $0x320] sm:$0xff]
        %v859 = vld [vmem:[%s210 + $0x328] sm:$0xff]
        %v860 = vld [vmem:[%s210 + $0x330] sm:$0xff]
        %v861 = vld [vmem:[%s210 + $0x338] sm:$0xff]
        %v862 = vld [vmem:[%s210 + $0x340] sm:$0xff]
        %v863 = vld [vmem:[%s210 + $0x348] sm:$0xff]
        %v864 = vld [vmem:[%s210 + $0x350] sm:$0xff]
        %v865 = vld [vmem:[%s210 + $0x358] sm:$0xff]
        %v866 = vld [vmem:[%s210 + $0x360] sm:$0xff]
        %v867 = vld [vmem:[%s210 + $0x368] sm:$0xff]
        %v868 = vld [vmem:[%s210 + $0x370] sm:$0xff]
        %v869 = vld [vmem:[%s210 + $0x378] sm:$0xff]
        %v870 = vld [vmem:[%s210 + $0x380] sm:$0xff]
        %v871 = vld [vmem:[%s210 + $0x388] sm:$0xff]
        %v872 = vld [vmem:[%s210 + $0x390] sm:$0xff]
        %v873 = vld [vmem:[%s210 + $0x398] sm:$0xff]
        %v874 = vld [vmem:[%s210 + $0x3a0] sm:$0xff]
        %v875 = vld [vmem:[%s210 + $0x3a8] sm:$0xff]
        %v876 = vld [vmem:[%s210 + $0x3b0] sm:$0xff]
        %v877 = vld [vmem:[%s210 + $0x3b8] sm:$0xff]
        %v878 = vld [vmem:[%s210 + $0x3c0] sm:$0xff]
        %v879 = vld [vmem:[%s210 + $0x3c8] sm:$0xff]
        %v880 = vld [vmem:[%s210 + $0x3d0] sm:$0xff]
        %v881 = vld [vmem:[%s210 + $0x3d8] sm:$0xff]
        %v882 = vld [vmem:[%s210 + $0x3e0] sm:$0xff]
        %v883 = vld [vmem:[%s210 + $0x3e8] sm:$0xff]
        %v884 = vld [vmem:[%s210 + $0x3f0] sm:$0xff]
        %v885 = vld [vmem:[%s210 + $0x3f8] sm:$0xff]
        %v886 = vld [vmem:[%s210 + $0x400] sm:$0xff]
        %v887 = vld [vmem:[%s210 + $0x408] sm:$0xff]
        %v888 = vld [vmem:[%s210 + $0x410] sm:$0xff]
        %v889 = vld [vmem:[%s210 + $0x418] sm:$0xff]
        %v890 = vld [vmem:[%s210 + $0x420] sm:$0xff]
        %v891 = vld [vmem:[%s210 + $0x428] sm:$0xff]
        %v892 = vld [vmem:[%s210 + $0x430] sm:$0xff]
        %v893 = vld [vmem:[%s210 + $0x438] sm:$0xff]
        %v894 = vld [vmem:[%s210 + $0x440] sm:$0xff]
        %v895 = vld [vmem:[%s210 + $0x448] sm:$0xff]
        %v896 = vld [vmem:[%s210 + $0x450] sm:$0xff]
        %v897 = vld [vmem:[%s210 + $0x458] sm:$0xff]
        %v898 = vld [vmem:[%s210 + $0x460] sm:$0xff]
        %v899 = vld [vmem:[%s210 + $0x468] sm:$0xff]
        %v900 = vld [vmem:[%s210 + $0x470] sm:$0xff]
        %v901 = vld [vmem:[%s210 + $0x478] sm:$0xff]
        %v902 = vld [vmem:[%s210 + $0x480] sm:$0xff]
        %v903 = vld [vmem:[%s210 + $0x488] sm:$0xff]
        %v904 = vld [vmem:[%s210 + $0x490] sm:$0xff]
        %v905 = vld [vmem:[%s210 + $0x498] sm:$0xff]
        %v906 = vld [vmem:[%s210 + $0x4a0] sm:$0xff]
        %v907 = vld [vmem:[%s210 + $0x4a8] sm:$0xff]
        %v908 = vld [vmem:[%s210 + $0x4b0] sm:$0xff]
        %v909 = vld [vmem:[%s210 + $0x4b8] sm:$0xff]
        %v910 = vld [vmem:[%s210 + $0x4c0] sm:$0xff]
        %v911 = vld [vmem:[%s210 + $0x4c8] sm:$0xff]
        %v912 = vld [vmem:[%s210 + $0x4d0] sm:$0xff]
        %v913 = vld [vmem:[%s210 + $0x4d8] sm:$0xff]
        %v914 = vld [vmem:[%s210 + $0x4e0] sm:$0xff]
        %v915 = vld [vmem:[%s210 + $0x4e8] sm:$0xff]
        %v916 = vld [vmem:[%s210 + $0x4f0] sm:$0xff]
        %v917 = vld [vmem:[%s210 + $0x4f8] sm:$0xff]
        %v918 = vld [vmem:[%s210 + $0x500] sm:$0xff]
        %v919 = vld [vmem:[%s210 + $0x508] sm:$0xff]
        %v920 = vld [vmem:[%s210 + $0x510] sm:$0xff]
        %v921 = vld [vmem:[%s210 + $0x518] sm:$0xff]
        %v922 = vld [vmem:[%s210 + $0x520] sm:$0xff]
        %v923 = vld [vmem:[%s210 + $0x528] sm:$0xff]
        %v924 = vld [vmem:[%s210 + $0x530] sm:$0xff]
        %v925 = vld [vmem:[%s210 + $0x538] sm:$0xff]
        %v926 = vld [vmem:[%s210 + $0x540] sm:$0xff]
        %v927 = vld [vmem:[%s210 + $0x548] sm:$0xff]
        %v928 = vld [vmem:[%s210 + $0x550] sm:$0xff]
        %v929 = vld [vmem:[%s210 + $0x558] sm:$0xff]
        %v930 = vld [vmem:[%s210 + $0x560] sm:$0xff]
        %v931 = vld [vmem:[%s210 + $0x568] sm:$0xff]
        %v932 = vld [vmem:[%s210 + $0x570] sm:$0xff]
        %v933 = vld [vmem:[%s210 + $0x578] sm:$0xff]
        %v934 = vld [vmem:[%s210 + $0x580] sm:$0xff]
        %v935 = vld [vmem:[%s210 + $0x588] sm:$0xff]
        %v936 = vld [vmem:[%s210 + $0x590] sm:$0xff]
        %v937 = vld [vmem:[%s210 + $0x598] sm:$0xff]
        %v938 = vld [vmem:[%s210 + $0x5a0] sm:$0xff]
        %v939 = vld [vmem:[%s210 + $0x5a8] sm:$0xff]
        %v940 = vld [vmem:[%s210 + $0x5b0] sm:$0xff]
        %v941 = vld [vmem:[%s210 + $0x5b8] sm:$0xff]
        %v942 = vld [vmem:[%s210 + $0x5c0] sm:$0xff]
        %v943 = vld [vmem:[%s210 + $0x5c8] sm:$0xff]
        %v944 = vld [vmem:[%s210 + $0x5d0] sm:$0xff]
        %v945 = vld [vmem:[%s210 + $0x5d8] sm:$0xff]
        %v946 = vld [vmem:[%s210 + $0x5e0] sm:$0xff]
        %v947 = vld [vmem:[%s210 + $0x5e8] sm:$0xff]
        %v948 = vld [vmem:[%s210 + $0x5f0] sm:$0xff]
        %v949 = vld [vmem:[%s210 + $0x5f8] sm:$0xff]
        %v950 = vld [vmem:[%s210 + $0x600] sm:$0xff]
        %v951 = vld [vmem:[%s210 + $0x608] sm:$0xff]
        %v952 = vld [vmem:[%s210 + $0x610] sm:$0xff]
        %v953 = vld [vmem:[%s210 + $0x618] sm:$0xff]
        %v954 = vld [vmem:[%s210 + $0x620] sm:$0xff]
        %v955 = vld [vmem:[%s210 + $0x628] sm:$0xff]
        %v956 = vld [vmem:[%s210 + $0x630] sm:$0xff]
        %v957 = vld [vmem:[%s210 + $0x638] sm:$0xff]
        %v958 = vld [vmem:[%s210 + $0x640] sm:$0xff]
        %v959 = vld [vmem:[%s210 + $0x648] sm:$0xff]
        %v960 = vld [vmem:[%s210 + $0x650] sm:$0xff]
        %v961 = vld [vmem:[%s210 + $0x658] sm:$0xff]
        %v962 = vld [vmem:[%s210 + $0x660] sm:$0xff]
        %v963 = vld [vmem:[%s210 + $0x668] sm:$0xff]
        %v964 = vld [vmem:[%s210 + $0x670] sm:$0xff]
        %v965 = vld [vmem:[%s210 + $0x678] sm:$0xff]
        %v966 = vld [vmem:[%s210 + $0x680] sm:$0xff]
        %v967 = vld [vmem:[%s210 + $0x688] sm:$0xff]
        %v968 = vld [vmem:[%s210 + $0x690] sm:$0xff]
        %v969 = vld [vmem:[%s210 + $0x698] sm:$0xff]
        %v970 = vld [vmem:[%s210 + $0x6a0] sm:$0xff]
        %v971 = vld [vmem:[%s210 + $0x6a8] sm:$0xff]
        %v972 = vld [vmem:[%s210 + $0x6b0] sm:$0xff]
        %v973 = vld [vmem:[%s210 + $0x6b8] sm:$0xff]
        %v974 = vld [vmem:[%s210 + $0x6c0] sm:$0xff]
        %v975 = vld [vmem:[%s210 + $0x6c8] sm:$0xff]
        %v976 = vld [vmem:[%s210 + $0x6d0] sm:$0xff]
        %v977 = vld [vmem:[%s210 + $0x6d8] sm:$0xff]
        %v978 = vld [vmem:[%s210 + $0x6e0] sm:$0xff]
        %v979 = vld [vmem:[%s210 + $0x6e8] sm:$0xff]
        %v980 = vld [vmem:[%s210 + $0x6f0] sm:$0xff]
        %v981 = vld [vmem:[%s210 + $0x6f8] sm:$0xff]
        %v982 = vld [vmem:[%s210 + $0x700] sm:$0xff]
        %v983 = vld [vmem:[%s210 + $0x708] sm:$0xff]
        %v984 = vld [vmem:[%s210 + $0x710] sm:$0xff]
        %v985 = vld [vmem:[%s210 + $0x718] sm:$0xff]
        %v986 = vld [vmem:[%s210 + $0x720] sm:$0xff]
        %v987 = vld [vmem:[%s210 + $0x728] sm:$0xff]
        %v988 = vld [vmem:[%s210 + $0x730] sm:$0xff]
        %v989 = vld [vmem:[%s210 + $0x738] sm:$0xff]
        %v990 = vld [vmem:[%s210 + $0x740] sm:$0xff]
        %v991 = vld [vmem:[%s210 + $0x748] sm:$0xff]
        %v992 = vld [vmem:[%s210 + $0x750] sm:$0xff]
        %v993 = vld [vmem:[%s210 + $0x758] sm:$0xff]
        %v994 = vld [vmem:[%s210 + $0x760] sm:$0xff]
        %v995 = vld [vmem:[%s210 + $0x768] sm:$0xff]
        %v996 = vld [vmem:[%s210 + $0x770] sm:$0xff]
        %v997 = vld [vmem:[%s210 + $0x778] sm:$0xff]
        %v998 = vld [vmem:[%s210 + $0x780] sm:$0xff]
        %v999 = vld [vmem:[%s210 + $0x788] sm:$0xff]
        %v1000 = vld [vmem:[%s210 + $0x790] sm:$0xff]
        %v1001 = vld [vmem:[%s210 + $0x798] sm:$0xff]
        %v1002 = vld [vmem:[%s210 + $0x7a0] sm:$0xff]
        %v1003 = vld [vmem:[%s210 + $0x7a8] sm:$0xff]
        %v1004 = vld [vmem:[%s210 + $0x7b0] sm:$0xff]
        %v1005 = vld [vmem:[%s210 + $0x7b8] sm:$0xff]
        %v1006 = vld [vmem:[%s210 + $0x7c0] sm:$0xff]
        %v1007 = vld [vmem:[%s210 + $0x7c8] sm:$0xff]
        %v1008 = vld [vmem:[%s210 + $0x7d0] sm:$0xff]
        %v1009 = vld [vmem:[%s210 + $0x7d8] sm:$0xff]
        %v1010 = vld [vmem:[%s210 + $0x7e0] sm:$0xff]
        %v1011 = vld [vmem:[%s210 + $0x7e8] sm:$0xff]
        %v1012 = vld [vmem:[%s210 + $0x7f0] sm:$0xff]
        %v1013 = vld [vmem:[%s210 + $0x7f8] sm:$0xff]
        %v1014 = vld [vmem:[%s210 + $0x800] sm:$0xff]
        %v1015 = vld [vmem:[%s210 + $0x808] sm:$0xff]
        %v1016 = vld [vmem:[%s210 + $0x810] sm:$0xff]
        %v1017 = vld [vmem:[%s210 + $0x818] sm:$0xff]
        %v1018 = vld [vmem:[%s210 + $0x820] sm:$0xff]
        %v1019 = vld [vmem:[%s210 + $0x828] sm:$0xff]
        %v1020 = vld [vmem:[%s210 + $0x830] sm:$0xff]
        %v1021 = vld [vmem:[%s210 + $0x838] sm:$0xff]
        %v1022 = vld [vmem:[%s210 + $0x840] sm:$0xff]
        %v1023 = vld [vmem:[%s210 + $0x848] sm:$0xff]
        %v1024 = vld [vmem:[%s210 + $0x850] sm:$0xff]
        %v1025 = vld [vmem:[%s210 + $0x858] sm:$0xff]
        %v1026 = vld [vmem:[%s210 + $0x860] sm:$0xff]
        %v1027 = vld [vmem:[%s210 + $0x868] sm:$0xff]
        %v1028 = vld [vmem:[%s210 + $0x870] sm:$0xff]
        %v1029 = vld [vmem:[%s210 + $0x878] sm:$0xff]
        %v1030 = vld [vmem:[%s210 + $0x880] sm:$0xff]
        %v1031 = vld [vmem:[%s210 + $0x888] sm:$0xff]
        %v1032 = vld [vmem:[%s210 + $0x890] sm:$0xff]
        %v1033 = vld [vmem:[%s210 + $0x898] sm:$0xff]
        %v1034 = vld [vmem:[%s210 + $0x8a0] sm:$0xff]
        %v1035 = vld [vmem:[%s210 + $0x8a8] sm:$0xff]
        %v1036 = vld [vmem:[%s210 + $0x8b0] sm:$0xff]
        %v1037 = vld [vmem:[%s210 + $0x8b8] sm:$0xff]
        %v1038 = vld [vmem:[%s210 + $0x8c0] sm:$0xff]
        %v1039 = vld [vmem:[%s210 + $0x8c8] sm:$0xff]
        %v1040 = vld [vmem:[%s210 + $0x8d0] sm:$0xff]
        %v1041 = vld [vmem:[%s210 + $0x8d8] sm:$0xff]
        %v1042 = vld [vmem:[%s210 + $0x8e0] sm:$0xff]
        %v1043 = vld [vmem:[%s210 + $0x8e8] sm:$0xff]
        %v1044 = vld [vmem:[%s210 + $0x8f0] sm:$0xff]
        %v1045 = vld [vmem:[%s210 + $0x8f8] sm:$0xff]
        %v1046 = vld [vmem:[%s210 + $0x900] sm:$0xff]
        %v1047 = vld [vmem:[%s210 + $0x908] sm:$0xff]
        %v1048 = vld [vmem:[%s210 + $0x910] sm:$0xff]
        %v1049 = vld [vmem:[%s210 + $0x918] sm:$0xff]
        %v1050 = vld [vmem:[%s210 + $0x920] sm:$0xff]
        %v1051 = vld [vmem:[%s210 + $0x928] sm:$0xff]
        %v1052 = vld [vmem:[%s210 + $0x930] sm:$0xff]
        %v1053 = vld [vmem:[%s210 + $0x938] sm:$0xff]
        %v1054 = vld [vmem:[%s210 + $0x940] sm:$0xff]
        %v1055 = vld [vmem:[%s210 + $0x948] sm:$0xff]
        %v1056 = vld [vmem:[%s210 + $0x950] sm:$0xff]
        %v1057 = vld [vmem:[%s210 + $0x958] sm:$0xff]
        %v1058 = vld [vmem:[%s210 + $0x960] sm:$0xff]
        %v1059 = vld [vmem:[%s210 + $0x968] sm:$0xff]
        %v1060 = vld [vmem:[%s210 + $0x970] sm:$0xff]
        %v1061 = vld [vmem:[%s210 + $0x978] sm:$0xff]
        %v1062 = vld [vmem:[%s210 + $0x980] sm:$0xff]
        %v1063 = vld [vmem:[%s210 + $0x988] sm:$0xff]
        %v1064 = vld [vmem:[%s210 + $0x990] sm:$0xff]
        %v1065 = vld [vmem:[%s210 + $0x998] sm:$0xff]
        %v1066 = vld [vmem:[%s210 + $0x9a0] sm:$0xff]
        %v1067 = vld [vmem:[%s210 + $0x9a8] sm:$0xff]
        %v1068 = vld [vmem:[%s210 + $0x9b0] sm:$0xff]
        %v1069 = vld [vmem:[%s210 + $0x9b8] sm:$0xff]
        %v1070 = vld [vmem:[%s210 + $0x9c0] sm:$0xff]
        %v1071 = vld [vmem:[%s210 + $0x9c8] sm:$0xff]
        %v1072 = vld [vmem:[%s210 + $0x9d0] sm:$0xff]
        %v1073 = vld [vmem:[%s210 + $0x9d8] sm:$0xff]
        %v1074 = vld [vmem:[%s210 + $0x9e0] sm:$0xff]
        %v1075 = vld [vmem:[%s210 + $0x9e8] sm:$0xff]
        %v1076 = vld [vmem:[%s210 + $0x9f0] sm:$0xff]
        %v1077 = vld [vmem:[%s210 + $0x9f8] sm:$0xff]
        %v1078 = vld [vmem:[%s210 + $0xa00] sm:$0xff]
        %v1079 = vld [vmem:[%s210 + $0xa08] sm:$0xff]
        %v1080 = vld [vmem:[%s210 + $0xa10] sm:$0xff]
        %v1081 = vld [vmem:[%s210 + $0xa18] sm:$0xff]
        %v1082 = vld [vmem:[%s210 + $0xa20] sm:$0xff]
        %v1083 = vld [vmem:[%s210 + $0xa28] sm:$0xff]
        %v1084 = vld [vmem:[%s210 + $0xa30] sm:$0xff]
        %v1085 = vld [vmem:[%s210 + $0xa38] sm:$0xff]
        %v1086 = vld [vmem:[%s210 + $0xa40] sm:$0xff]
        %v1087 = vld [vmem:[%s210 + $0xa48] sm:$0xff]
        %v1088 = vld [vmem:[%s210 + $0xa50] sm:$0xff]
        %v1089 = vld [vmem:[%s210 + $0xa58] sm:$0xff]
        %v1090 = vld [vmem:[%s210 + $0xa60] sm:$0xff]
        %v1091 = vld [vmem:[%s210 + $0xa68] sm:$0xff]
        %v1092 = vld [vmem:[%s210 + $0xa70] sm:$0xff]
        %v1093 = vld [vmem:[%s210 + $0xa78] sm:$0xff]
        %v1094 = vld [vmem:[%s210 + $0xa80] sm:$0xff]
        %v1095 = vld [vmem:[%s210 + $0xa88] sm:$0xff]
        %v1096 = vld [vmem:[%s210 + $0xa90] sm:$0xff]
        %v1097 = vld [vmem:[%s210 + $0xa98] sm:$0xff]
        %v1098 = vld [vmem:[%s210 + $0xaa0] sm:$0xff]
        %v1099 = vld [vmem:[%s210 + $0xaa8] sm:$0xff]
        %v1100 = vld [vmem:[%s210 + $0xab0] sm:$0xff]
        %v1101 = vld [vmem:[%s210 + $0xab8] sm:$0xff]
        %v1102 = vld [vmem:[%s210 + $0xac0] sm:$0xff]
        %v1103 = vld [vmem:[%s210 + $0xac8] sm:$0xff]
        %v1104 = vld [vmem:[%s210 + $0xad0] sm:$0xff]
        %v1105 = vld [vmem:[%s210 + $0xad8] sm:$0xff]
        %v1106 = vld [vmem:[%s210 + $0xae0] sm:$0xff]
        %v1107 = vld [vmem:[%s210 + $0xae8] sm:$0xff]
        %v1108 = vld [vmem:[%s210 + $0xaf0] sm:$0xff]
        %v1109 = vld [vmem:[%s210 + $0xaf8] sm:$0xff]
        %v1110 = vld [vmem:[%s210 + $0xb00] sm:$0xff]
        %v1111 = vld [vmem:[%s210 + $0xb08] sm:$0xff]
        %v1112 = vld [vmem:[%s210 + $0xb10] sm:$0xff]
        %v1113 = vld [vmem:[%s210 + $0xb18] sm:$0xff]
        %v1114 = vld [vmem:[%s210 + $0xb20] sm:$0xff]
        %v1115 = vld [vmem:[%s210 + $0xb28] sm:$0xff]
        %v1116 = vld [vmem:[%s210 + $0xb30] sm:$0xff]
        %v1117 = vld [vmem:[%s210 + $0xb38] sm:$0xff]
        %v1118 = vld [vmem:[%s210 + $0xb40] sm:$0xff]
        %v1119 = vld [vmem:[%s210 + $0xb48] sm:$0xff]
        %v1120 = vld [vmem:[%s210 + $0xb50] sm:$0xff]
        %v1121 = vld [vmem:[%s210 + $0xb58] sm:$0xff]
        %v1122 = vld [vmem:[%s210 + $0xb60] sm:$0xff]
        %v1123 = vld [vmem:[%s210 + $0xb68] sm:$0xff]
        %v1124 = vld [vmem:[%s210 + $0xb70] sm:$0xff]
        %v1125 = vld [vmem:[%s210 + $0xb78] sm:$0xff]
        %v1126 = vld [vmem:[%s210 + $0xb80] sm:$0xff]
        %v1127 = vld [vmem:[%s210 + $0xb88] sm:$0xff]
        %v1128 = vld [vmem:[%s210 + $0xb90] sm:$0xff]
        %v1129 = vld [vmem:[%s210 + $0xb98] sm:$0xff]
        %v1130 = vld [vmem:[%s210 + $0xba0] sm:$0xff]
        %v1131 = vld [vmem:[%s210 + $0xba8] sm:$0xff]
        %v1132 = vld [vmem:[%s210 + $0xbb0] sm:$0xff]
        %v1133 = vld [vmem:[%s210 + $0xbb8] sm:$0xff]
        %v1134 = vld [vmem:[%s210 + $0xbc0] sm:$0xff]
        %v1135 = vld [vmem:[%s210 + $0xbc8] sm:$0xff]
        %v1136 = vld [vmem:[%s210 + $0xbd0] sm:$0xff]
        %v1137 = vld [vmem:[%s210 + $0xbd8] sm:$0xff]
        %v1138 = vld [vmem:[%s210 + $0xbe0] sm:$0xff]
        %v1139 = vld [vmem:[%s210 + $0xbe8] sm:$0xff]
        %v1140 = vld [vmem:[%s210 + $0xbf0] sm:$0xff]
        %v1141 = vld [vmem:[%s210 + $0xbf8] sm:$0xff]
        %v1142 = vld [vmem:[%s210 + $0xc00] sm:$0xff]
        %v1143 = vld [vmem:[%s210 + $0xc08] sm:$0xff]
        %v1144 = vld [vmem:[%s210 + $0xc10] sm:$0xff]
        %v1145 = vld [vmem:[%s210 + $0xc18] sm:$0xff]
        %v1146 = vld [vmem:[%s210 + $0xc20] sm:$0xff]
        %v1147 = vld [vmem:[%s210 + $0xc28] sm:$0xff]
        %v1148 = vld [vmem:[%s210 + $0xc30] sm:$0xff]
        %v1149 = vld [vmem:[%s210 + $0xc38] sm:$0xff]
        %v1150 = vld [vmem:[%s210 + $0xc40] sm:$0xff]
        %v1151 = vld [vmem:[%s210 + $0xc48] sm:$0xff]
        %v1152 = vld [vmem:[%s210 + $0xc50] sm:$0xff]
        %v1153 = vld [vmem:[%s210 + $0xc58] sm:$0xff]
        %v1154 = vld [vmem:[%s210 + $0xc60] sm:$0xff]
        %v1155 = vld [vmem:[%s210 + $0xc68] sm:$0xff]
        %v1156 = vld [vmem:[%s210 + $0xc70] sm:$0xff]
        %v1157 = vld [vmem:[%s210 + $0xc78] sm:$0xff]
        %v1158 = vld [vmem:[%s210 + $0xc80] sm:$0xff]
        %v1159 = vld [vmem:[%s210 + $0xc88] sm:$0xff]
        %v1160 = vld [vmem:[%s210 + $0xc90] sm:$0xff]
        %v1161 = vld [vmem:[%s210 + $0xc98] sm:$0xff]
        %v1162 = vld [vmem:[%s210 + $0xca0] sm:$0xff]
        %v1163 = vld [vmem:[%s210 + $0xca8] sm:$0xff]
        %v1164 = vld [vmem:[%s210 + $0xcb0] sm:$0xff]
        %v1165 = vld [vmem:[%s210 + $0xcb8] sm:$0xff]
        %v1166 = vld [vmem:[%s210 + $0xcc0] sm:$0xff]
        %v1167 = vld [vmem:[%s210 + $0xcc8] sm:$0xff]
        %v1168 = vld [vmem:[%s210 + $0xcd0] sm:$0xff]
        %v1169 = vld [vmem:[%s210 + $0xcd8] sm:$0xff]
        %v1170 = vld [vmem:[%s210 + $0xce0] sm:$0xff]
        %v1171 = vld [vmem:[%s210 + $0xce8] sm:$0xff]
        %v1172 = vld [vmem:[%s210 + $0xcf0] sm:$0xff]
        %v1173 = vld [vmem:[%s210 + $0xcf8] sm:$0xff]
        %v1174 = vld [vmem:[%s210 + $0xd00] sm:$0xff]
        %v1175 = vld [vmem:[%s210 + $0xd08] sm:$0xff]
        %v1176 = vld [vmem:[%s210 + $0xd10] sm:$0xff]
        %v1177 = vld [vmem:[%s210 + $0xd18] sm:$0xff]
        %v1178 = vld [vmem:[%s210 + $0xd20] sm:$0xff]
        %v1179 = vld [vmem:[%s210 + $0xd28] sm:$0xff]
        %v1180 = vld [vmem:[%s210 + $0xd30] sm:$0xff]
        %v1181 = vld [vmem:[%s210 + $0xd38] sm:$0xff]
        %v1182 = vld [vmem:[%s210 + $0xd40] sm:$0xff]
        %v1183 = vld [vmem:[%s210 + $0xd48] sm:$0xff]
        %v1184 = vld [vmem:[%s210 + $0xd50] sm:$0xff]
        %v1185 = vld [vmem:[%s210 + $0xd58] sm:$0xff]
        %v1186 = vld [vmem:[%s210 + $0xd60] sm:$0xff]
        %v1187 = vld [vmem:[%s210 + $0xd68] sm:$0xff]
        %v1188 = vld [vmem:[%s210 + $0xd70] sm:$0xff]
        %v1189 = vld [vmem:[%s210 + $0xd78] sm:$0xff]
        %v1190 = vld [vmem:[%s210 + $0xd80] sm:$0xff]
        %v1191 = vld [vmem:[%s210 + $0xd88] sm:$0xff]
        %v1192 = vld [vmem:[%s210 + $0xd90] sm:$0xff]
        %v1193 = vld [vmem:[%s210 + $0xd98] sm:$0xff]
        %v1194 = vld [vmem:[%s210 + $0xda0] sm:$0xff]
        %v1195 = vld [vmem:[%s210 + $0xda8] sm:$0xff]
        %v1196 = vld [vmem:[%s210 + $0xdb0] sm:$0xff]
        %v1197 = vld [vmem:[%s210 + $0xdb8] sm:$0xff]
        %v1198 = vld [vmem:[%s210 + $0xdc0] sm:$0xff]
        %v1199 = vld [vmem:[%s210 + $0xdc8] sm:$0xff]
        %v1200 = vld [vmem:[%s210 + $0xdd0] sm:$0xff]
        %v1201 = vld [vmem:[%s210 + $0xdd8] sm:$0xff]
        %v1202 = vld [vmem:[%s210 + $0xde0] sm:$0xff]
        %v1203 = vld [vmem:[%s210 + $0xde8] sm:$0xff]
        %v1204 = vld [vmem:[%s210 + $0xdf0] sm:$0xff]
        %v1205 = vld [vmem:[%s210 + $0xdf8] sm:$0xff]
        %v1206 = vld [vmem:[%s210 + $0xe00] sm:$0xff]
        %v1207 = vld [vmem:[%s210 + $0xe08] sm:$0xff]
        %v1208 = vld [vmem:[%s210 + $0xe10] sm:$0xff]
        %v1209 = vld [vmem:[%s210 + $0xe18] sm:$0xff]
        %v1210 = vld [vmem:[%s210 + $0xe20] sm:$0xff]
        %v1211 = vld [vmem:[%s210 + $0xe28] sm:$0xff]
        %v1212 = vld [vmem:[%s210 + $0xe30] sm:$0xff]
        %v1213 = vld [vmem:[%s210 + $0xe38] sm:$0xff]
        %v1214 = vld [vmem:[%s210 + $0xe40] sm:$0xff]
        %v1215 = vld [vmem:[%s210 + $0xe48] sm:$0xff]
        %v1216 = vld [vmem:[%s210 + $0xe50] sm:$0xff]
        %v1217 = vld [vmem:[%s210 + $0xe58] sm:$0xff]
        %v1218 = vld [vmem:[%s210 + $0xe60] sm:$0xff]
        %v1219 = vld [vmem:[%s210 + $0xe68] sm:$0xff]
        %v1220 = vld [vmem:[%s210 + $0xe70] sm:$0xff]
        %v1221 = vld [vmem:[%s210 + $0xe78] sm:$0xff]
        %v1222 = vld [vmem:[%s210 + $0xe80] sm:$0xff]
        %v1223 = vld [vmem:[%s210 + $0xe88] sm:$0xff]
        %v1224 = vld [vmem:[%s210 + $0xe90] sm:$0xff]
        %v1225 = vld [vmem:[%s210 + $0xe98] sm:$0xff]
        %v1226 = vld [vmem:[%s210 + $0xea0] sm:$0xff]
        %v1227 = vld [vmem:[%s210 + $0xea8] sm:$0xff]
        %v1228 = vld [vmem:[%s210 + $0xeb0] sm:$0xff]
        %v1229 = vld [vmem:[%s210 + $0xeb8] sm:$0xff]
        %v1230 = vld [vmem:[%s210 + $0xec0] sm:$0xff]
        %v1231 = vld [vmem:[%s210 + $0xec8] sm:$0xff]
        %v1232 = vld [vmem:[%s210 + $0xed0] sm:$0xff]
        %v1233 = vld [vmem:[%s210 + $0xed8] sm:$0xff]
        %v1234 = vld [vmem:[%s210 + $0xee0] sm:$0xff]
        %v1235 = vld [vmem:[%s210 + $0xee8] sm:$0xff]
        %v1236 = vld [vmem:[%s210 + $0xef0] sm:$0xff]
        %v1237 = vld [vmem:[%s210 + $0xef8] sm:$0xff]
        %v1238 = vld [vmem:[%s210 + $0xf00] sm:$0xff]
        %v1239 = vld [vmem:[%s210 + $0xf08] sm:$0xff]
        %v1240 = vld [vmem:[%s210 + $0xf10] sm:$0xff]
        %v1241 = vld [vmem:[%s210 + $0xf18] sm:$0xff]
        %v1242 = vld [vmem:[%s210 + $0xf20] sm:$0xff]
        %v1243 = vld [vmem:[%s210 + $0xf28] sm:$0xff]
        %v1244 = vld [vmem:[%s210 + $0xf30] sm:$0xff]
        %v1245 = vld [vmem:[%s210 + $0xf38] sm:$0xff]
        %v1246 = vld [vmem:[%s210 + $0xf40] sm:$0xff]
        %v1247 = vld [vmem:[%s210 + $0xf48] sm:$0xff]
        %v1248 = vld [vmem:[%s210 + $0xf50] sm:$0xff]
        %v1249 = vld [vmem:[%s210 + $0xf58] sm:$0xff]
        %v1250 = vld [vmem:[%s210 + $0xf60] sm:$0xff]
        %v1251 = vld [vmem:[%s210 + $0xf68] sm:$0xff]
        %v1252 = vld [vmem:[%s210 + $0xf70] sm:$0xff]
        %v1253 = vld [vmem:[%s210 + $0xf78] sm:$0xff]
        %v1254 = vld [vmem:[%s210 + $0xf80] sm:$0xff]
        %v1255 = vld [vmem:[%s210 + $0xf88] sm:$0xff]
        %v1256 = vld [vmem:[%s210 + $0xf90] sm:$0xff]
        %v1257 = vld [vmem:[%s210 + $0xf98] sm:$0xff]
        %v1258 = vld [vmem:[%s210 + $0xfa0] sm:$0xff]
        %v1259 = vld [vmem:[%s210 + $0xfa8] sm:$0xff]
        %v1260 = vld [vmem:[%s210 + $0xfb0] sm:$0xff]
        %v1261 = vld [vmem:[%s210 + $0xfb8] sm:$0xff]
        %v1262 = vld [vmem:[%s210 + $0xfc0] sm:$0xff]
        %v1263 = vld [vmem:[%s210 + $0xfc8] sm:$0xff]
        %v1264 = vld [vmem:[%s210 + $0xfd0] sm:$0xff]
        %v1265 = vld [vmem:[%s210 + $0xfd8] sm:$0xff]
        %v1266 = vld [vmem:[%s210 + $0xfe0] sm:$0xff]
        %v1267 = vld [vmem:[%s210 + $0xfe8] sm:$0xff]
        %v1268 = vld [vmem:[%s210 + $0xff0] sm:$0xff]
        %v1269 = vld [vmem:[%s210 + $0xff8] sm:$0xff]
        %v1270 = vsub.f32 %v246, %v758
        %v1271 = vsub.f32 %v247, %v759
        %v1272 = vsub.f32 %v248, %v760
        %v1273 = vsub.f32 %v249, %v761
        %v1274 = vsub.f32 %v250, %v762
        %v1275 = vsub.f32 %v251, %v763
        %v1276 = vsub.f32 %v252, %v764
        %v1277 = vsub.f32 %v253, %v765
        %v1278 = vsub.f32 %v254, %v766
        %v1279 = vsub.f32 %v255, %v767
        %v1280 = vsub.f32 %v256, %v768
        %v1281 = vsub.f32 %v257, %v769
        %v1282 = vsub.f32 %v258, %v770
        %v1283 = vsub.f32 %v259, %v771
        %v1284 = vsub.f32 %v260, %v772
        %v1285 = vsub.f32 %v261, %v773
        %v1286 = vsub.f32 %v262, %v774
        %v1287 = vsub.f32 %v263, %v775
        %v1288 = vsub.f32 %v264, %v776
        %v1289 = vsub.f32 %v265, %v777
        %v1290 = vsub.f32 %v266, %v778
        %v1291 = vsub.f32 %v267, %v779
        %v1292 = vsub.f32 %v268, %v780
        %v1293 = vsub.f32 %v269, %v781
        %v1294 = vsub.f32 %v270, %v782
        %v1295 = vsub.f32 %v271, %v783
        %v1296 = vsub.f32 %v272, %v784
        %v1297 = vsub.f32 %v273, %v785
        %v1298 = vsub.f32 %v274, %v786
        %v1299 = vsub.f32 %v275, %v787
        %v1300 = vsub.f32 %v276, %v788
        %v1301 = vsub.f32 %v277, %v789
        %v1302 = vsub.f32 %v278, %v790
        %v1303 = vsub.f32 %v279, %v791
        %v1304 = vsub.f32 %v280, %v792
        %v1305 = vsub.f32 %v281, %v793
        %v1306 = vsub.f32 %v282, %v794
        %v1307 = vsub.f32 %v283, %v795
        %v1308 = vsub.f32 %v284, %v796
        %v1309 = vsub.f32 %v285, %v797
        %v1310 = vsub.f32 %v286, %v798
        %v1311 = vsub.f32 %v287, %v799
        %v1312 = vsub.f32 %v288, %v800
        %v1313 = vsub.f32 %v289, %v801
        %v1314 = vsub.f32 %v290, %v802
        %v1315 = vsub.f32 %v291, %v803
        %v1316 = vsub.f32 %v292, %v804
        %v1317 = vsub.f32 %v293, %v805
        %v1318 = vsub.f32 %v294, %v806
        %v1319 = vsub.f32 %v295, %v807
        %v1320 = vsub.f32 %v296, %v808
        %v1321 = vsub.f32 %v297, %v809
        %v1322 = vsub.f32 %v298, %v810
        %v1323 = vsub.f32 %v299, %v811
        %v1324 = vsub.f32 %v300, %v812
        %v1325 = vsub.f32 %v301, %v813
        %v1326 = vsub.f32 %v302, %v814
        %v1327 = vsub.f32 %v303, %v815
        %v1328 = vsub.f32 %v304, %v816
        %v1329 = vsub.f32 %v305, %v817
        %v1330 = vsub.f32 %v306, %v818
        %v1331 = vsub.f32 %v307, %v819
        %v1332 = vsub.f32 %v308, %v820
        %v1333 = vsub.f32 %v309, %v821
        %v1334 = vsub.f32 %v310, %v822
        %v1335 = vsub.f32 %v311, %v823
        %v1336 = vsub.f32 %v312, %v824
        %v1337 = vsub.f32 %v313, %v825
        %v1338 = vsub.f32 %v314, %v826
        %v1339 = vsub.f32 %v315, %v827
        %v1340 = vsub.f32 %v316, %v828
        %v1341 = vsub.f32 %v317, %v829
        %v1342 = vsub.f32 %v318, %v830
        %v1343 = vsub.f32 %v319, %v831
        %v1344 = vsub.f32 %v320, %v832
        %v1345 = vsub.f32 %v321, %v833
        %v1346 = vsub.f32 %v322, %v834
        %v1347 = vsub.f32 %v323, %v835
        %v1348 = vsub.f32 %v324, %v836
        %v1349 = vsub.f32 %v325, %v837
        %v1350 = vsub.f32 %v326, %v838
        %v1351 = vsub.f32 %v327, %v839
        %v1352 = vsub.f32 %v328, %v840
        %v1353 = vsub.f32 %v329, %v841
        %v1354 = vsub.f32 %v330, %v842
        %v1355 = vsub.f32 %v331, %v843
        %v1356 = vsub.f32 %v332, %v844
        %v1357 = vsub.f32 %v333, %v845
        %v1358 = vsub.f32 %v334, %v846
        %v1359 = vsub.f32 %v335, %v847
        %v1360 = vsub.f32 %v336, %v848
        %v1361 = vsub.f32 %v337, %v849
        %v1362 = vsub.f32 %v338, %v850
        %v1363 = vsub.f32 %v339, %v851
        %v1364 = vsub.f32 %v340, %v852
        %v1365 = vsub.f32 %v341, %v853
        %v1366 = vsub.f32 %v342, %v854
        %v1367 = vsub.f32 %v343, %v855
        %v1368 = vsub.f32 %v344, %v856
        %v1369 = vsub.f32 %v345, %v857
        %v1370 = vsub.f32 %v346, %v858
        %v1371 = vsub.f32 %v347, %v859
        %v1372 = vsub.f32 %v348, %v860
        %v1373 = vsub.f32 %v349, %v861
        %v1374 = vsub.f32 %v350, %v862
        %v1375 = vsub.f32 %v351, %v863
        %v1376 = vsub.f32 %v352, %v864
        %v1377 = vsub.f32 %v353, %v865
        %v1378 = vsub.f32 %v354, %v866
        %v1379 = vsub.f32 %v355, %v867
        %v1380 = vsub.f32 %v356, %v868
        %v1381 = vsub.f32 %v357, %v869
        %v1382 = vsub.f32 %v358, %v870
        %v1383 = vsub.f32 %v359, %v871
        %v1384 = vsub.f32 %v360, %v872
        %v1385 = vsub.f32 %v361, %v873
        %v1386 = vsub.f32 %v362, %v874
        %v1387 = vsub.f32 %v363, %v875
        %v1388 = vsub.f32 %v364, %v876
        %v1389 = vsub.f32 %v365, %v877
        %v1390 = vsub.f32 %v366, %v878
        %v1391 = vsub.f32 %v367, %v879
        %v1392 = vsub.f32 %v368, %v880
        %v1393 = vsub.f32 %v369, %v881
        %v1394 = vsub.f32 %v370, %v882
        %v1395 = vsub.f32 %v371, %v883
        %v1396 = vsub.f32 %v372, %v884
        %v1397 = vsub.f32 %v373, %v885
        %v1398 = vsub.f32 %v374, %v886
        %v1399 = vsub.f32 %v375, %v887
        %v1400 = vsub.f32 %v376, %v888
        %v1401 = vsub.f32 %v377, %v889
        %v1402 = vsub.f32 %v378, %v890
        %v1403 = vsub.f32 %v379, %v891
        %v1404 = vsub.f32 %v380, %v892
        %v1405 = vsub.f32 %v381, %v893
        %v1406 = vsub.f32 %v382, %v894
        %v1407 = vsub.f32 %v383, %v895
        %v1408 = vsub.f32 %v384, %v896
        %v1409 = vsub.f32 %v385, %v897
        %v1410 = vsub.f32 %v386, %v898
        %v1411 = vsub.f32 %v387, %v899
        %v1412 = vsub.f32 %v388, %v900
        %v1413 = vsub.f32 %v389, %v901
        %v1414 = vsub.f32 %v390, %v902
        %v1415 = vsub.f32 %v391, %v903
        %v1416 = vsub.f32 %v392, %v904
        %v1417 = vsub.f32 %v393, %v905
        %v1418 = vsub.f32 %v394, %v906
        %v1419 = vsub.f32 %v395, %v907
        %v1420 = vsub.f32 %v396, %v908
        %v1421 = vsub.f32 %v397, %v909
        %v1422 = vsub.f32 %v398, %v910
        %v1423 = vsub.f32 %v399, %v911
        %v1424 = vsub.f32 %v400, %v912
        %v1425 = vsub.f32 %v401, %v913
        %v1426 = vsub.f32 %v402, %v914
        %v1427 = vsub.f32 %v403, %v915
        %v1428 = vsub.f32 %v404, %v916
        %v1429 = vsub.f32 %v405, %v917
        %v1430 = vsub.f32 %v406, %v918
        %v1431 = vsub.f32 %v407, %v919
        %v1432 = vsub.f32 %v408, %v920
        %v1433 = vsub.f32 %v409, %v921
        %v1434 = vsub.f32 %v410, %v922
        %v1435 = vsub.f32 %v411, %v923
        %v1436 = vsub.f32 %v412, %v924
        %v1437 = vsub.f32 %v413, %v925
        %v1438 = vsub.f32 %v414, %v926
        %v1439 = vsub.f32 %v415, %v927
        %v1440 = vsub.f32 %v416, %v928
        %v1441 = vsub.f32 %v417, %v929
        %v1442 = vsub.f32 %v418, %v930
        %v1443 = vsub.f32 %v419, %v931
        %v1444 = vsub.f32 %v420, %v932
        %v1445 = vsub.f32 %v421, %v933
        %v1446 = vsub.f32 %v422, %v934
        %v1447 = vsub.f32 %v423, %v935
        %v1448 = vsub.f32 %v424, %v936
        %v1449 = vsub.f32 %v425, %v937
        %v1450 = vsub.f32 %v426, %v938
        %v1451 = vsub.f32 %v427, %v939
        %v1452 = vsub.f32 %v428, %v940
        %v1453 = vsub.f32 %v429, %v941
        %v1454 = vsub.f32 %v430, %v942
        %v1455 = vsub.f32 %v431, %v943
        %v1456 = vsub.f32 %v432, %v944
        %v1457 = vsub.f32 %v433, %v945
        %v1458 = vsub.f32 %v434, %v946
        %v1459 = vsub.f32 %v435, %v947
        %v1460 = vsub.f32 %v436, %v948
        %v1461 = vsub.f32 %v437, %v949
        %v1462 = vsub.f32 %v438, %v950
        %v1463 = vsub.f32 %v439, %v951
        %v1464 = vsub.f32 %v440, %v952
        %v1465 = vsub.f32 %v441, %v953
        %v1466 = vsub.f32 %v442, %v954
        %v1467 = vsub.f32 %v443, %v955
        %v1468 = vsub.f32 %v444, %v956
        %v1469 = vsub.f32 %v445, %v957
        %v1470 = vsub.f32 %v446, %v958
        %v1471 = vsub.f32 %v447, %v959
        %v1472 = vsub.f32 %v448, %v960
        %v1473 = vsub.f32 %v449, %v961
        %v1474 = vsub.f32 %v450, %v962
        %v1475 = vsub.f32 %v451, %v963
        %v1476 = vsub.f32 %v452, %v964
        %v1477 = vsub.f32 %v453, %v965
        %v1478 = vsub.f32 %v454, %v966
        %v1479 = vsub.f32 %v455, %v967
        %v1480 = vsub.f32 %v456, %v968
        %v1481 = vsub.f32 %v457, %v969
        %v1482 = vsub.f32 %v458, %v970
        %v1483 = vsub.f32 %v459, %v971
        %v1484 = vsub.f32 %v460, %v972
        %v1485 = vsub.f32 %v461, %v973
        %v1486 = vsub.f32 %v462, %v974
        %v1487 = vsub.f32 %v463, %v975
        %v1488 = vsub.f32 %v464, %v976
        %v1489 = vsub.f32 %v465, %v977
        %v1490 = vsub.f32 %v466, %v978
        %v1491 = vsub.f32 %v467, %v979
        %v1492 = vsub.f32 %v468, %v980
        %v1493 = vsub.f32 %v469, %v981
        %v1494 = vsub.f32 %v470, %v982
        %v1495 = vsub.f32 %v471, %v983
        %v1496 = vsub.f32 %v472, %v984
        %v1497 = vsub.f32 %v473, %v985
        %v1498 = vsub.f32 %v474, %v986
        %v1499 = vsub.f32 %v475, %v987
        %v1500 = vsub.f32 %v476, %v988
        %v1501 = vsub.f32 %v477, %v989
        %v1502 = vsub.f32 %v478, %v990
        %v1503 = vsub.f32 %v479, %v991
        %v1504 = vsub.f32 %v480, %v992
        %v1505 = vsub.f32 %v481, %v993
        %v1506 = vsub.f32 %v482, %v994
        %v1507 = vsub.f32 %v483, %v995
        %v1508 = vsub.f32 %v484, %v996
        %v1509 = vsub.f32 %v485, %v997
        %v1510 = vsub.f32 %v486, %v998
        %v1511 = vsub.f32 %v487, %v999
        %v1512 = vsub.f32 %v488, %v1000
        %v1513 = vsub.f32 %v489, %v1001
        %v1514 = vsub.f32 %v490, %v1002
        %v1515 = vsub.f32 %v491, %v1003
        %v1516 = vsub.f32 %v492, %v1004
        %v1517 = vsub.f32 %v493, %v1005
        %v1518 = vsub.f32 %v494, %v1006
        %v1519 = vsub.f32 %v495, %v1007
        %v1520 = vsub.f32 %v496, %v1008
        %v1521 = vsub.f32 %v497, %v1009
        %v1522 = vsub.f32 %v498, %v1010
        %v1523 = vsub.f32 %v499, %v1011
        %v1524 = vsub.f32 %v500, %v1012
        %v1525 = vsub.f32 %v501, %v1013
        %v1526 = vsub.f32 %v502, %v1014
        %v1527 = vsub.f32 %v503, %v1015
        %v1528 = vsub.f32 %v504, %v1016
        %v1529 = vsub.f32 %v505, %v1017
        %v1530 = vsub.f32 %v506, %v1018
        %v1531 = vsub.f32 %v507, %v1019
        %v1532 = vsub.f32 %v508, %v1020
        %v1533 = vsub.f32 %v509, %v1021
        %v1534 = vsub.f32 %v510, %v1022
        %v1535 = vsub.f32 %v511, %v1023
        %v1536 = vsub.f32 %v512, %v1024
        %v1537 = vsub.f32 %v513, %v1025
        %v1538 = vsub.f32 %v514, %v1026
        %v1539 = vsub.f32 %v515, %v1027
        %v1540 = vsub.f32 %v516, %v1028
        %v1541 = vsub.f32 %v517, %v1029
        %v1542 = vsub.f32 %v518, %v1030
        %v1543 = vsub.f32 %v519, %v1031
        %v1544 = vsub.f32 %v520, %v1032
        %v1545 = vsub.f32 %v521, %v1033
        %v1546 = vsub.f32 %v522, %v1034
        %v1547 = vsub.f32 %v523, %v1035
        %v1548 = vsub.f32 %v524, %v1036
        %v1549 = vsub.f32 %v525, %v1037
        %v1550 = vsub.f32 %v526, %v1038
        %v1551 = vsub.f32 %v527, %v1039
        %v1552 = vsub.f32 %v528, %v1040
        %v1553 = vsub.f32 %v529, %v1041
        %v1554 = vsub.f32 %v530, %v1042
        %v1555 = vsub.f32 %v531, %v1043
        %v1556 = vsub.f32 %v532, %v1044
        %v1557 = vsub.f32 %v533, %v1045
        %v1558 = vsub.f32 %v534, %v1046
        %v1559 = vsub.f32 %v535, %v1047
        %v1560 = vsub.f32 %v536, %v1048
        %v1561 = vsub.f32 %v537, %v1049
        %v1562 = vsub.f32 %v538, %v1050
        %v1563 = vsub.f32 %v539, %v1051
        %v1564 = vsub.f32 %v540, %v1052
        %v1565 = vsub.f32 %v541, %v1053
        %v1566 = vsub.f32 %v542, %v1054
        %v1567 = vsub.f32 %v543, %v1055
        %v1568 = vsub.f32 %v544, %v1056
        %v1569 = vsub.f32 %v545, %v1057
        %v1570 = vsub.f32 %v546, %v1058
        %v1571 = vsub.f32 %v547, %v1059
        %v1572 = vsub.f32 %v548, %v1060
        %v1573 = vsub.f32 %v549, %v1061
        %v1574 = vsub.f32 %v550, %v1062
        %v1575 = vsub.f32 %v551, %v1063
        %v1576 = vsub.f32 %v552, %v1064
        %v1577 = vsub.f32 %v553, %v1065
        %v1578 = vsub.f32 %v554, %v1066
        %v1579 = vsub.f32 %v555, %v1067
        %v1580 = vsub.f32 %v556, %v1068
        %v1581 = vsub.f32 %v557, %v1069
        %v1582 = vsub.f32 %v558, %v1070
        %v1583 = vsub.f32 %v559, %v1071
        %v1584 = vsub.f32 %v560, %v1072
        %v1585 = vsub.f32 %v561, %v1073
        %v1586 = vsub.f32 %v562, %v1074
        %v1587 = vsub.f32 %v563, %v1075
        %v1588 = vsub.f32 %v564, %v1076
        %v1589 = vsub.f32 %v565, %v1077
        %v1590 = vsub.f32 %v566, %v1078
        %v1591 = vsub.f32 %v567, %v1079
        %v1592 = vsub.f32 %v568, %v1080
        %v1593 = vsub.f32 %v569, %v1081
        %v1594 = vsub.f32 %v570, %v1082
        %v1595 = vsub.f32 %v571, %v1083
        %v1596 = vsub.f32 %v572, %v1084
        %v1597 = vsub.f32 %v573, %v1085
        %v1598 = vsub.f32 %v574, %v1086
        %v1599 = vsub.f32 %v575, %v1087
        %v1600 = vsub.f32 %v576, %v1088
        %v1601 = vsub.f32 %v577, %v1089
        %v1602 = vsub.f32 %v578, %v1090
        %v1603 = vsub.f32 %v579, %v1091
        %v1604 = vsub.f32 %v580, %v1092
        %v1605 = vsub.f32 %v581, %v1093
        %v1606 = vsub.f32 %v582, %v1094
        %v1607 = vsub.f32 %v583, %v1095
        %v1608 = vsub.f32 %v584, %v1096
        %v1609 = vsub.f32 %v585, %v1097
        %v1610 = vsub.f32 %v586, %v1098
        %v1611 = vsub.f32 %v587, %v1099
        %v1612 = vsub.f32 %v588, %v1100
        %v1613 = vsub.f32 %v589, %v1101
        %v1614 = vsub.f32 %v590, %v1102
        %v1615 = vsub.f32 %v591, %v1103
        %v1616 = vsub.f32 %v592, %v1104
        %v1617 = vsub.f32 %v593, %v1105
        %v1618 = vsub.f32 %v594, %v1106
        %v1619 = vsub.f32 %v595, %v1107
        %v1620 = vsub.f32 %v596, %v1108
        %v1621 = vsub.f32 %v597, %v1109
        %v1622 = vsub.f32 %v598, %v1110
        %v1623 = vsub.f32 %v599, %v1111
        %v1624 = vsub.f32 %v600, %v1112
        %v1625 = vsub.f32 %v601, %v1113
        %v1626 = vsub.f32 %v602, %v1114
        %v1627 = vsub.f32 %v603, %v1115
        %v1628 = vsub.f32 %v604, %v1116
        %v1629 = vsub.f32 %v605, %v1117
        %v1630 = vsub.f32 %v606, %v1118
        %v1631 = vsub.f32 %v607, %v1119
        %v1632 = vsub.f32 %v608, %v1120
        %v1633 = vsub.f32 %v609, %v1121
        %v1634 = vsub.f32 %v610, %v1122
        %v1635 = vsub.f32 %v611, %v1123
        %v1636 = vsub.f32 %v612, %v1124
        %v1637 = vsub.f32 %v613, %v1125
        %v1638 = vsub.f32 %v614, %v1126
        %v1639 = vsub.f32 %v615, %v1127
        %v1640 = vsub.f32 %v616, %v1128
        %v1641 = vsub.f32 %v617, %v1129
        %v1642 = vsub.f32 %v618, %v1130
        %v1643 = vsub.f32 %v619, %v1131
        %v1644 = vsub.f32 %v620, %v1132
        %v1645 = vsub.f32 %v621, %v1133
        %v1646 = vsub.f32 %v622, %v1134
        %v1647 = vsub.f32 %v623, %v1135
        %v1648 = vsub.f32 %v624, %v1136
        %v1649 = vsub.f32 %v625, %v1137
        %v1650 = vsub.f32 %v626, %v1138
        %v1651 = vsub.f32 %v627, %v1139
        %v1652 = vsub.f32 %v628, %v1140
        %v1653 = vsub.f32 %v629, %v1141
        %v1654 = vsub.f32 %v630, %v1142
        %v1655 = vsub.f32 %v631, %v1143
        %v1656 = vsub.f32 %v632, %v1144
        %v1657 = vsub.f32 %v633, %v1145
        %v1658 = vsub.f32 %v634, %v1146
        %v1659 = vsub.f32 %v635, %v1147
        %v1660 = vsub.f32 %v636, %v1148
        %v1661 = vsub.f32 %v637, %v1149
        %v1662 = vsub.f32 %v638, %v1150
        %v1663 = vsub.f32 %v639, %v1151
        %v1664 = vsub.f32 %v640, %v1152
        %v1665 = vsub.f32 %v641, %v1153
        %v1666 = vsub.f32 %v642, %v1154
        %v1667 = vsub.f32 %v643, %v1155
        %v1668 = vsub.f32 %v644, %v1156
        %v1669 = vsub.f32 %v645, %v1157
        %v1670 = vsub.f32 %v646, %v1158
        %v1671 = vsub.f32 %v647, %v1159
        %v1672 = vsub.f32 %v648, %v1160
        %v1673 = vsub.f32 %v649, %v1161
        %v1674 = vsub.f32 %v650, %v1162
        %v1675 = vsub.f32 %v651, %v1163
        %v1676 = vsub.f32 %v652, %v1164
        %v1677 = vsub.f32 %v653, %v1165
        %v1678 = vsub.f32 %v654, %v1166
        %v1679 = vsub.f32 %v655, %v1167
        %v1680 = vsub.f32 %v656, %v1168
        %v1681 = vsub.f32 %v657, %v1169
        %v1682 = vsub.f32 %v658, %v1170
        %v1683 = vsub.f32 %v659, %v1171
        %v1684 = vsub.f32 %v660, %v1172
        %v1685 = vsub.f32 %v661, %v1173
        %v1686 = vsub.f32 %v662, %v1174
        %v1687 = vsub.f32 %v663, %v1175
        %v1688 = vsub.f32 %v664, %v1176
        %v1689 = vsub.f32 %v665, %v1177
        %v1690 = vsub.f32 %v666, %v1178
        %v1691 = vsub.f32 %v667, %v1179
        %v1692 = vsub.f32 %v668, %v1180
        %v1693 = vsub.f32 %v669, %v1181
        %v1694 = vsub.f32 %v670, %v1182
        %v1695 = vsub.f32 %v671, %v1183
        %v1696 = vsub.f32 %v672, %v1184
        %v1697 = vsub.f32 %v673, %v1185
        %v1698 = vsub.f32 %v674, %v1186
        %v1699 = vsub.f32 %v675, %v1187
        %v1700 = vsub.f32 %v676, %v1188
        %v1701 = vsub.f32 %v677, %v1189
        %v1702 = vsub.f32 %v678, %v1190
        %v1703 = vsub.f32 %v679, %v1191
        %v1704 = vsub.f32 %v680, %v1192
        %v1705 = vsub.f32 %v681, %v1193
        %v1706 = vsub.f32 %v682, %v1194
        %v1707 = vsub.f32 %v683, %v1195
        %v1708 = vsub.f32 %v684, %v1196
        %v1709 = vsub.f32 %v685, %v1197
        %v1710 = vsub.f32 %v686, %v1198
        %v1711 = vsub.f32 %v687, %v1199
        %v1712 = vsub.f32 %v688, %v1200
        %v1713 = vsub.f32 %v689, %v1201
        %v1714 = vsub.f32 %v690, %v1202
        %v1715 = vsub.f32 %v691, %v1203
        %v1716 = vsub.f32 %v692, %v1204
        %v1717 = vsub.f32 %v693, %v1205
        %v1718 = vsub.f32 %v694, %v1206
        %v1719 = vsub.f32 %v695, %v1207
        %v1720 = vsub.f32 %v696, %v1208
        %v1721 = vsub.f32 %v697, %v1209
        %v1722 = vsub.f32 %v698, %v1210
        %v1723 = vsub.f32 %v699, %v1211
        %v1724 = vsub.f32 %v700, %v1212
        %v1725 = vsub.f32 %v701, %v1213
        %v1726 = vsub.f32 %v702, %v1214
        %v1727 = vsub.f32 %v703, %v1215
        %v1728 = vsub.f32 %v704, %v1216
        %v1729 = vsub.f32 %v705, %v1217
        %v1730 = vsub.f32 %v706, %v1218
        %v1731 = vsub.f32 %v707, %v1219
        %v1732 = vsub.f32 %v708, %v1220
        %v1733 = vsub.f32 %v709, %v1221
        %v1734 = vsub.f32 %v710, %v1222
        %v1735 = vsub.f32 %v711, %v1223
        %v1736 = vsub.f32 %v712, %v1224
        %v1737 = vsub.f32 %v713, %v1225
        %v1738 = vsub.f32 %v714, %v1226
        %v1739 = vsub.f32 %v715, %v1227
        %v1740 = vsub.f32 %v716, %v1228
        %v1741 = vsub.f32 %v717, %v1229
        %v1742 = vsub.f32 %v718, %v1230
        %v1743 = vsub.f32 %v719, %v1231
        %v1744 = vsub.f32 %v720, %v1232
        %v1745 = vsub.f32 %v721, %v1233
        %v1746 = vsub.f32 %v722, %v1234
        %v1747 = vsub.f32 %v723, %v1235
        %v1748 = vsub.f32 %v724, %v1236
        %v1749 = vsub.f32 %v725, %v1237
        %v1750 = vsub.f32 %v726, %v1238
        %v1751 = vsub.f32 %v727, %v1239
        %v1752 = vsub.f32 %v728, %v1240
        %v1753 = vsub.f32 %v729, %v1241
        %v1754 = vsub.f32 %v730, %v1242
        %v1755 = vsub.f32 %v731, %v1243
        %v1756 = vsub.f32 %v732, %v1244
        %v1757 = vsub.f32 %v733, %v1245
        %v1758 = vsub.f32 %v734, %v1246
        %v1759 = vsub.f32 %v735, %v1247
        %v1760 = vsub.f32 %v736, %v1248
        %v1761 = vsub.f32 %v737, %v1249
        %v1762 = vsub.f32 %v738, %v1250
        %v1763 = vsub.f32 %v739, %v1251
        %v1764 = vsub.f32 %v740, %v1252
        %v1765 = vsub.f32 %v741, %v1253
        %v1766 = vsub.f32 %v742, %v1254
        %v1767 = vsub.f32 %v743, %v1255
        %v1768 = vsub.f32 %v744, %v1256
        %v1769 = vsub.f32 %v745, %v1257
        %v1770 = vsub.f32 %v746, %v1258
        %v1771 = vsub.f32 %v747, %v1259
        %v1772 = vsub.f32 %v748, %v1260
        %v1773 = vsub.f32 %v749, %v1261
        %v1774 = vsub.f32 %v750, %v1262
        %v1775 = vsub.f32 %v751, %v1263
        %v1776 = vsub.f32 %v752, %v1264
        %v1777 = vsub.f32 %v753, %v1265
        %v1778 = vsub.f32 %v754, %v1266
        %v1779 = vsub.f32 %v755, %v1267
        %v1780 = vsub.f32 %v756, %v1268
        %v1781 = vsub.f32 %v757, %v1269
        %v1782 = vld [vmem:[#allocation2] sm:$0xff]
        %v1783 = vmul.f32 %v1270, %v1270
        %v1784 = vmul.f32 %v1271, %v1271
        %v1785 = vmul.f32 %v1272, %v1272
        %v1786 = vmul.f32 %v1273, %v1273
        %v1787 = vmul.f32 %v1274, %v1274
        %v1788 = vmul.f32 %v1275, %v1275
        %v1789 = vmul.f32 %v1276, %v1276
        %v1790 = vmul.f32 %v1277, %v1277
        %v1791 = vmul.f32 %v1278, %v1278
        %v1792 = vmul.f32 %v1279, %v1279
        %v1793 = vmul.f32 %v1280, %v1280
        %v1794 = vmul.f32 %v1281, %v1281
        %v1795 = vmul.f32 %v1282, %v1282
        %v1796 = vmul.f32 %v1283, %v1283
        %v1797 = vmul.f32 %v1284, %v1284
        %v1798 = vmul.f32 %v1285, %v1285
        %v1799 = vmul.f32 %v1286, %v1286
        %v1800 = vmul.f32 %v1287, %v1287
        %v1801 = vmul.f32 %v1288, %v1288
        %v1802 = vmul.f32 %v1289, %v1289
        %v1803 = vmul.f32 %v1290, %v1290
        %v1804 = vmul.f32 %v1291, %v1291
        %v1805 = vmul.f32 %v1292, %v1292
        %v1806 = vmul.f32 %v1293, %v1293
        %v1807 = vmul.f32 %v1294, %v1294
        %v1808 = vmul.f32 %v1295, %v1295
        %v1809 = vmul.f32 %v1296, %v1296
        %v1810 = vmul.f32 %v1297, %v1297
        %v1811 = vmul.f32 %v1298, %v1298
        %v1812 = vmul.f32 %v1299, %v1299
        %v1813 = vmul.f32 %v1300, %v1300
        %v1814 = vmul.f32 %v1301, %v1301
        %v1815 = vmul.f32 %v1302, %v1302
        %v1816 = vmul.f32 %v1303, %v1303
        %v1817 = vmul.f32 %v1304, %v1304
        %v1818 = vmul.f32 %v1305, %v1305
        %v1819 = vmul.f32 %v1306, %v1306
        %v1820 = vmul.f32 %v1307, %v1307
        %v1821 = vmul.f32 %v1308, %v1308
        %v1822 = vmul.f32 %v1309, %v1309
        %v1823 = vmul.f32 %v1310, %v1310
        %v1824 = vmul.f32 %v1311, %v1311
        %v1825 = vmul.f32 %v1312, %v1312
        %v1826 = vmul.f32 %v1313, %v1313
        %v1827 = vmul.f32 %v1314, %v1314
        %v1828 = vmul.f32 %v1315, %v1315
        %v1829 = vmul.f32 %v1316, %v1316
        %v1830 = vmul.f32 %v1317, %v1317
        %v1831 = vmul.f32 %v1318, %v1318
        %v1832 = vmul.f32 %v1319, %v1319
        %v1833 = vmul.f32 %v1320, %v1320
        %v1834 = vmul.f32 %v1321, %v1321
        %v1835 = vmul.f32 %v1322, %v1322
        %v1836 = vmul.f32 %v1323, %v1323
        %v1837 = vmul.f32 %v1324, %v1324
        %v1838 = vmul.f32 %v1325, %v1325
        %v1839 = vmul.f32 %v1326, %v1326
        %v1840 = vmul.f32 %v1327, %v1327
        %v1841 = vmul.f32 %v1328, %v1328
        %v1842 = vmul.f32 %v1329, %v1329
        %v1843 = vmul.f32 %v1330, %v1330
        %v1844 = vmul.f32 %v1331, %v1331
        %v1845 = vmul.f32 %v1332, %v1332
        %v1846 = vmul.f32 %v1333, %v1333
        %v1847 = vmul.f32 %v1334, %v1334
        %v1848 = vmul.f32 %v1335, %v1335
        %v1849 = vmul.f32 %v1336, %v1336
        %v1850 = vmul.f32 %v1337, %v1337
        %v1851 = vmul.f32 %v1338, %v1338
        %v1852 = vmul.f32 %v1339, %v1339
        %v1853 = vmul.f32 %v1340, %v1340
        %v1854 = vmul.f32 %v1341, %v1341
        %v1855 = vmul.f32 %v1342, %v1342
        %v1856 = vmul.f32 %v1343, %v1343
        %v1857 = vmul.f32 %v1344, %v1344
        %v1858 = vmul.f32 %v1345, %v1345
        %v1859 = vmul.f32 %v1346, %v1346
        %v1860 = vmul.f32 %v1347, %v1347
        %v1861 = vmul.f32 %v1348, %v1348
        %v1862 = vmul.f32 %v1349, %v1349
        %v1863 = vmul.f32 %v1350, %v1350
        %v1864 = vmul.f32 %v1351, %v1351
        %v1865 = vmul.f32 %v1352, %v1352
        %v1866 = vmul.f32 %v1353, %v1353
        %v1867 = vmul.f32 %v1354, %v1354
        %v1868 = vmul.f32 %v1355, %v1355
        %v1869 = vmul.f32 %v1356, %v1356
        %v1870 = vmul.f32 %v1357, %v1357
        %v1871 = vmul.f32 %v1358, %v1358
        %v1872 = vmul.f32 %v1359, %v1359
        %v1873 = vmul.f32 %v1360, %v1360
        %v1874 = vmul.f32 %v1361, %v1361
        %v1875 = vmul.f32 %v1362, %v1362
        %v1876 = vmul.f32 %v1363, %v1363
        %v1877 = vmul.f32 %v1364, %v1364
        %v1878 = vmul.f32 %v1365, %v1365
        %v1879 = vmul.f32 %v1366, %v1366
        %v1880 = vmul.f32 %v1367, %v1367
        %v1881 = vmul.f32 %v1368, %v1368
        %v1882 = vmul.f32 %v1369, %v1369
        %v1883 = vmul.f32 %v1370, %v1370
        %v1884 = vmul.f32 %v1371, %v1371
        %v1885 = vmul.f32 %v1372, %v1372
        %v1886 = vmul.f32 %v1373, %v1373
        %v1887 = vmul.f32 %v1374, %v1374
        %v1888 = vmul.f32 %v1375, %v1375
        %v1889 = vmul.f32 %v1376, %v1376
        %v1890 = vmul.f32 %v1377, %v1377
        %v1891 = vmul.f32 %v1378, %v1378
        %v1892 = vmul.f32 %v1379, %v1379
        %v1893 = vmul.f32 %v1380, %v1380
        %v1894 = vmul.f32 %v1381, %v1381
        %v1895 = vmul.f32 %v1382, %v1382
        %v1896 = vmul.f32 %v1383, %v1383
        %v1897 = vmul.f32 %v1384, %v1384
        %v1898 = vmul.f32 %v1385, %v1385
        %v1899 = vmul.f32 %v1386, %v1386
        %v1900 = vmul.f32 %v1387, %v1387
        %v1901 = vmul.f32 %v1388, %v1388
        %v1902 = vmul.f32 %v1389, %v1389
        %v1903 = vmul.f32 %v1390, %v1390
        %v1904 = vmul.f32 %v1391, %v1391
        %v1905 = vmul.f32 %v1392, %v1392
        %v1906 = vmul.f32 %v1393, %v1393
        %v1907 = vmul.f32 %v1394, %v1394
        %v1908 = vmul.f32 %v1395, %v1395
        %v1909 = vmul.f32 %v1396, %v1396
        %v1910 = vmul.f32 %v1397, %v1397
        %v1911 = vmul.f32 %v1398, %v1398
        %v1912 = vmul.f32 %v1399, %v1399
        %v1913 = vmul.f32 %v1400, %v1400
        %v1914 = vmul.f32 %v1401, %v1401
        %v1915 = vmul.f32 %v1402, %v1402
        %v1916 = vmul.f32 %v1403, %v1403
        %v1917 = vmul.f32 %v1404, %v1404
        %v1918 = vmul.f32 %v1405, %v1405
        %v1919 = vmul.f32 %v1406, %v1406
        %v1920 = vmul.f32 %v1407, %v1407
        %v1921 = vmul.f32 %v1408, %v1408
        %v1922 = vmul.f32 %v1409, %v1409
        %v1923 = vmul.f32 %v1410, %v1410
        %v1924 = vmul.f32 %v1411, %v1411
        %v1925 = vmul.f32 %v1412, %v1412
        %v1926 = vmul.f32 %v1413, %v1413
        %v1927 = vmul.f32 %v1414, %v1414
        %v1928 = vmul.f32 %v1415, %v1415
        %v1929 = vmul.f32 %v1416, %v1416
        %v1930 = vmul.f32 %v1417, %v1417
        %v1931 = vmul.f32 %v1418, %v1418
        %v1932 = vmul.f32 %v1419, %v1419
        %v1933 = vmul.f32 %v1420, %v1420
        %v1934 = vmul.f32 %v1421, %v1421
        %v1935 = vmul.f32 %v1422, %v1422
        %v1936 = vmul.f32 %v1423, %v1423
        %v1937 = vmul.f32 %v1424, %v1424
        %v1938 = vmul.f32 %v1425, %v1425
        %v1939 = vmul.f32 %v1426, %v1426
        %v1940 = vmul.f32 %v1427, %v1427
        %v1941 = vmul.f32 %v1428, %v1428
        %v1942 = vmul.f32 %v1429, %v1429
        %v1943 = vmul.f32 %v1430, %v1430
        %v1944 = vmul.f32 %v1431, %v1431
        %v1945 = vmul.f32 %v1432, %v1432
        %v1946 = vmul.f32 %v1433, %v1433
        %v1947 = vmul.f32 %v1434, %v1434
        %v1948 = vmul.f32 %v1435, %v1435
        %v1949 = vmul.f32 %v1436, %v1436
        %v1950 = vmul.f32 %v1437, %v1437
        %v1951 = vmul.f32 %v1438, %v1438
        %v1952 = vmul.f32 %v1439, %v1439
        %v1953 = vmul.f32 %v1440, %v1440
        %v1954 = vmul.f32 %v1441, %v1441
        %v1955 = vmul.f32 %v1442, %v1442
        %v1956 = vmul.f32 %v1443, %v1443
        %v1957 = vmul.f32 %v1444, %v1444
        %v1958 = vmul.f32 %v1445, %v1445
        %v1959 = vmul.f32 %v1446, %v1446
        %v1960 = vmul.f32 %v1447, %v1447
        %v1961 = vmul.f32 %v1448, %v1448
        %v1962 = vmul.f32 %v1449, %v1449
        %v1963 = vmul.f32 %v1450, %v1450
        %v1964 = vmul.f32 %v1451, %v1451
        %v1965 = vmul.f32 %v1452, %v1452
        %v1966 = vmul.f32 %v1453, %v1453
        %v1967 = vmul.f32 %v1454, %v1454
        %v1968 = vmul.f32 %v1455, %v1455
        %v1969 = vmul.f32 %v1456, %v1456
        %v1970 = vmul.f32 %v1457, %v1457
        %v1971 = vmul.f32 %v1458, %v1458
        %v1972 = vmul.f32 %v1459, %v1459
        %v1973 = vmul.f32 %v1460, %v1460
        %v1974 = vmul.f32 %v1461, %v1461
        %v1975 = vmul.f32 %v1462, %v1462
        %v1976 = vmul.f32 %v1463, %v1463
        %v1977 = vmul.f32 %v1464, %v1464
        %v1978 = vmul.f32 %v1465, %v1465
        %v1979 = vmul.f32 %v1466, %v1466
        %v1980 = vmul.f32 %v1467, %v1467
        %v1981 = vmul.f32 %v1468, %v1468
        %v1982 = vmul.f32 %v1469, %v1469
        %v1983 = vmul.f32 %v1470, %v1470
        %v1984 = vmul.f32 %v1471, %v1471
        %v1985 = vmul.f32 %v1472, %v1472
        %v1986 = vmul.f32 %v1473, %v1473
        %v1987 = vmul.f32 %v1474, %v1474
        %v1988 = vmul.f32 %v1475, %v1475
        %v1989 = vmul.f32 %v1476, %v1476
        %v1990 = vmul.f32 %v1477, %v1477
        %v1991 = vmul.f32 %v1478, %v1478
        %v1992 = vmul.f32 %v1479, %v1479
        %v1993 = vmul.f32 %v1480, %v1480
        %v1994 = vmul.f32 %v1481, %v1481
        %v1995 = vmul.f32 %v1482, %v1482
        %v1996 = vmul.f32 %v1483, %v1483
        %v1997 = vmul.f32 %v1484, %v1484
        %v1998 = vmul.f32 %v1485, %v1485
        %v1999 = vmul.f32 %v1486, %v1486
        %v2000 = vmul.f32 %v1487, %v1487
        %v2001 = vmul.f32 %v1488, %v1488
        %v2002 = vmul.f32 %v1489, %v1489
        %v2003 = vmul.f32 %v1490, %v1490
        %v2004 = vmul.f32 %v1491, %v1491
        %v2005 = vmul.f32 %v1492, %v1492
        %v2006 = vmul.f32 %v1493, %v1493
        %v2007 = vmul.f32 %v1494, %v1494
        %v2008 = vmul.f32 %v1495, %v1495
        %v2009 = vmul.f32 %v1496, %v1496
        %v2010 = vmul.f32 %v1497, %v1497
        %v2011 = vmul.f32 %v1498, %v1498
        %v2012 = vmul.f32 %v1499, %v1499
        %v2013 = vmul.f32 %v1500, %v1500
        %v2014 = vmul.f32 %v1501, %v1501
        %v2015 = vmul.f32 %v1502, %v1502
        %v2016 = vmul.f32 %v1503, %v1503
        %v2017 = vmul.f32 %v1504, %v1504
        %v2018 = vmul.f32 %v1505, %v1505
        %v2019 = vmul.f32 %v1506, %v1506
        %v2020 = vmul.f32 %v1507, %v1507
        %v2021 = vmul.f32 %v1508, %v1508
        %v2022 = vmul.f32 %v1509, %v1509
        %v2023 = vmul.f32 %v1510, %v1510
        %v2024 = vmul.f32 %v1511, %v1511
        %v2025 = vmul.f32 %v1512, %v1512
        %v2026 = vmul.f32 %v1513, %v1513
        %v2027 = vmul.f32 %v1514, %v1514
        %v2028 = vmul.f32 %v1515, %v1515
        %v2029 = vmul.f32 %v1516, %v1516
        %v2030 = vmul.f32 %v1517, %v1517
        %v2031 = vmul.f32 %v1518, %v1518
        %v2032 = vmul.f32 %v1519, %v1519
        %v2033 = vmul.f32 %v1520, %v1520
        %v2034 = vmul.f32 %v1521, %v1521
        %v2035 = vmul.f32 %v1522, %v1522
        %v2036 = vmul.f32 %v1523, %v1523
        %v2037 = vmul.f32 %v1524, %v1524
        %v2038 = vmul.f32 %v1525, %v1525
        %v2039 = vmul.f32 %v1526, %v1526
        %v2040 = vmul.f32 %v1527, %v1527
        %v2041 = vmul.f32 %v1528, %v1528
        %v2042 = vmul.f32 %v1529, %v1529
        %v2043 = vmul.f32 %v1530, %v1530
        %v2044 = vmul.f32 %v1531, %v1531
        %v2045 = vmul.f32 %v1532, %v1532
        %v2046 = vmul.f32 %v1533, %v1533
        %v2047 = vmul.f32 %v1534, %v1534
        %v2048 = vmul.f32 %v1535, %v1535
        %v2049 = vmul.f32 %v1536, %v1536
        %v2050 = vmul.f32 %v1537, %v1537
        %v2051 = vmul.f32 %v1538, %v1538
        %v2052 = vmul.f32 %v1539, %v1539
        %v2053 = vmul.f32 %v1540, %v1540
        %v2054 = vmul.f32 %v1541, %v1541
        %v2055 = vmul.f32 %v1542, %v1542
        %v2056 = vmul.f32 %v1543, %v1543
        %v2057 = vmul.f32 %v1544, %v1544
        %v2058 = vmul.f32 %v1545, %v1545
        %v2059 = vmul.f32 %v1546, %v1546
        %v2060 = vmul.f32 %v1547, %v1547
        %v2061 = vmul.f32 %v1548, %v1548
        %v2062 = vmul.f32 %v1549, %v1549
        %v2063 = vmul.f32 %v1550, %v1550
        %v2064 = vmul.f32 %v1551, %v1551
        %v2065 = vmul.f32 %v1552, %v1552
        %v2066 = vmul.f32 %v1553, %v1553
        %v2067 = vmul.f32 %v1554, %v1554
        %v2068 = vmul.f32 %v1555, %v1555
        %v2069 = vmul.f32 %v1556, %v1556
        %v2070 = vmul.f32 %v1557, %v1557
        %v2071 = vmul.f32 %v1558, %v1558
        %v2072 = vmul.f32 %v1559, %v1559
        %v2073 = vmul.f32 %v1560, %v1560
        %v2074 = vmul.f32 %v1561, %v1561
        %v2075 = vmul.f32 %v1562, %v1562
        %v2076 = vmul.f32 %v1563, %v1563
        %v2077 = vmul.f32 %v1564, %v1564
        %v2078 = vmul.f32 %v1565, %v1565
        %v2079 = vmul.f32 %v1566, %v1566
        %v2080 = vmul.f32 %v1567, %v1567
        %v2081 = vmul.f32 %v1568, %v1568
        %v2082 = vmul.f32 %v1569, %v1569
        %v2083 = vmul.f32 %v1570, %v1570
        %v2084 = vmul.f32 %v1571, %v1571
        %v2085 = vmul.f32 %v1572, %v1572
        %v2086 = vmul.f32 %v1573, %v1573
        %v2087 = vmul.f32 %v1574, %v1574
        %v2088 = vmul.f32 %v1575, %v1575
        %v2089 = vmul.f32 %v1576, %v1576
        %v2090 = vmul.f32 %v1577, %v1577
        %v2091 = vmul.f32 %v1578, %v1578
        %v2092 = vmul.f32 %v1579, %v1579
        %v2093 = vmul.f32 %v1580, %v1580
        %v2094 = vmul.f32 %v1581, %v1581
        %v2095 = vmul.f32 %v1582, %v1582
        %v2096 = vmul.f32 %v1583, %v1583
        %v2097 = vmul.f32 %v1584, %v1584
        %v2098 = vmul.f32 %v1585, %v1585
        %v2099 = vmul.f32 %v1586, %v1586
        %v2100 = vmul.f32 %v1587, %v1587
        %v2101 = vmul.f32 %v1588, %v1588
        %v2102 = vmul.f32 %v1589, %v1589
        %v2103 = vmul.f32 %v1590, %v1590
        %v2104 = vmul.f32 %v1591, %v1591
        %v2105 = vmul.f32 %v1592, %v1592
        %v2106 = vmul.f32 %v1593, %v1593
        %v2107 = vmul.f32 %v1594, %v1594
        %v2108 = vmul.f32 %v1595, %v1595
        %v2109 = vmul.f32 %v1596, %v1596
        %v2110 = vmul.f32 %v1597, %v1597
        %v2111 = vmul.f32 %v1598, %v1598
        %v2112 = vmul.f32 %v1599, %v1599
        %v2113 = vmul.f32 %v1600, %v1600
        %v2114 = vmul.f32 %v1601, %v1601
        %v2115 = vmul.f32 %v1602, %v1602
        %v2116 = vmul.f32 %v1603, %v1603
        %v2117 = vmul.f32 %v1604, %v1604
        %v2118 = vmul.f32 %v1605, %v1605
        %v2119 = vmul.f32 %v1606, %v1606
        %v2120 = vmul.f32 %v1607, %v1607
        %v2121 = vmul.f32 %v1608, %v1608
        %v2122 = vmul.f32 %v1609, %v1609
        %v2123 = vmul.f32 %v1610, %v1610
        %v2124 = vmul.f32 %v1611, %v1611
        %v2125 = vmul.f32 %v1612, %v1612
        %v2126 = vmul.f32 %v1613, %v1613
        %v2127 = vmul.f32 %v1614, %v1614
        %v2128 = vmul.f32 %v1615, %v1615
        %v2129 = vmul.f32 %v1616, %v1616
        %v2130 = vmul.f32 %v1617, %v1617
        %v2131 = vmul.f32 %v1618, %v1618
        %v2132 = vmul.f32 %v1619, %v1619
        %v2133 = vmul.f32 %v1620, %v1620
        %v2134 = vmul.f32 %v1621, %v1621
        %v2135 = vmul.f32 %v1622, %v1622
        %v2136 = vmul.f32 %v1623, %v1623
        %v2137 = vmul.f32 %v1624, %v1624
        %v2138 = vmul.f32 %v1625, %v1625
        %v2139 = vmul.f32 %v1626, %v1626
        %v2140 = vmul.f32 %v1627, %v1627
        %v2141 = vmul.f32 %v1628, %v1628
        %v2142 = vmul.f32 %v1629, %v1629
        %v2143 = vmul.f32 %v1630, %v1630
        %v2144 = vmul.f32 %v1631, %v1631
        %v2145 = vmul.f32 %v1632, %v1632
        %v2146 = vmul.f32 %v1633, %v1633
        %v2147 = vmul.f32 %v1634, %v1634
        %v2148 = vmul.f32 %v1635, %v1635
        %v2149 = vmul.f32 %v1636, %v1636
        %v2150 = vmul.f32 %v1637, %v1637
        %v2151 = vmul.f32 %v1638, %v1638
        %v2152 = vmul.f32 %v1639, %v1639
        %v2153 = vmul.f32 %v1640, %v1640
        %v2154 = vmul.f32 %v1641, %v1641
        %v2155 = vmul.f32 %v1642, %v1642
        %v2156 = vmul.f32 %v1643, %v1643
        %v2157 = vmul.f32 %v1644, %v1644
        %v2158 = vmul.f32 %v1645, %v1645
        %v2159 = vmul.f32 %v1646, %v1646
        %v2160 = vmul.f32 %v1647, %v1647
        %v2161 = vmul.f32 %v1648, %v1648
        %v2162 = vmul.f32 %v1649, %v1649
        %v2163 = vmul.f32 %v1650, %v1650
        %v2164 = vmul.f32 %v1651, %v1651
        %v2165 = vmul.f32 %v1652, %v1652
        %v2166 = vmul.f32 %v1653, %v1653
        %v2167 = vmul.f32 %v1654, %v1654
        %v2168 = vmul.f32 %v1655, %v1655
        %v2169 = vmul.f32 %v1656, %v1656
        %v2170 = vmul.f32 %v1657, %v1657
        %v2171 = vmul.f32 %v1658, %v1658
        %v2172 = vmul.f32 %v1659, %v1659
        %v2173 = vmul.f32 %v1660, %v1660
        %v2174 = vmul.f32 %v1661, %v1661
        %v2175 = vmul.f32 %v1662, %v1662
        %v2176 = vmul.f32 %v1663, %v1663
        %v2177 = vmul.f32 %v1664, %v1664
        %v2178 = vmul.f32 %v1665, %v1665
        %v2179 = vmul.f32 %v1666, %v1666
        %v2180 = vmul.f32 %v1667, %v1667
        %v2181 = vmul.f32 %v1668, %v1668
        %v2182 = vmul.f32 %v1669, %v1669
        %v2183 = vmul.f32 %v1670, %v1670
        %v2184 = vmul.f32 %v1671, %v1671
        %v2185 = vmul.f32 %v1672, %v1672
        %v2186 = vmul.f32 %v1673, %v1673
        %v2187 = vmul.f32 %v1674, %v1674
        %v2188 = vmul.f32 %v1675, %v1675
        %v2189 = vmul.f32 %v1676, %v1676
        %v2190 = vmul.f32 %v1677, %v1677
        %v2191 = vmul.f32 %v1678, %v1678
        %v2192 = vmul.f32 %v1679, %v1679
        %v2193 = vmul.f32 %v1680, %v1680
        %v2194 = vmul.f32 %v1681, %v1681
        %v2195 = vmul.f32 %v1682, %v1682
        %v2196 = vmul.f32 %v1683, %v1683
        %v2197 = vmul.f32 %v1684, %v1684
        %v2198 = vmul.f32 %v1685, %v1685
        %v2199 = vmul.f32 %v1686, %v1686
        %v2200 = vmul.f32 %v1687, %v1687
        %v2201 = vmul.f32 %v1688, %v1688
        %v2202 = vmul.f32 %v1689, %v1689
        %v2203 = vmul.f32 %v1690, %v1690
        %v2204 = vmul.f32 %v1691, %v1691
        %v2205 = vmul.f32 %v1692, %v1692
        %v2206 = vmul.f32 %v1693, %v1693
        %v2207 = vmul.f32 %v1694, %v1694
        %v2208 = vmul.f32 %v1695, %v1695
        %v2209 = vmul.f32 %v1696, %v1696
        %v2210 = vmul.f32 %v1697, %v1697
        %v2211 = vmul.f32 %v1698, %v1698
        %v2212 = vmul.f32 %v1699, %v1699
        %v2213 = vmul.f32 %v1700, %v1700
        %v2214 = vmul.f32 %v1701, %v1701
        %v2215 = vmul.f32 %v1702, %v1702
        %v2216 = vmul.f32 %v1703, %v1703
        %v2217 = vmul.f32 %v1704, %v1704
        %v2218 = vmul.f32 %v1705, %v1705
        %v2219 = vmul.f32 %v1706, %v1706
        %v2220 = vmul.f32 %v1707, %v1707
        %v2221 = vmul.f32 %v1708, %v1708
        %v2222 = vmul.f32 %v1709, %v1709
        %v2223 = vmul.f32 %v1710, %v1710
        %v2224 = vmul.f32 %v1711, %v1711
        %v2225 = vmul.f32 %v1712, %v1712
        %v2226 = vmul.f32 %v1713, %v1713
        %v2227 = vmul.f32 %v1714, %v1714
        %v2228 = vmul.f32 %v1715, %v1715
        %v2229 = vmul.f32 %v1716, %v1716
        %v2230 = vmul.f32 %v1717, %v1717
        %v2231 = vmul.f32 %v1718, %v1718
        %v2232 = vmul.f32 %v1719, %v1719
        %v2233 = vmul.f32 %v1720, %v1720
        %v2234 = vmul.f32 %v1721, %v1721
        %v2235 = vmul.f32 %v1722, %v1722
        %v2236 = vmul.f32 %v1723, %v1723
        %v2237 = vmul.f32 %v1724, %v1724
        %v2238 = vmul.f32 %v1725, %v1725
        %v2239 = vmul.f32 %v1726, %v1726
        %v2240 = vmul.f32 %v1727, %v1727
        %v2241 = vmul.f32 %v1728, %v1728
        %v2242 = vmul.f32 %v1729, %v1729
        %v2243 = vmul.f32 %v1730, %v1730
        %v2244 = vmul.f32 %v1731, %v1731
        %v2245 = vmul.f32 %v1732, %v1732
        %v2246 = vmul.f32 %v1733, %v1733
        %v2247 = vmul.f32 %v1734, %v1734
        %v2248 = vmul.f32 %v1735, %v1735
        %v2249 = vmul.f32 %v1736, %v1736
        %v2250 = vmul.f32 %v1737, %v1737
        %v2251 = vmul.f32 %v1738, %v1738
        %v2252 = vmul.f32 %v1739, %v1739
        %v2253 = vmul.f32 %v1740, %v1740
        %v2254 = vmul.f32 %v1741, %v1741
        %v2255 = vmul.f32 %v1742, %v1742
        %v2256 = vmul.f32 %v1743, %v1743
        %v2257 = vmul.f32 %v1744, %v1744
        %v2258 = vmul.f32 %v1745, %v1745
        %v2259 = vmul.f32 %v1746, %v1746
        %v2260 = vmul.f32 %v1747, %v1747
        %v2261 = vmul.f32 %v1748, %v1748
        %v2262 = vmul.f32 %v1749, %v1749
        %v2263 = vmul.f32 %v1750, %v1750
        %v2264 = vmul.f32 %v1751, %v1751
        %v2265 = vmul.f32 %v1752, %v1752
        %v2266 = vmul.f32 %v1753, %v1753
        %v2267 = vmul.f32 %v1754, %v1754
        %v2268 = vmul.f32 %v1755, %v1755
        %v2269 = vmul.f32 %v1756, %v1756
        %v2270 = vmul.f32 %v1757, %v1757
        %v2271 = vmul.f32 %v1758, %v1758
        %v2272 = vmul.f32 %v1759, %v1759
        %v2273 = vmul.f32 %v1760, %v1760
        %v2274 = vmul.f32 %v1761, %v1761
        %v2275 = vmul.f32 %v1762, %v1762
        %v2276 = vmul.f32 %v1763, %v1763
        %v2277 = vmul.f32 %v1764, %v1764
        %v2278 = vmul.f32 %v1765, %v1765
        %v2279 = vmul.f32 %v1766, %v1766
        %v2280 = vmul.f32 %v1767, %v1767
        %v2281 = vmul.f32 %v1768, %v1768
        %v2282 = vmul.f32 %v1769, %v1769
        %v2283 = vmul.f32 %v1770, %v1770
        %v2284 = vmul.f32 %v1771, %v1771
        %v2285 = vmul.f32 %v1772, %v1772
        %v2286 = vmul.f32 %v1773, %v1773
        %v2287 = vmul.f32 %v1774, %v1774
        %v2288 = vmul.f32 %v1775, %v1775
        %v2289 = vmul.f32 %v1776, %v1776
        %v2290 = vmul.f32 %v1777, %v1777
        %v2291 = vmul.f32 %v1778, %v1778
        %v2292 = vmul.f32 %v1779, %v1779
        %v2293 = vmul.f32 %v1780, %v1780
        %v2294 = vmul.f32 %v1781, %v1781
        %v2295 = vadd.f32 %v1783, %v1784
        %v2296 = vadd.f32 %v2295, %v1785
        %v2297 = vadd.f32 %v2296, %v1786
        %v2298 = vadd.f32 %v2297, %v1787
        %v2299 = vadd.f32 %v2298, %v1788
        %v2300 = vadd.f32 %v2299, %v1789
        %v2301 = vadd.f32 %v2300, %v1790
        %v2302 = vadd.f32 %v2301, %v1791
        %v2303 = vadd.f32 %v2302, %v1792
        %v2304 = vadd.f32 %v2303, %v1793
        %v2305 = vadd.f32 %v2304, %v1794
        %v2306 = vadd.f32 %v2305, %v1795
        %v2307 = vadd.f32 %v2306, %v1796
        %v2308 = vadd.f32 %v2307, %v1797
        %v2309 = vadd.f32 %v2308, %v1798
        %v2310 = vadd.f32 %v2309, %v1799
        %v2311 = vadd.f32 %v2310, %v1800
        %v2312 = vadd.f32 %v2311, %v1801
        %v2313 = vadd.f32 %v2312, %v1802
        %v2314 = vadd.f32 %v2313, %v1803
        %v2315 = vadd.f32 %v2314, %v1804
        %v2316 = vadd.f32 %v2315, %v1805
        %v2317 = vadd.f32 %v2316, %v1806
        %v2318 = vadd.f32 %v2317, %v1807
        %v2319 = vadd.f32 %v2318, %v1808
        %v2320 = vadd.f32 %v2319, %v1809
        %v2321 = vadd.f32 %v2320, %v1810
        %v2322 = vadd.f32 %v2321, %v1811
        %v2323 = vadd.f32 %v2322, %v1812
        %v2324 = vadd.f32 %v2323, %v1813
        %v2325 = vadd.f32 %v2324, %v1814
        %v2326 = vadd.f32 %v2325, %v1815
        %v2327 = vadd.f32 %v2326, %v1816
        %v2328 = vadd.f32 %v2327, %v1817
        %v2329 = vadd.f32 %v2328, %v1818
        %v2330 = vadd.f32 %v2329, %v1819
        %v2331 = vadd.f32 %v2330, %v1820
        %v2332 = vadd.f32 %v2331, %v1821
        %v2333 = vadd.f32 %v2332, %v1822
        %v2334 = vadd.f32 %v2333, %v1823
        %v2335 = vadd.f32 %v2334, %v1824
        %v2336 = vadd.f32 %v2335, %v1825
        %v2337 = vadd.f32 %v2336, %v1826
        %v2338 = vadd.f32 %v2337, %v1827
        %v2339 = vadd.f32 %v2338, %v1828
        %v2340 = vadd.f32 %v2339, %v1829
        %v2341 = vadd.f32 %v2340, %v1830
        %v2342 = vadd.f32 %v2341, %v1831
        %v2343 = vadd.f32 %v2342, %v1832
        %v2344 = vadd.f32 %v2343, %v1833
        %v2345 = vadd.f32 %v2344, %v1834
        %v2346 = vadd.f32 %v2345, %v1835
        %v2347 = vadd.f32 %v2346, %v1836
        %v2348 = vadd.f32 %v2347, %v1837
        %v2349 = vadd.f32 %v2348, %v1838
        %v2350 = vadd.f32 %v2349, %v1839
        %v2351 = vadd.f32 %v2350, %v1840
        %v2352 = vadd.f32 %v2351, %v1841
        %v2353 = vadd.f32 %v2352, %v1842
        %v2354 = vadd.f32 %v2353, %v1843
        %v2355 = vadd.f32 %v2354, %v1844
        %v2356 = vadd.f32 %v2355, %v1845
        %v2357 = vadd.f32 %v2356, %v1846
        %v2358 = vadd.f32 %v2357, %v1847
        %v2359 = vadd.f32 %v2358, %v1848
        %v2360 = vadd.f32 %v2359, %v1849
        %v2361 = vadd.f32 %v2360, %v1850
        %v2362 = vadd.f32 %v2361, %v1851
        %v2363 = vadd.f32 %v2362, %v1852
        %v2364 = vadd.f32 %v2363, %v1853
        %v2365 = vadd.f32 %v2364, %v1854
        %v2366 = vadd.f32 %v2365, %v1855
        %v2367 = vadd.f32 %v2366, %v1856
        %v2368 = vadd.f32 %v2367, %v1857
        %v2369 = vadd.f32 %v2368, %v1858
        %v2370 = vadd.f32 %v2369, %v1859
        %v2371 = vadd.f32 %v2370, %v1860
        %v2372 = vadd.f32 %v2371, %v1861
        %v2373 = vadd.f32 %v2372, %v1862
        %v2374 = vadd.f32 %v2373, %v1863
        %v2375 = vadd.f32 %v2374, %v1864
        %v2376 = vadd.f32 %v2375, %v1865
        %v2377 = vadd.f32 %v2376, %v1866
        %v2378 = vadd.f32 %v2377, %v1867
        %v2379 = vadd.f32 %v2378, %v1868
        %v2380 = vadd.f32 %v2379, %v1869
        %v2381 = vadd.f32 %v2380, %v1870
        %v2382 = vadd.f32 %v2381, %v1871
        %v2383 = vadd.f32 %v2382, %v1872
        %v2384 = vadd.f32 %v2383, %v1873
        %v2385 = vadd.f32 %v2384, %v1874
        %v2386 = vadd.f32 %v2385, %v1875
        %v2387 = vadd.f32 %v2386, %v1876
        %v2388 = vadd.f32 %v2387, %v1877
        %v2389 = vadd.f32 %v2388, %v1878
        %v2390 = vadd.f32 %v2389, %v1879
        %v2391 = vadd.f32 %v2390, %v1880
        %v2392 = vadd.f32 %v2391, %v1881
        %v2393 = vadd.f32 %v2392, %v1882
        %v2394 = vadd.f32 %v2393, %v1883
        %v2395 = vadd.f32 %v2394, %v1884
        %v2396 = vadd.f32 %v2395, %v1885
        %v2397 = vadd.f32 %v2396, %v1886
        %v2398 = vadd.f32 %v2397, %v1887
        %v2399 = vadd.f32 %v2398, %v1888
        %v2400 = vadd.f32 %v2399, %v1889
        %v2401 = vadd.f32 %v2400, %v1890
        %v2402 = vadd.f32 %v2401, %v1891
        %v2403 = vadd.f32 %v2402, %v1892
        %v2404 = vadd.f32 %v2403, %v1893
        %v2405 = vadd.f32 %v2404, %v1894
        %v2406 = vadd.f32 %v2405, %v1895
        %v2407 = vadd.f32 %v2406, %v1896
        %v2408 = vadd.f32 %v2407, %v1897
        %v2409 = vadd.f32 %v2408, %v1898
        %v2410 = vadd.f32 %v2409, %v1899
        %v2411 = vadd.f32 %v2410, %v1900
        %v2412 = vadd.f32 %v2411, %v1901
        %v2413 = vadd.f32 %v2412, %v1902
        %v2414 = vadd.f32 %v2413, %v1903
        %v2415 = vadd.f32 %v2414, %v1904
        %v2416 = vadd.f32 %v2415, %v1905
        %v2417 = vadd.f32 %v2416, %v1906
        %v2418 = vadd.f32 %v2417, %v1907
        %v2419 = vadd.f32 %v2418, %v1908
        %v2420 = vadd.f32 %v2419, %v1909
        %v2421 = vadd.f32 %v2420, %v1910
        %v2422 = vadd.f32 %v2421, %v1911
        %v2423 = vadd.f32 %v2422, %v1912
        %v2424 = vadd.f32 %v2423, %v1913
        %v2425 = vadd.f32 %v2424, %v1914
        %v2426 = vadd.f32 %v2425, %v1915
        %v2427 = vadd.f32 %v2426, %v1916
        %v2428 = vadd.f32 %v2427, %v1917
        %v2429 = vadd.f32 %v2428, %v1918
        %v2430 = vadd.f32 %v2429, %v1919
        %v2431 = vadd.f32 %v2430, %v1920
        %v2432 = vadd.f32 %v2431, %v1921
        %v2433 = vadd.f32 %v2432, %v1922
        %v2434 = vadd.f32 %v2433, %v1923
        %v2435 = vadd.f32 %v2434, %v1924
        %v2436 = vadd.f32 %v2435, %v1925
        %v2437 = vadd.f32 %v2436, %v1926
        %v2438 = vadd.f32 %v2437, %v1927
        %v2439 = vadd.f32 %v2438, %v1928
        %v2440 = vadd.f32 %v2439, %v1929
        %v2441 = vadd.f32 %v2440, %v1930
        %v2442 = vadd.f32 %v2441, %v1931
        %v2443 = vadd.f32 %v2442, %v1932
        %v2444 = vadd.f32 %v2443, %v1933
        %v2445 = vadd.f32 %v2444, %v1934
        %v2446 = vadd.f32 %v2445, %v1935
        %v2447 = vadd.f32 %v2446, %v1936
        %v2448 = vadd.f32 %v2447, %v1937
        %v2449 = vadd.f32 %v2448, %v1938
        %v2450 = vadd.f32 %v2449, %v1939
        %v2451 = vadd.f32 %v2450, %v1940
        %v2452 = vadd.f32 %v2451, %v1941
        %v2453 = vadd.f32 %v2452, %v1942
        %v2454 = vadd.f32 %v2453, %v1943
        %v2455 = vadd.f32 %v2454, %v1944
        %v2456 = vadd.f32 %v2455, %v1945
        %v2457 = vadd.f32 %v2456, %v1946
        %v2458 = vadd.f32 %v2457, %v1947
        %v2459 = vadd.f32 %v2458, %v1948
        %v2460 = vadd.f32 %v2459, %v1949
        %v2461 = vadd.f32 %v2460, %v1950
        %v2462 = vadd.f32 %v2461, %v1951
        %v2463 = vadd.f32 %v2462, %v1952
        %v2464 = vadd.f32 %v2463, %v1953
        %v2465 = vadd.f32 %v2464, %v1954
        %v2466 = vadd.f32 %v2465, %v1955
        %v2467 = vadd.f32 %v2466, %v1956
        %v2468 = vadd.f32 %v2467, %v1957
        %v2469 = vadd.f32 %v2468, %v1958
        %v2470 = vadd.f32 %v2469, %v1959
        %v2471 = vadd.f32 %v2470, %v1960
        %v2472 = vadd.f32 %v2471, %v1961
        %v2473 = vadd.f32 %v2472, %v1962
        %v2474 = vadd.f32 %v2473, %v1963
        %v2475 = vadd.f32 %v2474, %v1964
        %v2476 = vadd.f32 %v2475, %v1965
        %v2477 = vadd.f32 %v2476, %v1966
        %v2478 = vadd.f32 %v2477, %v1967
        %v2479 = vadd.f32 %v2478, %v1968
        %v2480 = vadd.f32 %v2479, %v1969
        %v2481 = vadd.f32 %v2480, %v1970
        %v2482 = vadd.f32 %v2481, %v1971
        %v2483 = vadd.f32 %v2482, %v1972
        %v2484 = vadd.f32 %v2483, %v1973
        %v2485 = vadd.f32 %v2484, %v1974
        %v2486 = vadd.f32 %v2485, %v1975
        %v2487 = vadd.f32 %v2486, %v1976
        %v2488 = vadd.f32 %v2487, %v1977
        %v2489 = vadd.f32 %v2488, %v1978
        %v2490 = vadd.f32 %v2489, %v1979
        %v2491 = vadd.f32 %v2490, %v1980
        %v2492 = vadd.f32 %v2491, %v1981
        %v2493 = vadd.f32 %v2492, %v1982
        %v2494 = vadd.f32 %v2493, %v1983
        %v2495 = vadd.f32 %v2494, %v1984
        %v2496 = vadd.f32 %v2495, %v1985
        %v2497 = vadd.f32 %v2496, %v1986
        %v2498 = vadd.f32 %v2497, %v1987
        %v2499 = vadd.f32 %v2498, %v1988
        %v2500 = vadd.f32 %v2499, %v1989
        %v2501 = vadd.f32 %v2500, %v1990
        %v2502 = vadd.f32 %v2501, %v1991
        %v2503 = vadd.f32 %v2502, %v1992
        %v2504 = vadd.f32 %v2503, %v1993
        %v2505 = vadd.f32 %v2504, %v1994
        %v2506 = vadd.f32 %v2505, %v1995
        %v2507 = vadd.f32 %v2506, %v1996
        %v2508 = vadd.f32 %v2507, %v1997
        %v2509 = vadd.f32 %v2508, %v1998
        %v2510 = vadd.f32 %v2509, %v1999
        %v2511 = vadd.f32 %v2510, %v2000
        %v2512 = vadd.f32 %v2511, %v2001
        %v2513 = vadd.f32 %v2512, %v2002
        %v2514 = vadd.f32 %v2513, %v2003
        %v2515 = vadd.f32 %v2514, %v2004
        %v2516 = vadd.f32 %v2515, %v2005
        %v2517 = vadd.f32 %v2516, %v2006
        %v2518 = vadd.f32 %v2517, %v2007
        %v2519 = vadd.f32 %v2518, %v2008
        %v2520 = vadd.f32 %v2519, %v2009
        %v2521 = vadd.f32 %v2520, %v2010
        %v2522 = vadd.f32 %v2521, %v2011
        %v2523 = vadd.f32 %v2522, %v2012
        %v2524 = vadd.f32 %v2523, %v2013
        %v2525 = vadd.f32 %v2524, %v2014
        %v2526 = vadd.f32 %v2525, %v2015
        %v2527 = vadd.f32 %v2526, %v2016
        %v2528 = vadd.f32 %v2527, %v2017
        %v2529 = vadd.f32 %v2528, %v2018
        %v2530 = vadd.f32 %v2529, %v2019
        %v2531 = vadd.f32 %v2530, %v2020
        %v2532 = vadd.f32 %v2531, %v2021
        %v2533 = vadd.f32 %v2532, %v2022
        %v2534 = vadd.f32 %v2533, %v2023
        %v2535 = vadd.f32 %v2534, %v2024
        %v2536 = vadd.f32 %v2535, %v2025
        %v2537 = vadd.f32 %v2536, %v2026
        %v2538 = vadd.f32 %v2537, %v2027
        %v2539 = vadd.f32 %v2538, %v2028
        %v2540 = vadd.f32 %v2539, %v2029
        %v2541 = vadd.f32 %v2540, %v2030
        %v2542 = vadd.f32 %v2541, %v2031
        %v2543 = vadd.f32 %v2542, %v2032
        %v2544 = vadd.f32 %v2543, %v2033
        %v2545 = vadd.f32 %v2544, %v2034
        %v2546 = vadd.f32 %v2545, %v2035
        %v2547 = vadd.f32 %v2546, %v2036
        %v2548 = vadd.f32 %v2547, %v2037
        %v2549 = vadd.f32 %v2548, %v2038
        %v2550 = vadd.f32 %v2549, %v2039
        %v2551 = vadd.f32 %v2550, %v2040
        %v2552 = vadd.f32 %v2551, %v2041
        %v2553 = vadd.f32 %v2552, %v2042
        %v2554 = vadd.f32 %v2553, %v2043
        %v2555 = vadd.f32 %v2554, %v2044
        %v2556 = vadd.f32 %v2555, %v2045
        %v2557 = vadd.f32 %v2556, %v2046
        %v2558 = vadd.f32 %v2557, %v2047
        %v2559 = vadd.f32 %v2558, %v2048
        %v2560 = vadd.f32 %v2559, %v2049
        %v2561 = vadd.f32 %v2560, %v2050
        %v2562 = vadd.f32 %v2561, %v2051
        %v2563 = vadd.f32 %v2562, %v2052
        %v2564 = vadd.f32 %v2563, %v2053
        %v2565 = vadd.f32 %v2564, %v2054
        %v2566 = vadd.f32 %v2565, %v2055
        %v2567 = vadd.f32 %v2566, %v2056
        %v2568 = vadd.f32 %v2567, %v2057
        %v2569 = vadd.f32 %v2568, %v2058
        %v2570 = vadd.f32 %v2569, %v2059
        %v2571 = vadd.f32 %v2570, %v2060
        %v2572 = vadd.f32 %v2571, %v2061
        %v2573 = vadd.f32 %v2572, %v2062
        %v2574 = vadd.f32 %v2573, %v2063
        %v2575 = vadd.f32 %v2574, %v2064
        %v2576 = vadd.f32 %v2575, %v2065
        %v2577 = vadd.f32 %v2576, %v2066
        %v2578 = vadd.f32 %v2577, %v2067
        %v2579 = vadd.f32 %v2578, %v2068
        %v2580 = vadd.f32 %v2579, %v2069
        %v2581 = vadd.f32 %v2580, %v2070
        %v2582 = vadd.f32 %v2581, %v2071
        %v2583 = vadd.f32 %v2582, %v2072
        %v2584 = vadd.f32 %v2583, %v2073
        %v2585 = vadd.f32 %v2584, %v2074
        %v2586 = vadd.f32 %v2585, %v2075
        %v2587 = vadd.f32 %v2586, %v2076
        %v2588 = vadd.f32 %v2587, %v2077
        %v2589 = vadd.f32 %v2588, %v2078
        %v2590 = vadd.f32 %v2589, %v2079
        %v2591 = vadd.f32 %v2590, %v2080
        %v2592 = vadd.f32 %v2591, %v2081
        %v2593 = vadd.f32 %v2592, %v2082
        %v2594 = vadd.f32 %v2593, %v2083
        %v2595 = vadd.f32 %v2594, %v2084
        %v2596 = vadd.f32 %v2595, %v2085
        %v2597 = vadd.f32 %v2596, %v2086
        %v2598 = vadd.f32 %v2597, %v2087
        %v2599 = vadd.f32 %v2598, %v2088
        %v2600 = vadd.f32 %v2599, %v2089
        %v2601 = vadd.f32 %v2600, %v2090
        %v2602 = vadd.f32 %v2601, %v2091
        %v2603 = vadd.f32 %v2602, %v2092
        %v2604 = vadd.f32 %v2603, %v2093
        %v2605 = vadd.f32 %v2604, %v2094
        %v2606 = vadd.f32 %v2605, %v2095
        %v2607 = vadd.f32 %v2606, %v2096
        %v2608 = vadd.f32 %v2607, %v2097
        %v2609 = vadd.f32 %v2608, %v2098
        %v2610 = vadd.f32 %v2609, %v2099
        %v2611 = vadd.f32 %v2610, %v2100
        %v2612 = vadd.f32 %v2611, %v2101
        %v2613 = vadd.f32 %v2612, %v2102
        %v2614 = vadd.f32 %v2613, %v2103
        %v2615 = vadd.f32 %v2614, %v2104
        %v2616 = vadd.f32 %v2615, %v2105
        %v2617 = vadd.f32 %v2616, %v2106
        %v2618 = vadd.f32 %v2617, %v2107
        %v2619 = vadd.f32 %v2618, %v2108
        %v2620 = vadd.f32 %v2619, %v2109
        %v2621 = vadd.f32 %v2620, %v2110
        %v2622 = vadd.f32 %v2621, %v2111
        %v2623 = vadd.f32 %v2622, %v2112
        %v2624 = vadd.f32 %v2623, %v2113
        %v2625 = vadd.f32 %v2624, %v2114
        %v2626 = vadd.f32 %v2625, %v2115
        %v2627 = vadd.f32 %v2626, %v2116
        %v2628 = vadd.f32 %v2627, %v2117
        %v2629 = vadd.f32 %v2628, %v2118
        %v2630 = vadd.f32 %v2629, %v2119
        %v2631 = vadd.f32 %v2630, %v2120
        %v2632 = vadd.f32 %v2631, %v2121
        %v2633 = vadd.f32 %v2632, %v2122
        %v2634 = vadd.f32 %v2633, %v2123
        %v2635 = vadd.f32 %v2634, %v2124
        %v2636 = vadd.f32 %v2635, %v2125
        %v2637 = vadd.f32 %v2636, %v2126
        %v2638 = vadd.f32 %v2637, %v2127
        %v2639 = vadd.f32 %v2638, %v2128
        %v2640 = vadd.f32 %v2639, %v2129
        %v2641 = vadd.f32 %v2640, %v2130
        %v2642 = vadd.f32 %v2641, %v2131
        %v2643 = vadd.f32 %v2642, %v2132
        %v2644 = vadd.f32 %v2643, %v2133
        %v2645 = vadd.f32 %v2644, %v2134
        %v2646 = vadd.f32 %v2645, %v2135
        %v2647 = vadd.f32 %v2646, %v2136
        %v2648 = vadd.f32 %v2647, %v2137
        %v2649 = vadd.f32 %v2648, %v2138
        %v2650 = vadd.f32 %v2649, %v2139
        %v2651 = vadd.f32 %v2650, %v2140
        %v2652 = vadd.f32 %v2651, %v2141
        %v2653 = vadd.f32 %v2652, %v2142
        %v2654 = vadd.f32 %v2653, %v2143
        %v2655 = vadd.f32 %v2654, %v2144
        %v2656 = vadd.f32 %v2655, %v2145
        %v2657 = vadd.f32 %v2656, %v2146
        %v2658 = vadd.f32 %v2657, %v2147
        %v2659 = vadd.f32 %v2658, %v2148
        %v2660 = vadd.f32 %v2659, %v2149
        %v2661 = vadd.f32 %v2660, %v2150
        %v2662 = vadd.f32 %v2661, %v2151
        %v2663 = vadd.f32 %v2662, %v2152
        %v2664 = vadd.f32 %v2663, %v2153
        %v2665 = vadd.f32 %v2664, %v2154
        %v2666 = vadd.f32 %v2665, %v2155
        %v2667 = vadd.f32 %v2666, %v2156
        %v2668 = vadd.f32 %v2667, %v2157
        %v2669 = vadd.f32 %v2668, %v2158
        %v2670 = vadd.f32 %v2669, %v2159
        %v2671 = vadd.f32 %v2670, %v2160
        %v2672 = vadd.f32 %v2671, %v2161
        %v2673 = vadd.f32 %v2672, %v2162
        %v2674 = vadd.f32 %v2673, %v2163
        %v2675 = vadd.f32 %v2674, %v2164
        %v2676 = vadd.f32 %v2675, %v2165
        %v2677 = vadd.f32 %v2676, %v2166
        %v2678 = vadd.f32 %v2677, %v2167
        %v2679 = vadd.f32 %v2678, %v2168
        %v2680 = vadd.f32 %v2679, %v2169
        %v2681 = vadd.f32 %v2680, %v2170
        %v2682 = vadd.f32 %v2681, %v2171
        %v2683 = vadd.f32 %v2682, %v2172
        %v2684 = vadd.f32 %v2683, %v2173
        %v2685 = vadd.f32 %v2684, %v2174
        %v2686 = vadd.f32 %v2685, %v2175
        %v2687 = vadd.f32 %v2686, %v2176
        %v2688 = vadd.f32 %v2687, %v2177
        %v2689 = vadd.f32 %v2688, %v2178
        %v2690 = vadd.f32 %v2689, %v2179
        %v2691 = vadd.f32 %v2690, %v2180
        %v2692 = vadd.f32 %v2691, %v2181
        %v2693 = vadd.f32 %v2692, %v2182
        %v2694 = vadd.f32 %v2693, %v2183
        %v2695 = vadd.f32 %v2694, %v2184
        %v2696 = vadd.f32 %v2695, %v2185
        %v2697 = vadd.f32 %v2696, %v2186
        %v2698 = vadd.f32 %v2697, %v2187
        %v2699 = vadd.f32 %v2698, %v2188
        %v2700 = vadd.f32 %v2699, %v2189
        %v2701 = vadd.f32 %v2700, %v2190
        %v2702 = vadd.f32 %v2701, %v2191
        %v2703 = vadd.f32 %v2702, %v2192
        %v2704 = vadd.f32 %v2703, %v2193
        %v2705 = vadd.f32 %v2704, %v2194
        %v2706 = vadd.f32 %v2705, %v2195
        %v2707 = vadd.f32 %v2706, %v2196
        %v2708 = vadd.f32 %v2707, %v2197
        %v2709 = vadd.f32 %v2708, %v2198
        %v2710 = vadd.f32 %v2709, %v2199
        %v2711 = vadd.f32 %v2710, %v2200
        %v2712 = vadd.f32 %v2711, %v2201
        %v2713 = vadd.f32 %v2712, %v2202
        %v2714 = vadd.f32 %v2713, %v2203
        %v2715 = vadd.f32 %v2714, %v2204
        %v2716 = vadd.f32 %v2715, %v2205
        %v2717 = vadd.f32 %v2716, %v2206
        %v2718 = vadd.f32 %v2717, %v2207
        %v2719 = vadd.f32 %v2718, %v2208
        %v2720 = vadd.f32 %v2719, %v2209
        %v2721 = vadd.f32 %v2720, %v2210
        %v2722 = vadd.f32 %v2721, %v2211
        %v2723 = vadd.f32 %v2722, %v2212
        %v2724 = vadd.f32 %v2723, %v2213
        %v2725 = vadd.f32 %v2724, %v2214
        %v2726 = vadd.f32 %v2725, %v2215
        %v2727 = vadd.f32 %v2726, %v2216
        %v2728 = vadd.f32 %v2727, %v2217
        %v2729 = vadd.f32 %v2728, %v2218
        %v2730 = vadd.f32 %v2729, %v2219
        %v2731 = vadd.f32 %v2730, %v2220
        %v2732 = vadd.f32 %v2731, %v2221
        %v2733 = vadd.f32 %v2732, %v2222
        %v2734 = vadd.f32 %v2733, %v2223
        %v2735 = vadd.f32 %v2734, %v2224
        %v2736 = vadd.f32 %v2735, %v2225
        %v2737 = vadd.f32 %v2736, %v2226
        %v2738 = vadd.f32 %v2737, %v2227
        %v2739 = vadd.f32 %v2738, %v2228
        %v2740 = vadd.f32 %v2739, %v2229
        %v2741 = vadd.f32 %v2740, %v2230
        %v2742 = vadd.f32 %v2741, %v2231
        %v2743 = vadd.f32 %v2742, %v2232
        %v2744 = vadd.f32 %v2743, %v2233
        %v2745 = vadd.f32 %v2744, %v2234
        %v2746 = vadd.f32 %v2745, %v2235
        %v2747 = vadd.f32 %v2746, %v2236
        %v2748 = vadd.f32 %v2747, %v2237
        %v2749 = vadd.f32 %v2748, %v2238
        %v2750 = vadd.f32 %v2749, %v2239
        %v2751 = vadd.f32 %v2750, %v2240
        %v2752 = vadd.f32 %v2751, %v2241
        %v2753 = vadd.f32 %v2752, %v2242
        %v2754 = vadd.f32 %v2753, %v2243
        %v2755 = vadd.f32 %v2754, %v2244
        %v2756 = vadd.f32 %v2755, %v2245
        %v2757 = vadd.f32 %v2756, %v2246
        %v2758 = vadd.f32 %v2757, %v2247
        %v2759 = vadd.f32 %v2758, %v2248
        %v2760 = vadd.f32 %v2759, %v2249
        %v2761 = vadd.f32 %v2760, %v2250
        %v2762 = vadd.f32 %v2761, %v2251
        %v2763 = vadd.f32 %v2762, %v2252
        %v2764 = vadd.f32 %v2763, %v2253
        %v2765 = vadd.f32 %v2764, %v2254
        %v2766 = vadd.f32 %v2765, %v2255
        %v2767 = vadd.f32 %v2766, %v2256
        %v2768 = vadd.f32 %v2767, %v2257
        %v2769 = vadd.f32 %v2768, %v2258
        %v2770 = vadd.f32 %v2769, %v2259
        %v2771 = vadd.f32 %v2770, %v2260
        %v2772 = vadd.f32 %v2771, %v2261
        %v2773 = vadd.f32 %v2772, %v2262
        %v2774 = vadd.f32 %v2773, %v2263
        %v2775 = vadd.f32 %v2774, %v2264
        %v2776 = vadd.f32 %v2775, %v2265
        %v2777 = vadd.f32 %v2776, %v2266
        %v2778 = vadd.f32 %v2777, %v2267
        %v2779 = vadd.f32 %v2778, %v2268
        %v2780 = vadd.f32 %v2779, %v2269
        %v2781 = vadd.f32 %v2780, %v2270
        %v2782 = vadd.f32 %v2781, %v2271
        %v2783 = vadd.f32 %v2782, %v2272
        %v2784 = vadd.f32 %v2783, %v2273
        %v2785 = vadd.f32 %v2784, %v2274
        %v2786 = vadd.f32 %v2785, %v2275
        %v2787 = vadd.f32 %v2786, %v2276
        %v2788 = vadd.f32 %v2787, %v2277
        %v2789 = vadd.f32 %v2788, %v2278
        %v2790 = vadd.f32 %v2789, %v2279
        %v2791 = vadd.f32 %v2790, %v2280
        %v2792 = vadd.f32 %v2791, %v2281
        %v2793 = vadd.f32 %v2792, %v2282
        %v2794 = vadd.f32 %v2793, %v2283
        %v2795 = vadd.f32 %v2794, %v2284
        %v2796 = vadd.f32 %v2795, %v2285
        %v2797 = vadd.f32 %v2796, %v2286
        %v2798 = vadd.f32 %v2797, %v2287
        %v2799 = vadd.f32 %v2798, %v2288
        %v2800 = vadd.f32 %v2799, %v2289
        %v2801 = vadd.f32 %v2800, %v2290
        %v2802 = vadd.f32 %v2801, %v2291
        %v2803 = vadd.f32 %v2802, %v2292
        %v2804 = vadd.f32 %v2803, %v2293
        %v2805 = vadd.f32 %v2804, %v2294
        %v2806 = vadd.f32 %v1782, %v2805
        %2807 = vst [vmem:[#allocation2] sm:$0xff] %v2806
        %p2808 = scmp.eq.s32.totalorder %s25, 1
        // Predicated region
        $region41: #{tpu_custom_call.1} parent=27 // pred_check
          %p2809 = pneg %p2808
        $region42: #{tpu_custom_call.1} parent=27 // pred_check_branch
          %2811 = sbr.rel (%p2809) target = $region44
        $region43: #{tpu_custom_call.1} parent=27 // pred_region
          %v2812 = vld [vmem:[#allocation2] sm:$0xff]
          %v2813 = vrot.slane %v2812, 4
          %v2814 = vadd.f32 %v2812, %v2813
          %v2815 = vrot.slane %v2814, 2
          %v2816 = vadd.f32 %v2814, %v2815
          %v2817 = vrot.slane %v2816, 1
          %v2818 = vadd.f32 %v2816, %v2817
          %2819 = vst [vmem:[#allocation8] sm:$0x1] %v2818
        $region44: #{tpu_custom_call.1} parent=27 // pred_fallthru
          _
        // Predicated region
        $region45: #{tpu_custom_call.1} parent=27 // pred_check
          %p2820 = pneg %p118
        $region46: #{tpu_custom_call.1} parent=27 // pred_check_branch
          %2822 = sbr.rel (%p2820) target = $region48
        $region47: #{tpu_custom_call.1} parent=27 // pred_region
          %s2824 = ssub.s32 16, 16
          %2825 = vsyncadd [#allocation5], %s2824
          %s2826 = smul.addr %s24, 16
          %s2827 = scalar_lea.hbm %s2, %s2826
          %s2829 = sshll.u32 [#allocation8], 4
          %s2830 = int_to_ptr.vmem [resolvable:$true] %s2829
          %2832 = dma.vmem_to_hbm [thread:$0]  %s2830, 16, %s2827, [#allocation5]
        $region48: #{tpu_custom_call.1} parent=27 // pred_fallthru
          _
        // Predicated region
        $region49: #{tpu_custom_call.1} parent=27 // pred_check
          %p2833 = pneg %p118
        $region50: #{tpu_custom_call.1} parent=27 // pred_check_branch
          %2835 = sbr.rel (%p2833) target = $region52
        $region51: #{tpu_custom_call.1} parent=27 // pred_region
          %2836 = dma.done [#allocation5], 16
        $region52: #{tpu_custom_call.1} parent=27 // pred_fallthru
          _
      $region28: #{tpu_custom_call.1} parent=5 // pred_fallthru
        _
      %p2837 = scmp.le.s32.totalorder 2, %s15
      // Predicated region
      $region53: #{tpu_custom_call.1} parent=5 // pred_check
        %p2838 = pneg %p2837
      $region54: #{tpu_custom_call.1} parent=5 // pred_check_branch
        %2840 = sbr.rel (%p2838) target = $region56
      $region55: #{tpu_custom_call.1} parent=5 // pred_region
        %s2841 = ssub.s32 %s15, 2
      $region56: #{tpu_custom_call.1} parent=5 // pred_fallthru
        _
    $region6: #{tpu_custom_call.1} parent=1 // loop_footer
      %s19 = sadd.s32 1, %s15
    $region7: #{tpu_custom_call.1} parent=1 // loop_footer_branch
      %14 = sbr.rel target = $region3
    $region8: #{tpu_custom_call.1} parent=1 // loop_exit
      _
    %2842 = vsyncpa [#allocation4], 1
    %s2843 = scalar_lea.sflag [#allocation4], 1
    %2844 = vsyncpa %s2843, 1
    %2845 = vsyncpa [#allocation7], 1
    %s2846 = scalar_lea.sflag [#allocation7], 1
    %2847 = vsyncpa %s2846, 1
    %2848 = vsyncpa [#allocation5], 1
    %s2849 = scalar_lea.sflag [#allocation5], 1
    %2850 = vsyncpa %s2849, 1

</llo_original>
